<compile_context>
chip_gen: v5e
topology: v5e:2x2
jax: 0.10.0
libtpu: 0.0.40
codegen_flags: <defaults>
</compile_context>

<pallas_src>
import functools
import math

import jax
import jax.numpy as jnp
from jax import lax
from jax.experimental import pallas as pl
from jax.experimental.pallas import tpu as pltpu


# ---------------- Kernel 1: fused edge-bias + multi-head attention + residual ----------------
def mha_kernel(x_ref, e_ref, wq_ref, wk_ref, wv_ref, wo_ref, wew_ref, web_ref,
               o_ref, *, n_heads, key_dim, val_dim, norm_factor):
    N, D = x_ref.shape[1], x_ref.shape[2]
    x = x_ref[0]                                                   # (N, D) f32
    xb = x.astype(jnp.bfloat16)

    # All-head projections: one wide matmul each (head-major column blocks).
    q_all = jnp.dot(xb, wq_ref[...], preferred_element_type=jnp.float32)   # (N, H*dk)
    k_all = jnp.dot(xb, wk_ref[...], preferred_element_type=jnp.float32)   # (N, H*dk)
    v_all = jnp.dot(xb, wv_ref[...], preferred_element_type=jnp.float32)   # (N, H*dv)

    # Edge bias computed in-kernel (fused): tanh(e @ We + be), e pre-flattened to (N*N, D).
    e_flat = e_ref[0]                                              # (N*N, D) bf16
    ec = jnp.tanh(jnp.dot(e_flat, wew_ref[...], preferred_element_type=jnp.float32)
                  + web_ref[...])                                  # (N*N, H) f32
    ec3 = ec.reshape(N, N, n_heads)                                # (N, N, H)
    hsel = lax.broadcasted_iota(jnp.int32, (N, N, n_heads), 2)

    head_outs = []
    for h in range(n_heads):                                       # static unroll, H small
        q = q_all[:, h * key_dim:(h + 1) * key_dim].astype(jnp.bfloat16)
        k = k_all[:, h * key_dim:(h + 1) * key_dim].astype(jnp.bfloat16)
        v = v_all[:, h * val_dim:(h + 1) * val_dim].astype(jnp.bfloat16)
        # per-head bias (N, N): one-hot lane reduce (pure VPU/XLU, no odd relayout)
        bias = jnp.sum(jnp.where(hsel == h, ec3, 0.0), axis=-1)
        # q @ k^T without materializing the transpose
        s = norm_factor * lax.dot_general(
            q, k, (((1,), (1,)), ((), ())),
            preferred_element_type=jnp.float32) + bias             # (N, N)
        m = jnp.max(s, axis=-1, keepdims=True)
        p = jnp.exp(s - m)
        inv = pl.reciprocal(jnp.sum(p, axis=-1, keepdims=True), approx=True)  # EUP slot
        head_outs.append(jnp.dot((p * inv).astype(jnp.bfloat16), v,
                                 preferred_element_type=jnp.float32))          # (N, dv)

    heads_cat = jnp.concatenate(head_outs, axis=-1).astype(jnp.bfloat16)        # (N, H*dv)
    # single output projection + residual, written once (lane-dense store)
    o_ref[0] = x + jnp.dot(heads_cat, wo_ref[...], preferred_element_type=jnp.float32)


def mha_fused(x, e_flat_bf16, wq, wk, wv, wo, we_w, we_b):
    B, N, D = x.shape
    NN = e_flat_bf16.shape[1]
    H = we_w.shape[1]
    dk = wq.shape[1] // H
    dv = wv.shape[1] // H
    kern = functools.partial(mha_kernel, n_heads=H, key_dim=dk, val_dim=dv,
                             norm_factor=1.0 / math.sqrt(dk))
    return pl.pallas_call(
        kern,
        out_shape=jax.ShapeDtypeStruct((B, N, D), jnp.float32),
        grid=(B,),
        in_specs=[
            pl.BlockSpec((1, N, D), lambda b: (b, 0, 0)),
            pl.BlockSpec((1, NN, D), lambda b: (b, 0, 0)),
            pl.BlockSpec((D, H * dk), lambda b: (0, 0)),
            pl.BlockSpec((D, H * dk), lambda b: (0, 0)),
            pl.BlockSpec((D, H * dv), lambda b: (0, 0)),
            pl.BlockSpec((H * dv, D), lambda b: (0, 0)),
            pl.BlockSpec((D, H), lambda b: (0, 0)),
            pl.BlockSpec((1, H), lambda b: (0, 0)),
        ],
        out_specs=pl.BlockSpec((1, N, D), lambda b: (b, 0, 0)),
        compiler_params=pltpu.CompilerParams(dimension_semantics=("parallel",)),
    )(x, e_flat_bf16, wq, wk, wv, wo, we_w, we_b)


# ---------------- Kernel 2: BatchNorm1d (training-mode batch stats), feature-tiled -----------
def batchnorm_kernel(x_ref, g_ref, b_ref, o_ref, *, eps):
    x = x_ref[...]                                                  # (M, TD) f32
    mean = jnp.mean(x, axis=0, keepdims=True)
    var = jnp.mean(jnp.square(x - mean), axis=0, keepdims=True)     # biased var (torch BN fwd)
    o_ref[...] = g_ref[...] * (x - mean) * lax.rsqrt(var + eps) + b_ref[...]


def batchnorm(x2d, gamma, beta, eps=1e-5):
    # Tiled along features: every block holds ALL rows for its feature slice,
    # so batch statistics stay exact (do NOT tile rows without two-pass stats).
    M, D = x2d.shape
    TD = 128 if (D % 128 == 0) else D
    kern = functools.partial(batchnorm_kernel, eps=eps)
    return pl.pallas_call(
        kern,
        out_shape=jax.ShapeDtypeStruct((M, D), jnp.float32),
        grid=(D // TD,),
        in_specs=[
            pl.BlockSpec((M, TD), lambda i: (0, i)),
            pl.BlockSpec((1, TD), lambda i: (0, i)),
            pl.BlockSpec((1, TD), lambda i: (0, i)),
        ],
        out_specs=pl.BlockSpec((M, TD), lambda i: (0, i)),
        compiler_params=pltpu.CompilerParams(dimension_semantics=("parallel",)),
    )(x2d, gamma, beta)


# ---------------- Kernel 3: feed-forward (Linear-ReLU-Linear) + residual, row-tiled ----------
def ffn_kernel(x_ref, w1_ref, b1_ref, w2_ref, b2_ref, o_ref):
    x = x_ref[...]                                                  # (TM, D) f32
    h1 = jnp.dot(x.astype(jnp.bfloat16), w1_ref[...],
                 preferred_element_type=jnp.float32) + b1_ref[...]
    h1 = jnp.maximum(h1, 0.0).astype(jnp.bfloat16)
    y = jnp.dot(h1, w2_ref[...], preferred_element_type=jnp.float32) + b2_ref[...]
    o_ref[...] = x + y


def _row_tile(m):
    for t in (512, 256, 128, 64, 32, 16, 8):
        if m % t == 0:
            return t
    return m


def ffn_skip(x2d, w1, b1, w2, b2):
    M, D = x2d.shape
    F = w1.shape[1]
    TM = _row_tile(M)
    return pl.pallas_call(
        ffn_kernel,
        out_shape=jax.ShapeDtypeStruct((M, D), jnp.float32),
        grid=(M // TM,),
        in_specs=[
            pl.BlockSpec((TM, D), lambda i: (i, 0)),
            pl.BlockSpec((D, F), lambda i: (0, 0)),
            pl.BlockSpec((1, F), lambda i: (0, 0)),
            pl.BlockSpec((F, D), lambda i: (0, 0)),
            pl.BlockSpec((1, D), lambda i: (0, 0)),
        ],
        out_specs=pl.BlockSpec((TM, D), lambda i: (i, 0)),
        compiler_params=pltpu.CompilerParams(dimension_semantics=("parallel",)),
    )(x2d, w1, b1, w2, b2)


# ---------------- Full encoder forward ---------------------------------------
def graph_attention_encoder(x, e, params):
    B, N, D = x.shape
    # Edge tensor: cast to bf16 once (halves its DMA traffic for every layer) and
    # pre-flatten to (B, N*N, D) so no reshape/transpose is needed in-kernel.
    e_flat = e.astype(jnp.bfloat16).reshape(B, N * N, D)
    h = x
    for lp in params["layers"]:
        h = mha_fused(h, e_flat, lp["wq"], lp["wk"], lp["wv"], lp["wo"],
                      lp["we_w"], lp["we_b"])
        h2 = h.reshape(B * N, D)
        h2 = batchnorm(h2, lp["bn1_g"], lp["bn1_b"])
        h2 = ffn_skip(h2, lp["w1"], lp["b1"], lp["w2"], lp["b2"])
        h2 = batchnorm(h2, lp["bn2_g"], lp["bn2_b"])
        h = h2.reshape(B, N, D)
    return h, jnp.mean(h, axis=1)


# ---------------- Deterministic synthetic parameter init ---------------------
def init_params(key, n_heads, embed_dim, n_layers, feed_forward_hidden):
    dk = dv = embed_dim // n_heads

    def u(k, shape, fan, dtype=jnp.float32):
        s = 1.0 / math.sqrt(fan)
        return jax.random.uniform(k, shape, jnp.float32, -s, s).astype(dtype)

    layers = []
    for _ in range(n_layers):
        key, *ks = jax.random.split(key, 11)
        wq = u(ks[0], (n_heads, embed_dim, dk), dk)
        wk = u(ks[1], (n_heads, embed_dim, dk), dk)
        wv = u(ks[2], (n_heads, embed_dim, dv), dv)
        wo = u(ks[3], (n_heads, dv, embed_dim), embed_dim)
        layers.append(dict(
            # per-head weights flattened once at init (head-major blocks) so kernels
            # do single wide matmuls; stored bf16 for MXU / halved weight DMA.
            wq=jnp.transpose(wq, (1, 0, 2)).reshape(embed_dim, n_heads * dk).astype(jnp.bfloat16),
            wk=jnp.transpose(wk, (1, 0, 2)).reshape(embed_dim, n_heads * dk).astype(jnp.bfloat16),
            wv=jnp.transpose(wv, (1, 0, 2)).reshape(embed_dim, n_heads * dv).astype(jnp.bfloat16),
            wo=wo.reshape(n_heads * dv, embed_dim).astype(jnp.bfloat16),  # == torch W_out.view(-1, D)
            we_w=u(ks[4], (embed_dim, n_heads), embed_dim, jnp.bfloat16),  # W_edge1 (Linear D->H)
            we_b=u(ks[5], (1, n_heads), n_heads),
            w1=u(ks[6], (embed_dim, feed_forward_hidden), embed_dim, jnp.bfloat16),
            b1=u(ks[7], (1, feed_forward_hidden), embed_dim),
            w2=u(ks[8], (feed_forward_hidden, embed_dim), feed_forward_hidden, jnp.bfloat16),
            b2=u(ks[9], (1, embed_dim), feed_forward_hidden),
            bn1_g=jnp.ones((1, embed_dim), jnp.float32),                 # torch BatchNorm1d defaults
            bn1_b=jnp.zeros((1, embed_dim), jnp.float32),
            bn2_g=jnp.ones((1, embed_dim), jnp.float32),
            bn2_b=jnp.zeros((1, embed_dim), jnp.float32),
        ))
    return {"layers": layers}


if __name__ == "__main__":
    # small shapes: batch=2, graph_size=8, embed_dim=32, heads=4, layers=2, ffn=64
    B, N, D, H, L, F = 2, 8, 32, 4, 2, 64
    key = jax.random.PRNGKey(0)
    kx, ke, kp = jax.random.split(key, 3)
    x = jax.random.normal(kx, (B, N, D), jnp.float32)       # node features (inputs[0])
    e = jax.random.normal(ke, (B, N, N, D), jnp.float32)    # edge embeddings (inputs[1])
    params = init_params(kp, H, D, L, F)

    fwd = jax.jit(lambda xx, ee: graph_attention_encoder(xx, ee, params))
    node_emb, graph_emb = fwd(x, e)
    jax.block_until_ready((node_emb, graph_emb))
    assert node_emb.shape == (B, N, D)
    assert graph_emb.shape == (B, D)
    assert bool(jnp.all(jnp.isfinite(node_emb))) and bool(jnp.all(jnp.isfinite(graph_emb)))
    print("KERNEL_OK")
</pallas_src>

<mosaic_0001>
module attributes {stable_mosaic.version = 11 : i64} {
  func.func @batchnorm_kernel(%arg0: i32, %arg1: memref<16x32xf32, #tpu.memory_space<vmem>>, %arg2: memref<1x32xf32, #tpu.memory_space<vmem>>, %arg3: memref<1x32xf32, #tpu.memory_space<vmem>>, %arg4: memref<16x32xf32, #tpu.memory_space<vmem>>) attributes {dimension_semantics = [#tpu.dimension_semantics<parallel>], iteration_bounds = array<i64: 1>, scalar_prefetch = 0 : i64, scratch_operands = 0 : i64, tpu.core_type = #tpu.core_type<tc>, window_params = [{transform_indices = @transform_0, window_bounds = array<i64: 16, 32>}, {transform_indices = @transform_1, window_bounds = array<i64: 1, 32>}, {transform_indices = @transform_2, window_bounds = array<i64: 1, 32>}, {transform_indices = @transform_3, window_bounds = array<i64: 16, 32>}]} {
    %c0 = arith.constant 0 : index
    %c0_0 = arith.constant 0 : index
    %0 = vector.load %arg1[%c0, %c0_0] : memref<16x32xf32, #tpu.memory_space<vmem>>, vector<16x32xf32>
    %cst = arith.constant dense<0.000000e+00> : vector<32xf32>
    %1 = vector.multi_reduction <add>, %0, %cst [0] : vector<16x32xf32> to vector<32xf32>
    %2 = vector.shape_cast %1 : vector<32xf32> to vector<1x32xf32>
    %cst_1 = arith.constant 1.600000e+01 : f32
    %3 = vector.broadcast %cst_1 : f32 to vector<1x32xf32>
    %4 = arith.divf %2, %3 : vector<1x32xf32>
    %5 = vector.broadcast %4 : vector<1x32xf32> to vector<16x32xf32>
    %6 = arith.subf %0, %5 : vector<16x32xf32>
    %7 = arith.mulf %6, %6 : vector<16x32xf32>
    %cst_2 = arith.constant dense<0.000000e+00> : vector<32xf32>
    %8 = vector.multi_reduction <add>, %7, %cst_2 [0] : vector<16x32xf32> to vector<32xf32>
    %9 = vector.shape_cast %8 : vector<32xf32> to vector<1x32xf32>
    %cst_3 = arith.constant 1.600000e+01 : f32
    %10 = vector.broadcast %cst_3 : f32 to vector<1x32xf32>
    %11 = arith.divf %9, %10 : vector<1x32xf32>
    %c0_4 = arith.constant 0 : index
    %c0_5 = arith.constant 0 : index
    %12 = vector.load %arg2[%c0_4, %c0_5] : memref<1x32xf32, #tpu.memory_space<vmem>>, vector<1x32xf32>
    %13 = vector.broadcast %4 : vector<1x32xf32> to vector<16x32xf32>
    %14 = arith.subf %0, %13 : vector<16x32xf32>
    %15 = vector.broadcast %12 : vector<1x32xf32> to vector<16x32xf32>
    %16 = arith.mulf %15, %14 : vector<16x32xf32>
    %cst_6 = arith.constant 9.99999974E-6 : f32
    %17 = vector.broadcast %cst_6 : f32 to vector<1x32xf32>
    %18 = arith.addf %11, %17 : vector<1x32xf32>
    %19 = math.rsqrt %18 : vector<1x32xf32>
    %20 = vector.broadcast %19 : vector<1x32xf32> to vector<16x32xf32>
    %21 = arith.mulf %16, %20 : vector<16x32xf32>
    %c0_7 = arith.constant 0 : index
    %c0_8 = arith.constant 0 : index
    %22 = vector.load %arg3[%c0_7, %c0_8] : memref<1x32xf32, #tpu.memory_space<vmem>>, vector<1x32xf32>
    %23 = vector.broadcast %22 : vector<1x32xf32> to vector<16x32xf32>
    %24 = arith.addf %21, %23 : vector<16x32xf32>
    %c0_9 = arith.constant 0 : index
    %c0_10 = arith.constant 0 : index
    %25 = vector.load %arg4[%c0_9, %c0_10] : memref<16x32xf32, #tpu.memory_space<vmem>>, vector<16x32xf32>
    tpu.vector_store %arg4[%c0_9, %c0_10], %24 {strides = array<i32>} : memref<16x32xf32, #tpu.memory_space<vmem>>, vector<16x32xf32>,
    return
  }
  func.func @transform_0(%arg0: i32) -> (i32, i32) {
    %c0_i32 = arith.constant 0 : i32
    %c0_i32_0 = arith.constant 0 : i32
    return %c0_i32, %arg0 : i32, i32
  }
  func.func @transform_1(%arg0: i32) -> (i32, i32) {
    %c0_i32 = arith.constant 0 : i32
    %c0_i32_0 = arith.constant 0 : i32
    return %c0_i32, %arg0 : i32, i32
  }
  func.func @transform_2(%arg0: i32) -> (i32, i32) {
    %c0_i32 = arith.constant 0 : i32
    %c0_i32_0 = arith.constant 0 : i32
    return %c0_i32, %arg0 : i32, i32
  }
  func.func @transform_3(%arg0: i32) -> (i32, i32) {
    %c0_i32 = arith.constant 0 : i32
    %c0_i32_0 = arith.constant 0 : i32
    return %c0_i32, %arg0 : i32, i32
  }
}

module attributes {stable_mosaic.version = 11 : i64} {
  func.func @mha_kernel(%arg0: i32, %arg1: memref<1x8x32xf32, #tpu.memory_space<vmem>>, %arg2: memref<1x64x32xbf16, #tpu.memory_space<vmem>>, %arg3: memref<32x32xbf16, #tpu.memory_space<vmem>>, %arg4: memref<32x32xbf16, #tpu.memory_space<vmem>>, %arg5: memref<32x32xbf16, #tpu.memory_space<vmem>>, %arg6: memref<32x32xbf16, #tpu.memory_space<vmem>>, %arg7: memref<32x4xbf16, #tpu.memory_space<vmem>>, %arg8: memref<1x4xf32, #tpu.memory_space<vmem>>, %arg9: memref<1x8x32xf32, #tpu.memory_space<vmem>>) attributes {dimension_semantics = [#tpu.dimension_semantics<parallel>], iteration_bounds = array<i64: 2>, scalar_prefetch = 0 : i64, scratch_operands = 0 : i64, tpu.core_type = #tpu.core_type<tc>, window_params = [{transform_indices = @transform_0, window_bounds = array<i64: 1, 8, 32>}, {transform_indices = @transform_1, window_bounds = array<i64: 1, 64, 32>}, {pipeline_mode = #tpu.pipeline_mode<synchronous>, transform_indices = @transform_2, window_bounds = array<i64: 32, 32>}, {pipeline_mode = #tpu.pipeline_mode<synchronous>, transform_indices = @transform_3, window_bounds = array<i64: 32, 32>}, {pipeline_mode = #tpu.pipeline_mode<synchronous>, transform_indices = @transform_4, window_bounds = array<i64: 32, 32>}, {pipeline_mode = #tpu.pipeline_mode<synchronous>, transform_indices = @transform_5, window_bounds = array<i64: 32, 32>}, {pipeline_mode = #tpu.pipeline_mode<synchronous>, transform_indices = @transform_6, window_bounds = array<i64: 32, 4>}, {pipeline_mode = #tpu.pipeline_mode<synchronous>, transform_indices = @transform_7, window_bounds = array<i64: 1, 4>}, {transform_indices = @transform_8, window_bounds = array<i64: 1, 8, 32>}]} {
    %c0 = arith.constant 0 : index
    %c0_0 = arith.constant 0 : index
    %c0_1 = arith.constant 0 : index
    %0 = vector.load %arg1[%c0, %c0_0, %c0_1] : memref<1x8x32xf32, #tpu.memory_space<vmem>>, vector<1x8x32xf32>
    %1 = vector.shape_cast %0 : vector<1x8x32xf32> to vector<8x32xf32>
    %2 = arith.truncf %1 : vector<8x32xf32> to vector<8x32xbf16>
    %c0_2 = arith.constant 0 : index
    %c0_3 = arith.constant 0 : index
    %3 = vector.load %arg3[%c0_2, %c0_3] : memref<32x32xbf16, #tpu.memory_space<vmem>>, vector<32x32xbf16>
    %cst = arith.constant dense<0.000000e+00> : vector<8x32xf32>
    %4 = tpu.matmul %2, %3, %cst {dimension_numbers = #tpu.dot_dimension_numbers<[1], [0], [0], [1], [0, 0, 1, 1], [], []>} : vector<8x32xbf16>, vector<32x32xbf16>, vector<8x32xf32> -> vector<8x32xf32>
    %c0_4 = arith.constant 0 : index
    %c0_5 = arith.constant 0 : index
    %5 = vector.load %arg4[%c0_4, %c0_5] : memref<32x32xbf16, #tpu.memory_space<vmem>>, vector<32x32xbf16>
    %cst_6 = arith.constant dense<0.000000e+00> : vector<8x32xf32>
    %6 = tpu.matmul %2, %5, %cst_6 {dimension_numbers = #tpu.dot_dimension_numbers<[1], [0], [0], [1], [0, 0, 1, 1], [], []>} : vector<8x32xbf16>, vector<32x32xbf16>, vector<8x32xf32> -> vector<8x32xf32>
    %c0_7 = arith.constant 0 : index
    %c0_8 = arith.constant 0 : index
    %7 = vector.load %arg5[%c0_7, %c0_8] : memref<32x32xbf16, #tpu.memory_space<vmem>>, vector<32x32xbf16>
    %cst_9 = arith.constant dense<0.000000e+00> : vector<8x32xf32>
    %8 = tpu.matmul %2, %7, %cst_9 {dimension_numbers = #tpu.dot_dimension_numbers<[1], [0], [0], [1], [0, 0, 1, 1], [], []>} : vector<8x32xbf16>, vector<32x32xbf16>, vector<8x32xf32> -> vector<8x32xf32>
    %c0_10 = arith.constant 0 : index
    %c0_11 = arith.constant 0 : index
    %c0_12 = arith.constant 0 : index
    %9 = vector.load %arg2[%c0_10, %c0_11, %c0_12] : memref<1x64x32xbf16, #tpu.memory_space<vmem>>, vector<1x64x32xbf16>
    %10 = vector.shape_cast %9 : vector<1x64x32xbf16> to vector<64x32xbf16>
    %c0_13 = arith.constant 0 : index
    %c0_14 = arith.constant 0 : index
    %11 = vector.load %arg7[%c0_13, %c0_14] : memref<32x4xbf16, #tpu.memory_space<vmem>>, vector<32x4xbf16>
    %cst_15 = arith.constant dense<0.000000e+00> : vector<64x4xf32>
    %12 = tpu.matmul %10, %11, %cst_15 {dimension_numbers = #tpu.dot_dimension_numbers<[1], [0], [0], [1], [0, 0, 1, 1], [], []>} : vector<64x32xbf16>, vector<32x4xbf16>, vector<64x4xf32> -> vector<64x4xf32>
    %c0_16 = arith.constant 0 : index
    %c0_17 = arith.constant 0 : index
    %13 = vector.load %arg8[%c0_16, %c0_17] : memref<1x4xf32, #tpu.memory_space<vmem>>, vector<1x4xf32>
    %14 = vector.broadcast %13 : vector<1x4xf32> to vector<64x4xf32>
    %15 = arith.addf %12, %14 : vector<64x4xf32>
    %16 = math.tanh %15 : vector<64x4xf32>
    %17 = vector.shape_cast %16 : vector<64x4xf32> to vector<8x8x4xf32>
    %18 = tpu.iota {dimensions = array<i32: 2>} : vector<8x8x4xi32>
    %19 = vector.extract_strided_slice %4 {offsets = [0, 0], sizes = [8, 8], strides = [1, 1]} : vector<8x32xf32> to vector<8x8xf32>
    %20 = arith.truncf %19 : vector<8x8xf32> to vector<8x8xbf16>
    %21 = vector.extract_strided_slice %6 {offsets = [0, 0], sizes = [8, 8], strides = [1, 1]} : vector<8x32xf32> to vector<8x8xf32>
    %22 = arith.truncf %21 : vector<8x8xf32> to vector<8x8xbf16>
    %23 = vector.extract_strided_slice %8 {offsets = [0, 0], sizes = [8, 8], strides = [1, 1]} : vector<8x32xf32> to vector<8x8xf32>
    %24 = arith.truncf %23 : vector<8x8xf32> to vector<8x8xbf16>
    %c0_i32 = arith.constant 0 : i32
    %25 = vector.broadcast %c0_i32 : i32 to vector<8x8x4xi32>
    %26 = arith.cmpi eq, %18, %25 : vector<8x8x4xi32>
    %cst_18 = arith.constant 0.000000e+00 : f32
    %27 = vector.broadcast %cst_18 : f32 to vector<8x8x4xf32>
    %28 = arith.select %26, %17, %27 : vector<8x8x4xi1>, vector<8x8x4xf32>
    %cst_19 = arith.constant dense<0.000000e+00> : vector<8x8xf32>
    %29 = vector.multi_reduction <add>, %28, %cst_19 [2] : vector<8x8x4xf32> to vector<8x8xf32>
    %cst_20 = arith.constant dense<0.000000e+00> : vector<8x8xf32>
    %30 = tpu.matmul %20, %22, %cst_20 {dimension_numbers = #tpu.dot_dimension_numbers<[1], [1], [0], [0], [0, 0, 1, 0], [], []>} : vector<8x8xbf16>, vector<8x8xbf16>, vector<8x8xf32> -> vector<8x8xf32>
    %cst_21 = arith.constant 0.353553385 : f32
    %31 = vector.broadcast %cst_21 : f32 to vector<8x8xf32>
    %32 = arith.mulf %31, %30 : vector<8x8xf32>
    %33 = arith.addf %32, %29 : vector<8x8xf32>
    %cst_22 = arith.constant dense<0xFF800000> : vector<8xf32>
    %34 = vector.multi_reduction <maximumf>, %33, %cst_22 [1] : vector<8x8xf32> to vector<8xf32>
    %35 = vector.shape_cast %34 : vector<8xf32> to vector<8x1xf32>
    %36 = vector.broadcast %35 : vector<8x1xf32> to vector<8x8xf32>
    %37 = arith.subf %33, %36 : vector<8x8xf32>
    %38 = math.exp %37 : vector<8x8xf32>
    %cst_23 = arith.constant dense<0.000000e+00> : vector<8xf32>
    %39 = vector.multi_reduction <add>, %38, %cst_23 [1] : vector<8x8xf32> to vector<8xf32>
    %40 = vector.shape_cast %39 : vector<8xf32> to vector<8x1xf32>
    %41 = tpu.reciprocal %40 {approx = true} : vector<8x1xf32> -> vector<8x1xf32>
    %42 = vector.broadcast %41 : vector<8x1xf32> to vector<8x8xf32>
    %43 = arith.mulf %38, %42 : vector<8x8xf32>
    %44 = arith.truncf %43 : vector<8x8xf32> to vector<8x8xbf16>
    %cst_24 = arith.constant dense<0.000000e+00> : vector<8x8xf32>
    %45 = tpu.matmul %44, %24, %cst_24 {dimension_numbers = #tpu.dot_dimension_numbers<[1], [0], [0], [1], [0, 0, 1, 1], [], []>} : vector<8x8xbf16>, vector<8x8xbf16>, vector<8x8xf32> -> vector<8x8xf32>
    %46 = vector.extract_strided_slice %4 {offsets = [0, 8], sizes = [8, 8], strides = [1, 1]} : vector<8x32xf32> to vector<8x8xf32>
    %47 = arith.truncf %46 : vector<8x8xf32> to vector<8x8xbf16>
    %48 = vector.extract_strided_slice %6 {offsets = [0, 8], sizes = [8, 8], strides = [1, 1]} : vector<8x32xf32> to vector<8x8xf32>
    %49 = arith.truncf %48 : vector<8x8xf32> to vector<8x8xbf16>
    %50 = vector.extract_strided_slice %8 {offsets = [0, 8], sizes = [8, 8], strides = [1, 1]} : vector<8x32xf32> to vector<8x8xf32>
    %51 = arith.truncf %50 : vector<8x8xf32> to vector<8x8xbf16>
    %c1_i32 = arith.constant 1 : i32
    %52 = vector.broadcast %c1_i32 : i32 to vector<8x8x4xi32>
    %53 = arith.cmpi eq, %18, %52 : vector<8x8x4xi32>
    %cst_25 = arith.constant 0.000000e+00 : f32
    %54 = vector.broadcast %cst_25 : f32 to vector<8x8x4xf32>
    %55 = arith.select %53, %17, %54 : vector<8x8x4xi1>, vector<8x8x4xf32>
    %cst_26 = arith.constant dense<0.000000e+00> : vector<8x8xf32>
    %56 = vector.multi_reduction <add>, %55, %cst_26 [2] : vector<8x8x4xf32> to vector<8x8xf32>
    %cst_27 = arith.constant dense<0.000000e+00> : vector<8x8xf32>
    %57 = tpu.matmul %47, %49, %cst_27 {dimension_numbers = #tpu.dot_dimension_numbers<[1], [1], [0], [0], [0, 0, 1, 0], [], []>} : vector<8x8xbf16>, vector<8x8xbf16>, vector<8x8xf32> -> vector<8x8xf32>
    %cst_28 = arith.constant 0.353553385 : f32
    %58 = vector.broadcast %cst_28 : f32 to vector<8x8xf32>
    %59 = arith.mulf %58, %57 : vector<8x8xf32>
    %60 = arith.addf %59, %56 : vector<8x8xf32>
    %cst_29 = arith.constant dense<0xFF800000> : vector<8xf32>
    %61 = vector.multi_reduction <maximumf>, %60, %cst_29 [1] : vector<8x8xf32> to vector<8xf32>
    %62 = vector.shape_cast %61 : vector<8xf32> to vector<8x1xf32>
    %63 = vector.broadcast %62 : vector<8x1xf32> to vector<8x8xf32>
    %64 = arith.subf %60, %63 : vector<8x8xf32>
    %65 = math.exp %64 : vector<8x8xf32>
    %cst_30 = arith.constant dense<0.000000e+00> : vector<8xf32>
    %66 = vector.multi_reduction <add>, %65, %cst_30 [1] : vector<8x8xf32> to vector<8xf32>
    %67 = vector.shape_cast %66 : vector<8xf32> to vector<8x1xf32>
    %68 = tpu.reciprocal %67 {approx = true} : vector<8x1xf32> -> vector<8x1xf32>
    %69 = vector.broadcast %68 : vector<8x1xf32> to vector<8x8xf32>
    %70 = arith.mulf %65, %69 : vector<8x8xf32>
    %71 = arith.truncf %70 : vector<8x8xf32> to vector<8x8xbf16>
    %cst_31 = arith.constant dense<0.000000e+00> : vector<8x8xf32>
    %72 = tpu.matmul %71, %51, %cst_31 {dimension_numbers = #tpu.dot_dimension_numbers<[1], [0], [0], [1], [0, 0, 1, 1], [], []>} : vector<8x8xbf16>, vector<8x8xbf16>, vector<8x8xf32> -> vector<8x8xf32>
    %73 = vector.extract_strided_slice %4 {offsets = [0, 16], sizes = [8, 8], strides = [1, 1]} : vector<8x32xf32> to vector<8x8xf32>
    %74 = arith.truncf %73 : vector<8x8xf32> to vector<8x8xbf16>
    %75 = vector.extract_strided_slice %6 {offsets = [0, 16], sizes = [8, 8], strides = [1, 1]} : vector<8x32xf32> to vector<8x8xf32>
    %76 = arith.truncf %75 : vector<8x8xf32> to vector<8x8xbf16>
    %77 = vector.extract_strided_slice %8 {offsets = [0, 16], sizes = [8, 8], strides = [1, 1]} : vector<8x32xf32> to vector<8x8xf32>
    %78 = arith.truncf %77 : vector<8x8xf32> to vector<8x8xbf16>
    %c2_i32 = arith.constant 2 : i32
    %79 = vector.broadcast %c2_i32 : i32 to vector<8x8x4xi32>
    %80 = arith.cmpi eq, %18, %79 : vector<8x8x4xi32>
    %cst_32 = arith.constant 0.000000e+00 : f32
    %81 = vector.broadcast %cst_32 : f32 to vector<8x8x4xf32>
    %82 = arith.select %80, %17, %81 : vector<8x8x4xi1>, vector<8x8x4xf32>
    %cst_33 = arith.constant dense<0.000000e+00> : vector<8x8xf32>
    %83 = vector.multi_reduction <add>, %82, %cst_33 [2] : vector<8x8x4xf32> to vector<8x8xf32>
    %cst_34 = arith.constant dense<0.000000e+00> : vector<8x8xf32>
    %84 = tpu.matmul %74, %76, %cst_34 {dimension_numbers = #tpu.dot_dimension_numbers<[1], [1], [0], [0], [0, 0, 1, 0], [], []>} : vector<8x8xbf16>, vector<8x8xbf16>, vector<8x8xf32> -> vector<8x8xf32>
    %cst_35 = arith.constant 0.353553385 : f32
    %85 = vector.broadcast %cst_35 : f32 to vector<8x8xf32>
    %86 = arith.mulf %85, %84 : vector<8x8xf32>
    %87 = arith.addf %86, %83 : vector<8x8xf32>
    %cst_36 = arith.constant dense<0xFF800000> : vector<8xf32>
    %88 = vector.multi_reduction <maximumf>, %87, %cst_36 [1] : vector<8x8xf32> to vector<8xf32>
    %89 = vector.shape_cast %88 : vector<8xf32> to vector<8x1xf32>
    %90 = vector.broadcast %89 : vector<8x1xf32> to vector<8x8xf32>
    %91 = arith.subf %87, %90 : vector<8x8xf32>
    %92 = math.exp %91 : vector<8x8xf32>
    %cst_37 = arith.constant dense<0.000000e+00> : vector<8xf32>
    %93 = vector.multi_reduction <add>, %92, %cst_37 [1] : vector<8x8xf32> to vector<8xf32>
    %94 = vector.shape_cast %93 : vector<8xf32> to vector<8x1xf32>
    %95 = tpu.reciprocal %94 {approx = true} : vector<8x1xf32> -> vector<8x1xf32>
    %96 = vector.broadcast %95 : vector<8x1xf32> to vector<8x8xf32>
    %97 = arith.mulf %92, %96 : vector<8x8xf32>
    %98 = arith.truncf %97 : vector<8x8xf32> to vector<8x8xbf16>
    %cst_38 = arith.constant dense<0.000000e+00> : vector<8x8xf32>
    %99 = tpu.matmul %98, %78, %cst_38 {dimension_numbers = #tpu.dot_dimension_numbers<[1], [0], [0], [1], [0, 0, 1, 1], [], []>} : vector<8x8xbf16>, vector<8x8xbf16>, vector<8x8xf32> -> vector<8x8xf32>
    %100 = vector.extract_strided_slice %4 {offsets = [0, 24], sizes = [8, 8], strides = [1, 1]} : vector<8x32xf32> to vector<8x8xf32>
    %101 = arith.truncf %100 : vector<8x8xf32> to vector<8x8xbf16>
    %102 = vector.extract_strided_slice %6 {offsets = [0, 24], sizes = [8, 8], strides = [1, 1]} : vector<8x32xf32> to vector<8x8xf32>
    %103 = arith.truncf %102 : vector<8x8xf32> to vector<8x8xbf16>
    %104 = vector.extract_strided_slice %8 {offsets = [0, 24], sizes = [8, 8], strides = [1, 1]} : vector<8x32xf32> to vector<8x8xf32>
    %105 = arith.truncf %104 : vector<8x8xf32> to vector<8x8xbf16>
    %c3_i32 = arith.constant 3 : i32
    %106 = vector.broadcast %c3_i32 : i32 to vector<8x8x4xi32>
    %107 = arith.cmpi eq, %18, %106 : vector<8x8x4xi32>
    %cst_39 = arith.constant 0.000000e+00 : f32
    %108 = vector.broadcast %cst_39 : f32 to vector<8x8x4xf32>
    %109 = arith.select %107, %17, %108 : vector<8x8x4xi1>, vector<8x8x4xf32>
    %cst_40 = arith.constant dense<0.000000e+00> : vector<8x8xf32>
    %110 = vector.multi_reduction <add>, %109, %cst_40 [2] : vector<8x8x4xf32> to vector<8x8xf32>
    %cst_41 = arith.constant dense<0.000000e+00> : vector<8x8xf32>
    %111 = tpu.matmul %101, %103, %cst_41 {dimension_numbers = #tpu.dot_dimension_numbers<[1], [1], [0], [0], [0, 0, 1, 0], [], []>} : vector<8x8xbf16>, vector<8x8xbf16>, vector<8x8xf32> -> vector<8x8xf32>
    %cst_42 = arith.constant 0.353553385 : f32
    %112 = vector.broadcast %cst_42 : f32 to vector<8x8xf32>
    %113 = arith.mulf %112, %111 : vector<8x8xf32>
    %114 = arith.addf %113, %110 : vector<8x8xf32>
    %cst_43 = arith.constant dense<0xFF800000> : vector<8xf32>
    %115 = vector.multi_reduction <maximumf>, %114, %cst_43 [1] : vector<8x8xf32> to vector<8xf32>
    %116 = vector.shape_cast %115 : vector<8xf32> to vector<8x1xf32>
    %117 = vector.broadcast %116 : vector<8x1xf32> to vector<8x8xf32>
    %118 = arith.subf %114, %117 : vector<8x8xf32>
    %119 = math.exp %118 : vector<8x8xf32>
    %cst_44 = arith.constant dense<0.000000e+00> : vector<8xf32>
    %120 = vector.multi_reduction <add>, %119, %cst_44 [1] : vector<8x8xf32> to vector<8xf32>
    %121 = vector.shape_cast %120 : vector<8xf32> to vector<8x1xf32>
    %122 = tpu.reciprocal %121 {approx = true} : vector<8x1xf32> -> vector<8x1xf32>
    %123 = vector.broadcast %122 : vector<8x1xf32> to vector<8x8xf32>
    %124 = arith.mulf %119, %123 : vector<8x8xf32>
    %125 = arith.truncf %124 : vector<8x8xf32> to vector<8x8xbf16>
    %cst_45 = arith.constant dense<0.000000e+00> : vector<8x8xf32>
    %126 = tpu.matmul %125, %105, %cst_45 {dimension_numbers = #tpu.dot_dimension_numbers<[1], [0], [0], [1], [0, 0, 1, 1], [], []>} : vector<8x8xbf16>, vector<8x8xbf16>, vector<8x8xf32> -> vector<8x8xf32>
    %127 = tpu.concatenate %45, %72, %99, %126 in 1 : vector<8x8xf32>, vector<8x8xf32>, vector<8x8xf32>, vector<8x8xf32> -> vector<8x32xf32>
    %128 = arith.truncf %127 : vector<8x32xf32> to vector<8x32xbf16>
    %c0_46 = arith.constant 0 : index
    %c0_47 = arith.constant 0 : index
    %129 = vector.load %arg6[%c0_46, %c0_47] : memref<32x32xbf16, #tpu.memory_space<vmem>>, vector<32x32xbf16>
    %cst_48 = arith.constant dense<0.000000e+00> : vector<8x32xf32>
    %130 = tpu.matmul %128, %129, %cst_48 {dimension_numbers = #tpu.dot_dimension_numbers<[1], [0], [0], [1], [0, 0, 1, 1], [], []>} : vector<8x32xbf16>, vector<32x32xbf16>, vector<8x32xf32> -> vector<8x32xf32>
    %131 = arith.addf %1, %130 : vector<8x32xf32>
    %c0_49 = arith.constant 0 : index
    %c0_50 = arith.constant 0 : index
    %c0_51 = arith.constant 0 : index
    %132 = vector.load %arg9[%c0_49, %c0_50, %c0_51] : memref<1x8x32xf32, #tpu.memory_space<vmem>>, vector<1x8x32xf32>
    %133 = vector.shape_cast %132 : vector<1x8x32xf32> to vector<8x32xf32>
    %134 = vector.shape_cast %131 : vector<8x32xf32> to vector<1x8x32xf32>
    tpu.vector_store %arg9[%c0_49, %c0_50, %c0_51], %134 {strides = array<i32>} : memref<1x8x32xf32, #tpu.memory_space<vmem>>, vector<1x8x32xf32>,
    return
  }
  func.func @transform_0(%arg0: i32) -> (i32, i32, i32) {
    %c0_i32 = arith.constant 0 : i32
    %c0_i32_0 = arith.constant 0 : i32
    %c0_i32_1 = arith.constant 0 : i32
    return %arg0, %c0_i32, %c0_i32_0 : i32, i32, i32
  }
  func.func @transform_1(%arg0: i32) -> (i32, i32, i32) {
    %c0_i32 = arith.constant 0 : i32
    %c0_i32_0 = arith.constant 0 : i32
    %c0_i32_1 = arith.constant 0 : i32
    return %arg0, %c0_i32, %c0_i32_0 : i32, i32, i32
  }
  func.func @transform_2(%arg0: i32) -> (i32, i32) {
    %c0_i32 = arith.constant 0 : i32
    %c0_i32_0 = arith.constant 0 : i32
    %c0_i32_1 = arith.constant 0 : i32
    return %c0_i32, %c0_i32_0 : i32, i32
  }
  func.func @transform_3(%arg0: i32) -> (i32, i32) {
    %c0_i32 = arith.constant 0 : i32
    %c0_i32_0 = arith.constant 0 : i32
    %c0_i32_1 = arith.constant 0 : i32
    return %c0_i32, %c0_i32_0 : i32, i32
  }
  func.func @transform_4(%arg0: i32) -> (i32, i32) {
    %c0_i32 = arith.constant 0 : i32
    %c0_i32_0 = arith.constant 0 : i32
    %c0_i32_1 = arith.constant 0 : i32
    return %c0_i32, %c0_i32_0 : i32, i32
  }
  func.func @transform_5(%arg0: i32) -> (i32, i32) {
    %c0_i32 = arith.constant 0 : i32
    %c0_i32_0 = arith.constant 0 : i32
    %c0_i32_1 = arith.constant 0 : i32
    return %c0_i32, %c0_i32_0 : i32, i32
  }
  func.func @transform_6(%arg0: i32) -> (i32, i32) {
    %c0_i32 = arith.constant 0 : i32
    %c0_i32_0 = arith.constant 0 : i32
    %c0_i32_1 = arith.constant 0 : i32
    return %c0_i32, %c0_i32_0 : i32, i32
  }
  func.func @transform_7(%arg0: i32) -> (i32, i32) {
    %c0_i32 = arith.constant 0 : i32
    %c0_i32_0 = arith.constant 0 : i32
    %c0_i32_1 = arith.constant 0 : i32
    return %c0_i32, %c0_i32_0 : i32, i32
  }
  func.func @transform_8(%arg0: i32) -> (i32, i32, i32) {
    %c0_i32 = arith.constant 0 : i32
    %c0_i32_0 = arith.constant 0 : i32
    %c0_i32_1 = arith.constant 0 : i32
    return %arg0, %c0_i32, %c0_i32_0 : i32, i32, i32
  }
}

module attributes {stable_mosaic.version = 11 : i64} {
  func.func @ffn_kernel(%arg0: i32, %arg1: memref<16x32xf32, #tpu.memory_space<vmem>>, %arg2: memref<32x64xbf16, #tpu.memory_space<vmem>>, %arg3: memref<1x64xf32, #tpu.memory_space<vmem>>, %arg4: memref<64x32xbf16, #tpu.memory_space<vmem>>, %arg5: memref<1x32xf32, #tpu.memory_space<vmem>>, %arg6: memref<16x32xf32, #tpu.memory_space<vmem>>) attributes {dimension_semantics = [#tpu.dimension_semantics<parallel>], iteration_bounds = array<i64: 1>, scalar_prefetch = 0 : i64, scratch_operands = 0 : i64, tpu.core_type = #tpu.core_type<tc>, window_params = [{transform_indices = @transform_0, window_bounds = array<i64: 16, 32>}, {pipeline_mode = #tpu.pipeline_mode<synchronous>, transform_indices = @transform_1, window_bounds = array<i64: 32, 64>}, {pipeline_mode = #tpu.pipeline_mode<synchronous>, transform_indices = @transform_2, window_bounds = array<i64: 1, 64>}, {pipeline_mode = #tpu.pipeline_mode<synchronous>, transform_indices = @transform_3, window_bounds = array<i64: 64, 32>}, {pipeline_mode = #tpu.pipeline_mode<synchronous>, transform_indices = @transform_4, window_bounds = array<i64: 1, 32>}, {transform_indices = @transform_5, window_bounds = array<i64: 16, 32>}]} {
    %c0 = arith.constant 0 : index
    %c0_0 = arith.constant 0 : index
    %0 = vector.load %arg1[%c0, %c0_0] : memref<16x32xf32, #tpu.memory_space<vmem>>, vector<16x32xf32>
    %1 = arith.truncf %0 : vector<16x32xf32> to vector<16x32xbf16>
    %c0_1 = arith.constant 0 : index
    %c0_2 = arith.constant 0 : index
    %2 = vector.load %arg2[%c0_1, %c0_2] : memref<32x64xbf16, #tpu.memory_space<vmem>>, vector<32x64xbf16>
    %cst = arith.constant dense<0.000000e+00> : vector<16x64xf32>
    %3 = tpu.matmul %1, %2, %cst {dimension_numbers = #tpu.dot_dimension_numbers<[1], [0], [0], [1], [0, 0, 1, 1], [], []>} : vector<16x32xbf16>, vector<32x64xbf16>, vector<16x64xf32> -> vector<16x64xf32>
    %c0_3 = arith.constant 0 : index
    %c0_4 = arith.constant 0 : index
    %4 = vector.load %arg3[%c0_3, %c0_4] : memref<1x64xf32, #tpu.memory_space<vmem>>, vector<1x64xf32>
    %5 = vector.broadcast %4 : vector<1x64xf32> to vector<16x64xf32>
    %6 = arith.addf %3, %5 : vector<16x64xf32>
    %cst_5 = arith.constant 0.000000e+00 : f32
    %7 = vector.broadcast %cst_5 : f32 to vector<16x64xf32>
    %8 = arith.maximumf %6, %7 : vector<16x64xf32>
    %9 = arith.truncf %8 : vector<16x64xf32> to vector<16x64xbf16>
    %c0_6 = arith.constant 0 : index
    %c0_7 = arith.constant 0 : index
    %10 = vector.load %arg4[%c0_6, %c0_7] : memref<64x32xbf16, #tpu.memory_space<vmem>>, vector<64x32xbf16>
    %cst_8 = arith.constant dense<0.000000e+00> : vector<16x32xf32>
    %11 = tpu.matmul %9, %10, %cst_8 {dimension_numbers = #tpu.dot_dimension_numbers<[1], [0], [0], [1], [0, 0, 1, 1], [], []>} : vector<16x64xbf16>, vector<64x32xbf16>, vector<16x32xf32> -> vector<16x32xf32>
    %c0_9 = arith.constant 0 : index
    %c0_10 = arith.constant 0 : index
    %12 = vector.load %arg5[%c0_9, %c0_10] : memref<1x32xf32, #tpu.memory_space<vmem>>, vector<1x32xf32>
    %13 = vector.broadcast %12 : vector<1x32xf32> to vector<16x32xf32>
    %14 = arith.addf %11, %13 : vector<16x32xf32>
    %15 = arith.addf %0, %14 : vector<16x32xf32>
    %c0_11 = arith.constant 0 : index
    %c0_12 = arith.constant 0 : index
    %16 = vector.load %arg6[%c0_11, %c0_12] : memref<16x32xf32, #tpu.memory_space<vmem>>, vector<16x32xf32>
    tpu.vector_store %arg6[%c0_11, %c0_12], %15 {strides = array<i32>} : memref<16x32xf32, #tpu.memory_space<vmem>>, vector<16x32xf32>,
    return
  }
  func.func @transform_0(%arg0: i32) -> (i32, i32) {
    %c0_i32 = arith.constant 0 : i32
    %c0_i32_0 = arith.constant 0 : i32
    return %arg0, %c0_i32 : i32, i32
  }
  func.func @transform_1(%arg0: i32) -> (i32, i32) {
    %c0_i32 = arith.constant 0 : i32
    %c0_i32_0 = arith.constant 0 : i32
    %c0_i32_1 = arith.constant 0 : i32
    return %c0_i32, %c0_i32_0 : i32, i32
  }
  func.func @transform_2(%arg0: i32) -> (i32, i32) {
    %c0_i32 = arith.constant 0 : i32
    %c0_i32_0 = arith.constant 0 : i32
    %c0_i32_1 = arith.constant 0 : i32
    return %c0_i32, %c0_i32_0 : i32, i32
  }
  func.func @transform_3(%arg0: i32) -> (i32, i32) {
    %c0_i32 = arith.constant 0 : i32
    %c0_i32_0 = arith.constant 0 : i32
    %c0_i32_1 = arith.constant 0 : i32
    return %c0_i32, %c0_i32_0 : i32, i32
  }
  func.func @transform_4(%arg0: i32) -> (i32, i32) {
    %c0_i32 = arith.constant 0 : i32
    %c0_i32_0 = arith.constant 0 : i32
    %c0_i32_1 = arith.constant 0 : i32
    return %c0_i32, %c0_i32_0 : i32, i32
  }
  func.func @transform_5(%arg0: i32) -> (i32, i32) {
    %c0_i32 = arith.constant 0 : i32
    %c0_i32_0 = arith.constant 0 : i32
    return %arg0, %c0_i32 : i32, i32
  }
}

module attributes {stable_mosaic.version = 11 : i64} {
  func.func @mha_kernel(%arg0: i32, %arg1: memref<1x8x32xf32, #tpu.memory_space<vmem>>, %arg2: memref<1x64x32xbf16, #tpu.memory_space<vmem>>, %arg3: memref<32x32xbf16, #tpu.memory_space<vmem>>, %arg4: memref<32x32xbf16, #tpu.memory_space<vmem>>, %arg5: memref<32x32xbf16, #tpu.memory_space<vmem>>, %arg6: memref<32x32xbf16, #tpu.memory_space<vmem>>, %arg7: memref<32x4xbf16, #tpu.memory_space<vmem>>, %arg8: memref<1x4xf32, #tpu.memory_space<vmem>>, %arg9: memref<1x8x32xf32, #tpu.memory_space<vmem>>) attributes {dimension_semantics = [#tpu.dimension_semantics<parallel>], iteration_bounds = array<i64: 2>, scalar_prefetch = 0 : i64, scratch_operands = 0 : i64, tpu.core_type = #tpu.core_type<tc>, window_params = [{transform_indices = @transform_0, window_bounds = array<i64: 1, 8, 32>}, {transform_indices = @transform_1, window_bounds = array<i64: 1, 64, 32>}, {pipeline_mode = #tpu.pipeline_mode<synchronous>, transform_indices = @transform_2, window_bounds = array<i64: 32, 32>}, {pipeline_mode = #tpu.pipeline_mode<synchronous>, transform_indices = @transform_3, window_bounds = array<i64: 32, 32>}, {pipeline_mode = #tpu.pipeline_mode<synchronous>, transform_indices = @transform_4, window_bounds = array<i64: 32, 32>}, {pipeline_mode = #tpu.pipeline_mode<synchronous>, transform_indices = @transform_5, window_bounds = array<i64: 32, 32>}, {pipeline_mode = #tpu.pipeline_mode<synchronous>, transform_indices = @transform_6, window_bounds = array<i64: 32, 4>}, {pipeline_mode = #tpu.pipeline_mode<synchronous>, transform_indices = @transform_7, window_bounds = array<i64: 1, 4>}, {transform_indices = @transform_8, window_bounds = array<i64: 1, 8, 32>}]} {
    %c0 = arith.constant 0 : index
    %c0_0 = arith.constant 0 : index
    %c0_1 = arith.constant 0 : index
    %0 = vector.load %arg1[%c0, %c0_0, %c0_1] : memref<1x8x32xf32, #tpu.memory_space<vmem>>, vector<1x8x32xf32>
    %1 = vector.shape_cast %0 : vector<1x8x32xf32> to vector<8x32xf32>
    %2 = arith.truncf %1 : vector<8x32xf32> to vector<8x32xbf16>
    %c0_2 = arith.constant 0 : index
    %c0_3 = arith.constant 0 : index
    %3 = vector.load %arg3[%c0_2, %c0_3] : memref<32x32xbf16, #tpu.memory_space<vmem>>, vector<32x32xbf16>
    %cst = arith.constant dense<0.000000e+00> : vector<8x32xf32>
    %4 = tpu.matmul %2, %3, %cst {dimension_numbers = #tpu.dot_dimension_numbers<[1], [0], [0], [1], [0, 0, 1, 1], [], []>} : vector<8x32xbf16>, vector<32x32xbf16>, vector<8x32xf32> -> vector<8x32xf32>
    %c0_4 = arith.constant 0 : index
    %c0_5 = arith.constant 0 : index
    %5 = vector.load %arg4[%c0_4, %c0_5] : memref<32x32xbf16, #tpu.memory_space<vmem>>, vector<32x32xbf16>
    %cst_6 = arith.constant dense<0.000000e+00> : vector<8x32xf32>
    %6 = tpu.matmul %2, %5, %cst_6 {dimension_numbers = #tpu.dot_dimension_numbers<[1], [0], [0], [1], [0, 0, 1, 1], [], []>} : vector<8x32xbf16>, vector<32x32xbf16>, vector<8x32xf32> -> vector<8x32xf32>
    %c0_7 = arith.constant 0 : index
    %c0_8 = arith.constant 0 : index
    %7 = vector.load %arg5[%c0_7, %c0_8] : memref<32x32xbf16, #tpu.memory_space<vmem>>, vector<32x32xbf16>
    %cst_9 = arith.constant dense<0.000000e+00> : vector<8x32xf32>
    %8 = tpu.matmul %2, %7, %cst_9 {dimension_numbers = #tpu.dot_dimension_numbers<[1], [0], [0], [1], [0, 0, 1, 1], [], []>} : vector<8x32xbf16>, vector<32x32xbf16>, vector<8x32xf32> -> vector<8x32xf32>
    %c0_10 = arith.constant 0 : index
    %c0_11 = arith.constant 0 : index
    %c0_12 = arith.constant 0 : index
    %9 = vector.load %arg2[%c0_10, %c0_11, %c0_12] : memref<1x64x32xbf16, #tpu.memory_space<vmem>>, vector<1x64x32xbf16>
    %10 = vector.shape_cast %9 : vector<1x64x32xbf16> to vector<64x32xbf16>
    %c0_13 = arith.constant 0 : index
    %c0_14 = arith.constant 0 : index
    %11 = vector.load %arg7[%c0_13, %c0_14] : memref<32x4xbf16, #tpu.memory_space<vmem>>, vector<32x4xbf16>
    %cst_15 = arith.constant dense<0.000000e+00> : vector<64x4xf32>
    %12 = tpu.matmul %10, %11, %cst_15 {dimension_numbers = #tpu.dot_dimension_numbers<[1], [0], [0], [1], [0, 0, 1, 1], [], []>} : vector<64x32xbf16>, vector<32x4xbf16>, vector<64x4xf32> -> vector<64x4xf32>
    %c0_16 = arith.constant 0 : index
    %c0_17 = arith.constant 0 : index
    %13 = vector.load %arg8[%c0_16, %c0_17] : memref<1x4xf32, #tpu.memory_space<vmem>>, vector<1x4xf32>
    %14 = vector.broadcast %13 : vector<1x4xf32> to vector<64x4xf32>
    %15 = arith.addf %12, %14 : vector<64x4xf32>
    %16 = math.tanh %15 : vector<64x4xf32>
    %17 = vector.shape_cast %16 : vector<64x4xf32> to vector<8x8x4xf32>
    %18 = tpu.iota {dimensions = array<i32: 2>} : vector<8x8x4xi32>
    %19 = vector.extract_strided_slice %4 {offsets = [0, 0], sizes = [8, 8], strides = [1, 1]} : vector<8x32xf32> to vector<8x8xf32>
    %20 = arith.truncf %19 : vector<8x8xf32> to vector<8x8xbf16>
    %21 = vector.extract_strided_slice %6 {offsets = [0, 0], sizes = [8, 8], strides = [1, 1]} : vector<8x32xf32> to vector<8x8xf32>
    %22 = arith.truncf %21 : vector<8x8xf32> to vector<8x8xbf16>
    %23 = vector.extract_strided_slice %8 {offsets = [0, 0], sizes = [8, 8], strides = [1, 1]} : vector<8x32xf32> to vector<8x8xf32>
    %24 = arith.truncf %23 : vector<8x8xf32> to vector<8x8xbf16>
    %c0_i32 = arith.constant 0 : i32
    %25 = vector.broadcast %c0_i32 : i32 to vector<8x8x4xi32>
    %26 = arith.cmpi eq, %18, %25 : vector<8x8x4xi32>
    %cst_18 = arith.constant 0.000000e+00 : f32
    %27 = vector.broadcast %cst_18 : f32 to vector<8x8x4xf32>
    %28 = arith.select %26, %17, %27 : vector<8x8x4xi1>, vector<8x8x4xf32>
    %cst_19 = arith.constant dense<0.000000e+00> : vector<8x8xf32>
    %29 = vector.multi_reduction <add>, %28, %cst_19 [2] : vector<8x8x4xf32> to vector<8x8xf32>
    %cst_20 = arith.constant dense<0.000000e+00> : vector<8x8xf32>
    %30 = tpu.matmul %20, %22, %cst_20 {dimension_numbers = #tpu.dot_dimension_numbers<[1], [1], [0], [0], [0, 0, 1, 0], [], []>} : vector<8x8xbf16>, vector<8x8xbf16>, vector<8x8xf32> -> vector<8x8xf32>
    %cst_21 = arith.constant 0.353553385 : f32
    %31 = vector.broadcast %cst_21 : f32 to vector<8x8xf32>
    %32 = arith.mulf %31, %30 : vector<8x8xf32>
    %33 = arith.addf %32, %29 : vector<8x8xf32>
    %cst_22 = arith.constant dense<0xFF800000> : vector<8xf32>
    %34 = vector.multi_reduction <maximumf>, %33, %cst_22 [1] : vector<8x8xf32> to vector<8xf32>
    %35 = vector.shape_cast %34 : vector<8xf32> to vector<8x1xf32>
    %36 = vector.broadcast %35 : vector<8x1xf32> to vector<8x8xf32>
    %37 = arith.subf %33, %36 : vector<8x8xf32>
    %38 = math.exp %37 : vector<8x8xf32>
    %cst_23 = arith.constant dense<0.000000e+00> : vector<8xf32>
    %39 = vector.multi_reduction <add>, %38, %cst_23 [1] : vector<8x8xf32> to vector<8xf32>
    %40 = vector.shape_cast %39 : vector<8xf32> to vector<8x1xf32>
    %41 = tpu.reciprocal %40 {approx = true} : vector<8x1xf32> -> vector<8x1xf32>
    %42 = vector.broadcast %41 : vector<8x1xf32> to vector<8x8xf32>
    %43 = arith.mulf %38, %42 : vector<8x8xf32>
    %44 = arith.truncf %43 : vector<8x8xf32> to vector<8x8xbf16>
    %cst_24 = arith.constant dense<0.000000e+00> : vector<8x8xf32>
    %45 = tpu.matmul %44, %24, %cst_24 {dimension_numbers = #tpu.dot_dimension_numbers<[1], [0], [0], [1], [0, 0, 1, 1], [], []>} : vector<8x8xbf16>, vector<8x8xbf16>, vector<8x8xf32> -> vector<8x8xf32>
    %46 = vector.extract_strided_slice %4 {offsets = [0, 8], sizes = [8, 8], strides = [1, 1]} : vector<8x32xf32> to vector<8x8xf32>
    %47 = arith.truncf %46 : vector<8x8xf32> to vector<8x8xbf16>
    %48 = vector.extract_strided_slice %6 {offsets = [0, 8], sizes = [8, 8], strides = [1, 1]} : vector<8x32xf32> to vector<8x8xf32>
    %49 = arith.truncf %48 : vector<8x8xf32> to vector<8x8xbf16>
    %50 = vector.extract_strided_slice %8 {offsets = [0, 8], sizes = [8, 8], strides = [1, 1]} : vector<8x32xf32> to vector<8x8xf32>
    %51 = arith.truncf %50 : vector<8x8xf32> to vector<8x8xbf16>
    %c1_i32 = arith.constant 1 : i32
    %52 = vector.broadcast %c1_i32 : i32 to vector<8x8x4xi32>
    %53 = arith.cmpi eq, %18, %52 : vector<8x8x4xi32>
    %cst_25 = arith.constant 0.000000e+00 : f32
    %54 = vector.broadcast %cst_25 : f32 to vector<8x8x4xf32>
    %55 = arith.select %53, %17, %54 : vector<8x8x4xi1>, vector<8x8x4xf32>
    %cst_26 = arith.constant dense<0.000000e+00> : vector<8x8xf32>
    %56 = vector.multi_reduction <add>, %55, %cst_26 [2] : vector<8x8x4xf32> to vector<8x8xf32>
    %cst_27 = arith.constant dense<0.000000e+00> : vector<8x8xf32>
    %57 = tpu.matmul %47, %49, %cst_27 {dimension_numbers = #tpu.dot_dimension_numbers<[1], [1], [0], [0], [0, 0, 1, 0], [], []>} : vector<8x8xbf16>, vector<8x8xbf16>, vector<8x8xf32> -> vector<8x8xf32>
    %cst_28 = arith.constant 0.353553385 : f32
    %58 = vector.broadcast %cst_28 : f32 to vector<8x8xf32>
    %59 = arith.mulf %58, %57 : vector<8x8xf32>
    %60 = arith.addf %59, %56 : vector<8x8xf32>
    %cst_29 = arith.constant dense<0xFF800000> : vector<8xf32>
    %61 = vector.multi_reduction <maximumf>, %60, %cst_29 [1] : vector<8x8xf32> to vector<8xf32>
    %62 = vector.shape_cast %61 : vector<8xf32> to vector<8x1xf32>
    %63 = vector.broadcast %62 : vector<8x1xf32> to vector<8x8xf32>
    %64 = arith.subf %60, %63 : vector<8x8xf32>
    %65 = math.exp %64 : vector<8x8xf32>
    %cst_30 = arith.constant dense<0.000000e+00> : vector<8xf32>
    %66 = vector.multi_reduction <add>, %65, %cst_30 [1] : vector<8x8xf32> to vector<8xf32>
    %67 = vector.shape_cast %66 : vector<8xf32> to vector<8x1xf32>
    %68 = tpu.reciprocal %67 {approx = true} : vector<8x1xf32> -> vector<8x1xf32>
    %69 = vector.broadcast %68 : vector<8x1xf32> to vector<8x8xf32>
    %70 = arith.mulf %65, %69 : vector<8x8xf32>
    %71 = arith.truncf %70 : vector<8x8xf32> to vector<8x8xbf16>
    %cst_31 = arith.constant dense<0.000000e+00> : vector<8x8xf32>
    %72 = tpu.matmul %71, %51, %cst_31 {dimension_numbers = #tpu.dot_dimension_numbers<[1], [0], [0], [1], [0, 0, 1, 1], [], []>} : vector<8x8xbf16>, vector<8x8xbf16>, vector<8x8xf32> -> vector<8x8xf32>
    %73 = vector.extract_strided_slice %4 {offsets = [0, 16], sizes = [8, 8], strides = [1, 1]} : vector<8x32xf32> to vector<8x8xf32>
    %74 = arith.truncf %73 : vector<8x8xf32> to vector<8x8xbf16>
    %75 = vector.extract_strided_slice %6 {offsets = [0, 16], sizes = [8, 8], strides = [1, 1]} : vector<8x32xf32> to vector<8x8xf32>
    %76 = arith.truncf %75 : vector<8x8xf32> to vector<8x8xbf16>
    %77 = vector.extract_strided_slice %8 {offsets = [0, 16], sizes = [8, 8], strides = [1, 1]} : vector<8x32xf32> to vector<8x8xf32>
    %78 = arith.truncf %77 : vector<8x8xf32> to vector<8x8xbf16>
    %c2_i32 = arith.constant 2 : i32
    %79 = vector.broadcast %c2_i32 : i32 to vector<8x8x4xi32>
    %80 = arith.cmpi eq, %18, %79 : vector<8x8x4xi32>
    %cst_32 = arith.constant 0.000000e+00 : f32
    %81 = vector.broadcast %cst_32 : f32 to vector<8x8x4xf32>
    %82 = arith.select %80, %17, %81 : vector<8x8x4xi1>, vector<8x8x4xf32>
    %cst_33 = arith.constant dense<0.000000e+00> : vector<8x8xf32>
    %83 = vector.multi_reduction <add>, %82, %cst_33 [2] : vector<8x8x4xf32> to vector<8x8xf32>
    %cst_34 = arith.constant dense<0.000000e+00> : vector<8x8xf32>
    %84 = tpu.matmul %74, %76, %cst_34 {dimension_numbers = #tpu.dot_dimension_numbers<[1], [1], [0], [0], [0, 0, 1, 0], [], []>} : vector<8x8xbf16>, vector<8x8xbf16>, vector<8x8xf32> -> vector<8x8xf32>
    %cst_35 = arith.constant 0.353553385 : f32
    %85 = vector.broadcast %cst_35 : f32 to vector<8x8xf32>
    %86 = arith.mulf %85, %84 : vector<8x8xf32>
    %87 = arith.addf %86, %83 : vector<8x8xf32>
    %cst_36 = arith.constant dense<0xFF800000> : vector<8xf32>
    %88 = vector.multi_reduction <maximumf>, %87, %cst_36 [1] : vector<8x8xf32> to vector<8xf32>
    %89 = vector.shape_cast %88 : vector<8xf32> to vector<8x1xf32>
    %90 = vector.broadcast %89 : vector<8x1xf32> to vector<8x8xf32>
    %91 = arith.subf %87, %90 : vector<8x8xf32>
    %92 = math.exp %91 : vector<8x8xf32>
    %cst_37 = arith.constant dense<0.000000e+00> : vector<8xf32>
    %93 = vector.multi_reduction <add>, %92, %cst_37 [1] : vector<8x8xf32> to vector<8xf32>
    %94 = vector.shape_cast %93 : vector<8xf32> to vector<8x1xf32>
    %95 = tpu.reciprocal %94 {approx = true} : vector<8x1xf32> -> vector<8x1xf32>
    %96 = vector.broadcast %95 : vector<8x1xf32> to vector<8x8xf32>
    %97 = arith.mulf %92, %96 : vector<8x8xf32>
    %98 = arith.truncf %97 : vector<8x8xf32> to vector<8x8xbf16>
    %cst_38 = arith.constant dense<0.000000e+00> : vector<8x8xf32>
    %99 = tpu.matmul %98, %78, %cst_38 {dimension_numbers = #tpu.dot_dimension_numbers<[1], [0], [0], [1], [0, 0, 1, 1], [], []>} : vector<8x8xbf16>, vector<8x8xbf16>, vector<8x8xf32> -> vector<8x8xf32>
    %100 = vector.extract_strided_slice %4 {offsets = [0, 24], sizes = [8, 8], strides = [1, 1]} : vector<8x32xf32> to vector<8x8xf32>
    %101 = arith.truncf %100 : vector<8x8xf32> to vector<8x8xbf16>
    %102 = vector.extract_strided_slice %6 {offsets = [0, 24], sizes = [8, 8], strides = [1, 1]} : vector<8x32xf32> to vector<8x8xf32>
    %103 = arith.truncf %102 : vector<8x8xf32> to vector<8x8xbf16>
    %104 = vector.extract_strided_slice %8 {offsets = [0, 24], sizes = [8, 8], strides = [1, 1]} : vector<8x32xf32> to vector<8x8xf32>
    %105 = arith.truncf %104 : vector<8x8xf32> to vector<8x8xbf16>
    %c3_i32 = arith.constant 3 : i32
    %106 = vector.broadcast %c3_i32 : i32 to vector<8x8x4xi32>
    %107 = arith.cmpi eq, %18, %106 : vector<8x8x4xi32>
    %cst_39 = arith.constant 0.000000e+00 : f32
    %108 = vector.broadcast %cst_39 : f32 to vector<8x8x4xf32>
    %109 = arith.select %107, %17, %108 : vector<8x8x4xi1>, vector<8x8x4xf32>
    %cst_40 = arith.constant dense<0.000000e+00> : vector<8x8xf32>
    %110 = vector.multi_reduction <add>, %109, %cst_40 [2] : vector<8x8x4xf32> to vector<8x8xf32>
    %cst_41 = arith.constant dense<0.000000e+00> : vector<8x8xf32>
    %111 = tpu.matmul %101, %103, %cst_41 {dimension_numbers = #tpu.dot_dimension_numbers<[1], [1], [0], [0], [0, 0, 1, 0], [], []>} : vector<8x8xbf16>, vector<8x8xbf16>, vector<8x8xf32> -> vector<8x8xf32>
    %cst_42 = arith.constant 0.353553385 : f32
    %112 = vector.broadcast %cst_42 : f32 to vector<8x8xf32>
    %113 = arith.mulf %112, %111 : vector<8x8xf32>
    %114 = arith.addf %113, %110 : vector<8x8xf32>
    %cst_43 = arith.constant dense<0xFF800000> : vector<8xf32>
    %115 = vector.multi_reduction <maximumf>, %114, %cst_43 [1] : vector<8x8xf32> to vector<8xf32>
    %116 = vector.shape_cast %115 : vector<8xf32> to vector<8x1xf32>
    %117 = vector.broadcast %116 : vector<8x1xf32> to vector<8x8xf32>
    %118 = arith.subf %114, %117 : vector<8x8xf32>
    %119 = math.exp %118 : vector<8x8xf32>
    %cst_44 = arith.constant dense<0.000000e+00> : vector<8xf32>
    %120 = vector.multi_reduction <add>, %119, %cst_44 [1] : vector<8x8xf32> to vector<8xf32>
    %121 = vector.shape_cast %120 : vector<8xf32> to vector<8x1xf32>
    %122 = tpu.reciprocal %121 {approx = true} : vector<8x1xf32> -> vector<8x1xf32>
    %123 = vector.broadcast %122 : vector<8x1xf32> to vector<8x8xf32>
    %124 = arith.mulf %119, %123 : vector<8x8xf32>
    %125 = arith.truncf %124 : vector<8x8xf32> to vector<8x8xbf16>
    %cst_45 = arith.constant dense<0.000000e+00> : vector<8x8xf32>
    %126 = tpu.matmul %125, %105, %cst_45 {dimension_numbers = #tpu.dot_dimension_numbers<[1], [0], [0], [1], [0, 0, 1, 1], [], []>} : vector<8x8xbf16>, vector<8x8xbf16>, vector<8x8xf32> -> vector<8x8xf32>
    %127 = tpu.concatenate %45, %72, %99, %126 in 1 : vector<8x8xf32>, vector<8x8xf32>, vector<8x8xf32>, vector<8x8xf32> -> vector<8x32xf32>
    %128 = arith.truncf %127 : vector<8x32xf32> to vector<8x32xbf16>
    %c0_46 = arith.constant 0 : index
    %c0_47 = arith.constant 0 : index
    %129 = vector.load %arg6[%c0_46, %c0_47] : memref<32x32xbf16, #tpu.memory_space<vmem>>, vector<32x32xbf16>
    %cst_48 = arith.constant dense<0.000000e+00> : vector<8x32xf32>
    %130 = tpu.matmul %128, %129, %cst_48 {dimension_numbers = #tpu.dot_dimension_numbers<[1], [0], [0], [1], [0, 0, 1, 1], [], []>} : vector<8x32xbf16>, vector<32x32xbf16>, vector<8x32xf32> -> vector<8x32xf32>
    %131 = arith.addf %1, %130 : vector<8x32xf32>
    %c0_49 = arith.constant 0 : index
    %c0_50 = arith.constant 0 : index
    %c0_51 = arith.constant 0 : index
    %132 = vector.load %arg9[%c0_49, %c0_50, %c0_51] : memref<1x8x32xf32, #tpu.memory_space<vmem>>, vector<1x8x32xf32>
    %133 = vector.shape_cast %132 : vector<1x8x32xf32> to vector<8x32xf32>
    %134 = vector.shape_cast %131 : vector<8x32xf32> to vector<1x8x32xf32>
    tpu.vector_store %arg9[%c0_49, %c0_50, %c0_51], %134 {strides = array<i32>} : memref<1x8x32xf32, #tpu.memory_space<vmem>>, vector<1x8x32xf32>,
    return
  }
  func.func @transform_0(%arg0: i32) -> (i32, i32, i32) {
    %c0_i32 = arith.constant 0 : i32
    %c0_i32_0 = arith.constant 0 : i32
    %c0_i32_1 = arith.constant 0 : i32
    return %arg0, %c0_i32, %c0_i32_0 : i32, i32, i32
  }
  func.func @transform_1(%arg0: i32) -> (i32, i32, i32) {
    %c0_i32 = arith.constant 0 : i32
    %c0_i32_0 = arith.constant 0 : i32
    %c0_i32_1 = arith.constant 0 : i32
    return %arg0, %c0_i32, %c0_i32_0 : i32, i32, i32
  }
  func.func @transform_2(%arg0: i32) -> (i32, i32) {
    %c0_i32 = arith.constant 0 : i32
    %c0_i32_0 = arith.constant 0 : i32
    %c0_i32_1 = arith.constant 0 : i32
    return %c0_i32, %c0_i32_0 : i32, i32
  }
  func.func @transform_3(%arg0: i32) -> (i32, i32) {
    %c0_i32 = arith.constant 0 : i32
    %c0_i32_0 = arith.constant 0 : i32
    %c0_i32_1 = arith.constant 0 : i32
    return %c0_i32, %c0_i32_0 : i32, i32
  }
  func.func @transform_4(%arg0: i32) -> (i32, i32) {
    %c0_i32 = arith.constant 0 : i32
    %c0_i32_0 = arith.constant 0 : i32
    %c0_i32_1 = arith.constant 0 : i32
    return %c0_i32, %c0_i32_0 : i32, i32
  }
  func.func @transform_5(%arg0: i32) -> (i32, i32) {
    %c0_i32 = arith.constant 0 : i32
    %c0_i32_0 = arith.constant 0 : i32
    %c0_i32_1 = arith.constant 0 : i32
    return %c0_i32, %c0_i32_0 : i32, i32
  }
  func.func @transform_6(%arg0: i32) -> (i32, i32) {
    %c0_i32 = arith.constant 0 : i32
    %c0_i32_0 = arith.constant 0 : i32
    %c0_i32_1 = arith.constant 0 : i32
    return %c0_i32, %c0_i32_0 : i32, i32
  }
  func.func @transform_7(%arg0: i32) -> (i32, i32) {
    %c0_i32 = arith.constant 0 : i32
    %c0_i32_0 = arith.constant 0 : i32
    %c0_i32_1 = arith.constant 0 : i32
    return %c0_i32, %c0_i32_0 : i32, i32
  }
  func.func @transform_8(%arg0: i32) -> (i32, i32, i32) {
    %c0_i32 = arith.constant 0 : i32
    %c0_i32_0 = arith.constant 0 : i32
    %c0_i32_1 = arith.constant 0 : i32
    return %arg0, %c0_i32, %c0_i32_0 : i32, i32, i32
  }
}

module attributes {stable_mosaic.version = 11 : i64} {
  func.func @ffn_kernel(%arg0: i32, %arg1: memref<16x32xf32, #tpu.memory_space<vmem>>, %arg2: memref<32x64xbf16, #tpu.memory_space<vmem>>, %arg3: memref<1x64xf32, #tpu.memory_space<vmem>>, %arg4: memref<64x32xbf16, #tpu.memory_space<vmem>>, %arg5: memref<1x32xf32, #tpu.memory_space<vmem>>, %arg6: memref<16x32xf32, #tpu.memory_space<vmem>>) attributes {dimension_semantics = [#tpu.dimension_semantics<parallel>], iteration_bounds = array<i64: 1>, scalar_prefetch = 0 : i64, scratch_operands = 0 : i64, tpu.core_type = #tpu.core_type<tc>, window_params = [{transform_indices = @transform_0, window_bounds = array<i64: 16, 32>}, {pipeline_mode = #tpu.pipeline_mode<synchronous>, transform_indices = @transform_1, window_bounds = array<i64: 32, 64>}, {pipeline_mode = #tpu.pipeline_mode<synchronous>, transform_indices = @transform_2, window_bounds = array<i64: 1, 64>}, {pipeline_mode = #tpu.pipeline_mode<synchronous>, transform_indices = @transform_3, window_bounds = array<i64: 64, 32>}, {pipeline_mode = #tpu.pipeline_mode<synchronous>, transform_indices = @transform_4, window_bounds = array<i64: 1, 32>}, {transform_indices = @transform_5, window_bounds = array<i64: 16, 32>}]} {
    %c0 = arith.constant 0 : index
    %c0_0 = arith.constant 0 : index
    %0 = vector.load %arg1[%c0, %c0_0] : memref<16x32xf32, #tpu.memory_space<vmem>>, vector<16x32xf32>
    %1 = arith.truncf %0 : vector<16x32xf32> to vector<16x32xbf16>
    %c0_1 = arith.constant 0 : index
    %c0_2 = arith.constant 0 : index
    %2 = vector.load %arg2[%c0_1, %c0_2] : memref<32x64xbf16, #tpu.memory_space<vmem>>, vector<32x64xbf16>
    %cst = arith.constant dense<0.000000e+00> : vector<16x64xf32>
    %3 = tpu.matmul %1, %2, %cst {dimension_numbers = #tpu.dot_dimension_numbers<[1], [0], [0], [1], [0, 0, 1, 1], [], []>} : vector<16x32xbf16>, vector<32x64xbf16>, vector<16x64xf32> -> vector<16x64xf32>
    %c0_3 = arith.constant 0 : index
    %c0_4 = arith.constant 0 : index
    %4 = vector.load %arg3[%c0_3, %c0_4] : memref<1x64xf32, #tpu.memory_space<vmem>>, vector<1x64xf32>
    %5 = vector.broadcast %4 : vector<1x64xf32> to vector<16x64xf32>
    %6 = arith.addf %3, %5 : vector<16x64xf32>
    %cst_5 = arith.constant 0.000000e+00 : f32
    %7 = vector.broadcast %cst_5 : f32 to vector<16x64xf32>
    %8 = arith.maximumf %6, %7 : vector<16x64xf32>
    %9 = arith.truncf %8 : vector<16x64xf32> to vector<16x64xbf16>
    %c0_6 = arith.constant 0 : index
    %c0_7 = arith.constant 0 : index
    %10 = vector.load %arg4[%c0_6, %c0_7] : memref<64x32xbf16, #tpu.memory_space<vmem>>, vector<64x32xbf16>
    %cst_8 = arith.constant dense<0.000000e+00> : vector<16x32xf32>
    %11 = tpu.matmul %9, %10, %cst_8 {dimension_numbers = #tpu.dot_dimension_numbers<[1], [0], [0], [1], [0, 0, 1, 1], [], []>} : vector<16x64xbf16>, vector<64x32xbf16>, vector<16x32xf32> -> vector<16x32xf32>
    %c0_9 = arith.constant 0 : index
    %c0_10 = arith.constant 0 : index
    %12 = vector.load %arg5[%c0_9, %c0_10] : memref<1x32xf32, #tpu.memory_space<vmem>>, vector<1x32xf32>
    %13 = vector.broadcast %12 : vector<1x32xf32> to vector<16x32xf32>
    %14 = arith.addf %11, %13 : vector<16x32xf32>
    %15 = arith.addf %0, %14 : vector<16x32xf32>
    %c0_11 = arith.constant 0 : index
    %c0_12 = arith.constant 0 : index
    %16 = vector.load %arg6[%c0_11, %c0_12] : memref<16x32xf32, #tpu.memory_space<vmem>>, vector<16x32xf32>
    tpu.vector_store %arg6[%c0_11, %c0_12], %15 {strides = array<i32>} : memref<16x32xf32, #tpu.memory_space<vmem>>, vector<16x32xf32>,
    return
  }
  func.func @transform_0(%arg0: i32) -> (i32, i32) {
    %c0_i32 = arith.constant 0 : i32
    %c0_i32_0 = arith.constant 0 : i32
    return %arg0, %c0_i32 : i32, i32
  }
  func.func @transform_1(%arg0: i32) -> (i32, i32) {
    %c0_i32 = arith.constant 0 : i32
    %c0_i32_0 = arith.constant 0 : i32
    %c0_i32_1 = arith.constant 0 : i32
    return %c0_i32, %c0_i32_0 : i32, i32
  }
  func.func @transform_2(%arg0: i32) -> (i32, i32) {
    %c0_i32 = arith.constant 0 : i32
    %c0_i32_0 = arith.constant 0 : i32
    %c0_i32_1 = arith.constant 0 : i32
    return %c0_i32, %c0_i32_0 : i32, i32
  }
  func.func @transform_3(%arg0: i32) -> (i32, i32) {
    %c0_i32 = arith.constant 0 : i32
    %c0_i32_0 = arith.constant 0 : i32
    %c0_i32_1 = arith.constant 0 : i32
    return %c0_i32, %c0_i32_0 : i32, i32
  }
  func.func @transform_4(%arg0: i32) -> (i32, i32) {
    %c0_i32 = arith.constant 0 : i32
    %c0_i32_0 = arith.constant 0 : i32
    %c0_i32_1 = arith.constant 0 : i32
    return %c0_i32, %c0_i32_0 : i32, i32
  }
  func.func @transform_5(%arg0: i32) -> (i32, i32) {
    %c0_i32 = arith.constant 0 : i32
    %c0_i32_0 = arith.constant 0 : i32
    return %arg0, %c0_i32 : i32, i32
  }
}

</mosaic_0001>

<llo_original>
// kernel: _lambda_.9
$region0: #{_lambda_.9}
  #allocation0 [shape = 'u32[]', space=smem, size = 0x4, offset = 0x4, fixed_abs, tag = 'smem constant byte address 0x4 - core index']
  #allocation1 [shape = 'u32[72,128]{1,0:T(1,128)}', space=vmem, size = 0x9000, scoped, tag = 'internal scratch']
  %s0 = inlined_call_operand.vmem [shape: f32[16,32], index: 0, kind: input, shape index: {}]
  %s1 = inlined_call_operand.vmem [shape: f32[1,32], index: 1, kind: input, shape index: {}]
  %s2 = inlined_call_operand.vmem [shape: f32[1,32], index: 2, kind: input, shape index: {}]
  %s3 = inlined_call_operand.vmem [shape: f32[16,32], index: 3, kind: output, shape index: {}]
  %s4 = sld [smem:[#allocation0]]
  $region22: #{_lambda_.9} parent=0
    _
  %s6 = ssub.s32 1, %s4
  %s7 = scalar_select 0, %s6, %s4
  // Predicated region
  $region2: #{_lambda_.9} parent=0 // pred_check
    _
  $region3: #{_lambda_.9} parent=0 // pred_check_branch
    %9 = sbr.rel (0) target = $region5
  $region4: #{_lambda_.9} parent=0 // pred_region
    _
  $region5: #{_lambda_.9} parent=0 // pred_fallthru
    _
  // Predicated region
  $region6: #{_lambda_.9} parent=0 // pred_check
    _
  $region7: #{_lambda_.9} parent=0 // pred_check_branch
    %11 = sbr.rel (0) target = $region9
  $region8: #{_lambda_.9} parent=0 // pred_region
    _
  $region9: #{_lambda_.9} parent=0 // pred_fallthru
    _
  // Predicated region
  $region10: #{_lambda_.9} parent=0 // pred_check
    _
  $region11: #{_lambda_.9} parent=0 // pred_check_branch
    %13 = sbr.rel (0) target = $region13
  $region12: #{_lambda_.9} parent=0 // pred_region
    _
  $region13: #{_lambda_.9} parent=0 // pred_fallthru
    _
  %v14 = vld [vmem:[%s0] sm:$0xff]
  %v15 = vld [vmem:[%s0 + $0x8] sm:$0xff]
  %vm16 = vcmask 261120
  %v17 = vsel %vm16, %v14, 0.0
  %v18 = vsel %vm16, %v15, 0.0
  %v19 = vadd.f32 %v17, %v18
  %v20 = vrot.slane %v19, 4
  %v21 = vadd.f32 %v19, %v20
  %v22 = vrot.slane %v21, 2
  %v23 = vadd.f32 %v21, %v22
  %v24 = vrot.slane %v23, 1
  %v25 = vadd.f32 %v23, %v24
  %v26 = vrcp.pop 16.0
  %v27 = vmul.f32 16.0, %v26
  %v28 = vsub.f32 1.0, %v27
  %v29 = vmul.f32 %v26, %v28
  %v30 = vadd.f32 %v26, %v29
  %vm31 = vweird.f32 %v26
  %v32 = vsel %vm31, %v26, %v30
  %v33 = vmul.f32 %v25, %v32
  %v34 = vsub.f32 %v14, %v33
  %v35 = vsub.f32 %v15, %v33
  %v36 = vmul.f32 %v34, %v34
  %v37 = vmul.f32 %v35, %v35
  %v38 = vsel %vm16, %v36, 0.0
  %v39 = vsel %vm16, %v37, 0.0
  %v40 = vadd.f32 %v38, %v39
  %v41 = vrot.slane %v40, 4
  %v42 = vadd.f32 %v40, %v41
  %v43 = vrot.slane %v42, 2
  %v44 = vadd.f32 %v42, %v43
  %v45 = vrot.slane %v44, 1
  %v46 = vadd.f32 %v44, %v45
  %v47 = vmul.f32 %v46, %v32
  %v48 = vld [vmem:[%s1] sm:$0x1]
  %v50 = vperm.slane %v48, 0
  %v52 = vmul.f32 %v50, %v34
  %v53 = vmul.f32 %v50, %v35
  %v54 = vadd.f32 %v47, 1e-05
  %v55 = vrsqrt.pop %v54
  %v56 = vmul.f32 %v55, %v54
  %v57 = vmul.f32 %v56, %v55
  %v58 = vmul.f32 0.5, %v57
  %v59 = vsub.f32 1.5, %v58
  %v60 = vmul.f32 %v55, %v59
  %vm61 = vweird.f32 %v54
  %vm62 = vweird.f32 %v55
  %vm63 = vmor %vm61, %vm62
  %v64 = vsel %vm63, %v55, %v60
  %v65 = vmul.f32 %v52, %v64
  %v66 = vmul.f32 %v53, %v64
  %v67 = vld [vmem:[%s2] sm:$0x1]
  %v69 = vperm.slane %v67, 0
  %v71 = vadd.f32 %v65, %v69
  %v72 = vadd.f32 %v66, %v69
  %73 = vst.msk [vmem:[%s3] sm:$0xff] %vm16, %v71
  %74 = vst.msk [vmem:[%s3 + $0x8] sm:$0xff] %vm16, %v72
  // Predicated region
  $region14: #{_lambda_.9} parent=0 // pred_check
    _
  $region15: #{_lambda_.9} parent=0 // pred_check_branch
    %76 = sbr.rel (0) target = $region17
  $region16: #{_lambda_.9} parent=0 // pred_region
    _
  $region17: #{_lambda_.9} parent=0 // pred_fallthru
    _
  // Predicated region
  $region18: #{_lambda_.9} parent=0 // pred_check
    _
  $region19: #{_lambda_.9} parent=0 // pred_check_branch
    %78 = sbr.rel (0) target = $region21
  $region20: #{_lambda_.9} parent=0 // pred_region
    _
  $region21: #{_lambda_.9} parent=0 // pred_fallthru
    _

// kernel: _lambda_.10
$region0: #{_lambda_.10}
  #allocation0 [shape = 'u32[]', space=smem, size = 0x4, offset = 0x4, fixed_abs, tag = 'smem constant byte address 0x4 - core index']
  #allocation1 [shape = 'u32[72,128]{1,0:T(1,128)}', space=vmem, size = 0x9000, scoped, tag = 'internal scratch']
  %s0 = inlined_call_operand.vmem [shape: f32[16,32], index: 0, kind: input, shape index: {}]
  %s1 = inlined_call_operand.vmem [shape: bf16[32,64], index: 1, kind: input, shape index: {}]
  %s2 = inlined_call_operand.hbm [shape: f32[1,64], index: 2, kind: input, shape index: {}]
  %s3 = inlined_call_operand.vmem [shape: bf16[64,32], index: 3, kind: input, shape index: {}]
  %s4 = inlined_call_operand.vmem [shape: f32[1,32], index: 4, kind: input, shape index: {}]
  %s5 = inlined_call_operand.vmem [shape: f32[16,32], index: 5, kind: output, shape index: {}]
  %s6 = sld [smem:[#allocation0]]
  $region34: #{_lambda_.10} parent=0
    _
  %s8 = ssub.s32 1, %s6
  %s9 = scalar_select 0, %s8, %s6
  $region1: #{_lambda_.10} parent=0
    #allocation2 [shape = 'u8[512]{0}', space=vmem, size = 0x400, scoped, tag = 'input window, operand 2, single buffered']
    #allocation3 [shape = 's32[1]{0}', space=sflag, size = 0x4, scoped, tag = 'scoped memory for _lambda_.10']
    %10 = vsyncpa [#allocation3], 0
    // Predicated region
    $region2: #{_lambda_.10} parent=1 // pred_check
      _
    $region3: #{_lambda_.10} parent=1 // pred_check_branch
      %12 = sbr.rel (0) target = $region5
    $region4: #{_lambda_.10} parent=1 // pred_region
      _
    $region5: #{_lambda_.10} parent=1 // pred_fallthru
      _
    // Predicated region
    $region6: #{_lambda_.10} parent=1 // pred_check
      _
    $region7: #{_lambda_.10} parent=1 // pred_check_branch
      %14 = sbr.rel (0) target = $region9
    $region8: #{_lambda_.10} parent=1 // pred_region
      _
    $region9: #{_lambda_.10} parent=1 // pred_fallthru
      _
    // Predicated region
    $region10: #{_lambda_.10} parent=1 // pred_check
      _
    $region11: #{_lambda_.10} parent=1 // pred_check_branch
      %16 = sbr.rel (0) target = $region13
    $region12: #{_lambda_.10} parent=1 // pred_region
      %18 = vsyncadd [#allocation3], 0
      %s20 = sshll.u32 %s2, 4
      %s21 = int_to_ptr.hbm [resolvable:$true] %s20
      %s22 = sshll.u32 [#allocation2], 4
      %s23 = int_to_ptr.vmem [resolvable:$true] %s22
      %25 = dma.hbm_to_vmem [thread:$0]  %s21, 16, %s23, [#allocation3]
    $region13: #{_lambda_.10} parent=1 // pred_fallthru
      _
    // Predicated region
    $region14: #{_lambda_.10} parent=1 // pred_check
      _
    $region15: #{_lambda_.10} parent=1 // pred_check_branch
      %27 = sbr.rel (0) target = $region17
    $region16: #{_lambda_.10} parent=1 // pred_region
      _
    $region17: #{_lambda_.10} parent=1 // pred_fallthru
      _
    // Predicated region
    $region18: #{_lambda_.10} parent=1 // pred_check
      _
    $region19: #{_lambda_.10} parent=1 // pred_check_branch
      %29 = sbr.rel (0) target = $region21
    $region20: #{_lambda_.10} parent=1 // pred_region
      _
    $region21: #{_lambda_.10} parent=1 // pred_fallthru
      _
    // Predicated region
    $region22: #{_lambda_.10} parent=1 // pred_check
      _
    $region23: #{_lambda_.10} parent=1 // pred_check_branch
      %31 = sbr.rel (0) target = $region25
    $region24: #{_lambda_.10} parent=1 // pred_region
      %33 = dma.done [#allocation3], 16
    $region25: #{_lambda_.10} parent=1 // pred_fallthru
      _
    %v35 = vld [vmem:[%s0] sm:$0xff]
    %v36 = vld [vmem:[%s0 + $0x8] sm:$0xff]
    %v37 = vpack.c.bf16 %v36, %v35
    %v38 = vld [vmem:[%s1] sm:$0xf]
    %v39 = vld [vmem:[%s1 + $0x4] sm:$0xf]
    %v40 = vld [vmem:[%s1 + $0x8] sm:$0xf]
    %v41 = vld [vmem:[%s1 + $0xc] sm:$0xf]
    %v42 = vld [vmem:[#allocation2] sm:$0x1]
    %v44 = vperm.slane %v42, 0
    %v50 = vunpack.c.l.b16 %v38
    %v51 = vunpack.c.l.b16 %v39
    %v52 = vunpack.c.l.b16 %v40
    %v53 = vunpack.c.l.b16 %v41
    %v54 = vpack.c.b16 %v51, %v50
    %v55 = vpack.c.b16 %v53, %v52
    %vm58 = vcmask 261120
    %v60 = vsel %vm58, %v37, 0
    %62 = vmatpush.bf16.msra.mxu0 0
    %63 = vmatpush.bf16.msra.mxu0 0
    %64 = vmatpush.bf16.msra.mxu0 0
    %65 = vmatpush.bf16.msra.mxu0 0
    %66 = vmatpush.bf16.msra.mxu0 0
    %67 = vmatpush.bf16.msra.mxu0 0
    %68 = vmatpush.bf16.msra.mxu0 %v55
    %69 = vmatpush.bf16.msra.mxu0 %v54
    %70 = vmatmul.bf16.gmra.mxu0 %v60
    %v71 = vpop.f32.mrf.mxu0
    %v72 = vadd.f32 %v44, %v71
    %v73 = vpop.f32.mrf.mxu0
    %v74 = vadd.f32 %v44, %v73
    %75 = vdwg.mxu0
    %v76 = vmax.f32 %v72, 0.0
    %v77 = vmax.f32 %v74, 0.0
    %v78 = vpack.c.bf16 %v77, %v76
    %v79 = vld [vmem:[%s3] sm:$0xf]
    %v80 = vld [vmem:[%s3 + $0x4] sm:$0xf]
    %v81 = vld [vmem:[%s3 + $0x8] sm:$0xf]
    %v82 = vld [vmem:[%s3 + $0xc] sm:$0xf]
    %v83 = vld [vmem:[%s3 + $0x10] sm:$0xf]
    %v84 = vld [vmem:[%s3 + $0x14] sm:$0xf]
    %v85 = vld [vmem:[%s3 + $0x18] sm:$0xf]
    %v86 = vld [vmem:[%s3 + $0x1c] sm:$0xf]
    %v87 = vld [vmem:[%s4] sm:$0x1]
    %v89 = vperm.slane %v87, 0
    %v99 = vunpack.c.l.b16 %v79
    %v100 = vunpack.c.l.b16 %v80
    %v101 = vunpack.c.l.b16 %v81
    %v102 = vunpack.c.l.b16 %v82
    %v103 = vunpack.c.l.b16 %v83
    %v104 = vunpack.c.l.b16 %v84
    %v105 = vunpack.c.l.b16 %v85
    %v106 = vunpack.c.l.b16 %v86
    %v107 = vpack.c.b16 %v100, %v99
    %v108 = vpack.c.b16 %v102, %v101
    %v109 = vpack.c.b16 %v104, %v103
    %v110 = vpack.c.b16 %v106, %v105
    %vm115 = vcmask 523264
    %v117 = vsel %vm115, %v78, 0
    %119 = vmatpush.bf16.msra.mxu0 0
    %120 = vmatpush.bf16.msra.mxu0 0
    %121 = vmatpush.bf16.msra.mxu0 0
    %122 = vmatpush.bf16.msra.mxu0 0
    %123 = vmatpush.bf16.msra.mxu0 %v110
    %124 = vmatpush.bf16.msra.mxu0 %v109
    %125 = vmatpush.bf16.msra.mxu0 %v108
    %126 = vmatpush.bf16.msra.mxu0 %v107
    %127 = vmatmul.bf16.gmra.mxu0 %v117
    %v128 = vpop.f32.mrf.mxu0
    %v129 = vadd.f32 %v89, %v128
    %v130 = vpop.f32.mrf.mxu0
    %v131 = vadd.f32 %v89, %v130
    %132 = vdwg.mxu0
    %v133 = vadd.f32 %v35, %v129
    %v134 = vadd.f32 %v36, %v131
    %135 = vst.msk [vmem:[%s5] sm:$0xff] %vm58, %v133
    %136 = vst.msk [vmem:[%s5 + $0x8] sm:$0xff] %vm58, %v134
    // Predicated region
    $region26: #{_lambda_.10} parent=1 // pred_check
      _
    $region27: #{_lambda_.10} parent=1 // pred_check_branch
      %138 = sbr.rel (0) target = $region29
    $region28: #{_lambda_.10} parent=1 // pred_region
      _
    $region29: #{_lambda_.10} parent=1 // pred_fallthru
      _
    // Predicated region
    $region30: #{_lambda_.10} parent=1 // pred_check
      _
    $region31: #{_lambda_.10} parent=1 // pred_check_branch
      %140 = sbr.rel (0) target = $region33
    $region32: #{_lambda_.10} parent=1 // pred_region
      _
    $region33: #{_lambda_.10} parent=1 // pred_fallthru
      _
    %141 = vsyncpa [#allocation3], 1

// kernel: _lambda_.8
$region0: #{_lambda_.8}
  #allocation0 [shape = 'u32[]', space=smem, size = 0x4, offset = 0x4, fixed_abs, tag = 'smem constant byte address 0x4 - core index']
  #allocation1 [shape = 'u32[72,128]{1,0:T(1,128)}', space=vmem, size = 0x9000, scoped, tag = 'internal scratch']
  %s0 = inlined_call_operand.vmem [shape: f32[2,8,32], index: 0, kind: input, shape index: {}]
  %s1 = inlined_call_operand.vmem [shape: bf16[2,64,32], index: 1, kind: input, shape index: {}]
  %s2 = inlined_call_operand.hbm [shape: bf16[32,32], index: 2, kind: input, shape index: {}]
  %s3 = inlined_call_operand.hbm [shape: bf16[32,32], index: 3, kind: input, shape index: {}]
  %s4 = inlined_call_operand.hbm [shape: bf16[32,32], index: 4, kind: input, shape index: {}]
  %s5 = inlined_call_operand.hbm [shape: bf16[32,32], index: 5, kind: input, shape index: {}]
  %s6 = inlined_call_operand.vmem [shape: bf16[32,4], index: 6, kind: input, shape index: {}]
  %s7 = inlined_call_operand.vmem [shape: f32[1,4], index: 7, kind: input, shape index: {}]
  %s8 = inlined_call_operand.vmem [shape: f32[2,8,32], index: 8, kind: output, shape index: {}]
  %s9 = sld [smem:[#allocation0]]
  $region81: #{_lambda_.8} parent=0
    _
  %s11 = ssub.s32 1, %s9
  %s12 = scalar_select 0, %s11, %s9
  $region1: #{_lambda_.8} parent=0
    #allocation2 [shape = 'u8[8192]{0}', space=vmem, size = 0x2000, scoped, tag = 'input window, operand 2, single buffered']
    #allocation3 [shape = 's32[2]{0}', space=sflag, size = 0x8, scoped, tag = 'scoped memory for _lambda_.8']
    #allocation4 [shape = 'u8[8192]{0}', space=vmem, size = 0x2000, scoped, tag = 'input window, operand 3, single buffered']
    #allocation5 [shape = 's32[1]{0}', space=sflag, size = 0x4, scoped, tag = 'scoped memory for _lambda_.8']
    #allocation6 [shape = 'u8[8192]{0}', space=vmem, size = 0x2000, scoped, tag = 'input window, operand 4, single buffered']
    #allocation7 [shape = 'u8[8192]{0}', space=vmem, size = 0x2000, scoped, tag = 'input window, operand 5, single buffered']
    #allocation8 [shape = 's32[1]{0}', space=sflag, size = 0x4, scoped, tag = 'scoped memory for _lambda_.8']
    %13 = vsyncpa [#allocation3], 0
    %14 = vsyncpa [#allocation5], 0
    %15 = vsyncpa [#allocation8], 0
    loop: start=0, step=1, limit=4
    $region2: #{_lambda_.8} parent=1 // loop_pre_header
      _
    $region3: #{_lambda_.8} parent=1 // loop_header
      %s17 = sphi 0, %s21
      %p18 = scmp.ge.s32.totalorder %s17, 4
      %s27 = sphi 0, %s29
      %s30 = sphi 0, %s27
      %s31 = sphi 0, %s30
      %s47 = sphi 0, %s31
      %s53 = sphi 0, %s55
      %s56 = sphi 0, %s53
      %s57 = sphi 0, %s56
      %s73 = sphi 0, %s57
      %s77 = sphi 0, %s77
      %s79 = sphi 0, %s77
      %s80 = sphi 0, %s79
      %s94 = sphi 0, %s80
      %s98 = sphi 0, %s98
      %s100 = sphi 0, %s98
      %s101 = sphi 0, %s100
      %s115 = sphi 0, %s101
      %s119 = sphi 0, %s119
      %s121 = sphi 0, %s119
      %s122 = sphi 0, %s121
      %s136 = sphi 0, %s122
      %s140 = sphi 0, %s140
      %s142 = sphi 0, %s140
      %s143 = sphi 0, %s142
      %s157 = sphi 0, %s143
      %s161 = sphi 0, %s161
      %s163 = sphi 0, %s161
      %s164 = sphi 0, %s163
      %s178 = sphi 0, %s164
      %s182 = sphi 0, %s182
      %s184 = sphi 0, %s182
      %s185 = sphi 0, %s184
      %s199 = sphi 0, %s185
      %s205 = sphi 0, %s207
      %s208 = sphi 0, %s205
      %s209 = sphi 0, %s208
      %s225 = sphi 0, %s209
    $region4: #{_lambda_.8} parent=1 // loop_header_branch
      %20 = sbr.rel (%p18) target = $region8
    $region5: #{_lambda_.8} parent=1 // loop_body
      %s22 = ssub.s32 %s17, 1
      %s23 = ssub.s32 %s17, 2
      %s24 = sadd.s32 %s17, 1
      %s25 = ssub.s32 %s17, %s24
      %p26 = scmp.eq.s32.totalorder %s25, 0
      %s28 = sadd.s32 %s27, 1
      %s29 = scalar_select %p26, %s27, %s28
      %p32 = pneg %p26
      %p33 = scmp.eq.s32.totalorder %s17, 1
      %p34 = por %p32, %p33
      %p35 = scmp.ne.s32.totalorder %s27, %s30
      %p36 = scmp.eq.s32.totalorder %s17, 0
      %p37 = por %p35, %p36
      %p38 = scmp.ne.s32.totalorder %s27, %s30
      %p39 = scmp.eq.s32.totalorder %s22, 1
      %p40 = por %p38, %p39
      %p41 = scmp.ne.s32.totalorder %s30, %s31
      %p42 = scmp.eq.s32.totalorder %s22, 0
      %p43 = por %p41, %p42
      %p44 = scmp.ne.s32.totalorder %s30, %s31
      %p45 = scmp.eq.s32.totalorder %s23, 1
      %p46 = por %p44, %p45
      %p48 = scmp.ne.s32.totalorder %s31, %s47
      %p49 = scmp.eq.s32.totalorder %s23, 0
      %p50 = por %p48, %p49
      %s51 = ssub.s32 %s17, %s24
      %p52 = scmp.eq.s32.totalorder %s51, 0
      %s54 = sadd.s32 %s53, 1
      %s55 = scalar_select %p52, %s53, %s54
      %p58 = pneg %p52
      %p59 = scmp.eq.s32.totalorder %s17, 1
      %p60 = por %p58, %p59
      %p61 = scmp.ne.s32.totalorder %s53, %s56
      %p62 = scmp.eq.s32.totalorder %s17, 0
      %p63 = por %p61, %p62
      %p64 = scmp.ne.s32.totalorder %s53, %s56
      %p65 = scmp.eq.s32.totalorder %s22, 1
      %p66 = por %p64, %p65
      %p67 = scmp.ne.s32.totalorder %s56, %s57
      %p68 = scmp.eq.s32.totalorder %s22, 0
      %p69 = por %p67, %p68
      %p70 = scmp.ne.s32.totalorder %s56, %s57
      %p71 = scmp.eq.s32.totalorder %s23, 1
      %p72 = por %p70, %p71
      %p74 = scmp.ne.s32.totalorder %s57, %s73
      %p75 = scmp.eq.s32.totalorder %s23, 0
      %p76 = por %p74, %p75
      %s78 = sadd.s32 %s77, 1
      %p81 = scmp.eq.s32.totalorder %s17, 1
      %p82 = scmp.ne.s32.totalorder %s77, %s79
      %p83 = scmp.eq.s32.totalorder %s17, 0
      %p84 = por %p82, %p83
      %p85 = scmp.ne.s32.totalorder %s77, %s79
      %p86 = scmp.eq.s32.totalorder %s22, 1
      %p87 = por %p85, %p86
      %p88 = scmp.ne.s32.totalorder %s79, %s80
      %p89 = scmp.eq.s32.totalorder %s22, 0
      %p90 = por %p88, %p89
      %p91 = scmp.ne.s32.totalorder %s79, %s80
      %p92 = scmp.eq.s32.totalorder %s23, 1
      %p93 = por %p91, %p92
      %p95 = scmp.ne.s32.totalorder %s80, %s94
      %p96 = scmp.eq.s32.totalorder %s23, 0
      %p97 = por %p95, %p96
      %s99 = sadd.s32 %s98, 1
      %p102 = scmp.eq.s32.totalorder %s17, 1
      %p103 = scmp.ne.s32.totalorder %s98, %s100
      %p104 = scmp.eq.s32.totalorder %s17, 0
      %p105 = por %p103, %p104
      %p106 = scmp.ne.s32.totalorder %s98, %s100
      %p107 = scmp.eq.s32.totalorder %s22, 1
      %p108 = por %p106, %p107
      %p109 = scmp.ne.s32.totalorder %s100, %s101
      %p110 = scmp.eq.s32.totalorder %s22, 0
      %p111 = por %p109, %p110
      %p112 = scmp.ne.s32.totalorder %s100, %s101
      %p113 = scmp.eq.s32.totalorder %s23, 1
      %p114 = por %p112, %p113
      %p116 = scmp.ne.s32.totalorder %s101, %s115
      %p117 = scmp.eq.s32.totalorder %s23, 0
      %p118 = por %p116, %p117
      %s120 = sadd.s32 %s119, 1
      %p123 = scmp.eq.s32.totalorder %s17, 1
      %p124 = scmp.ne.s32.totalorder %s119, %s121
      %p125 = scmp.eq.s32.totalorder %s17, 0
      %p126 = por %p124, %p125
      %p127 = scmp.ne.s32.totalorder %s119, %s121
      %p128 = scmp.eq.s32.totalorder %s22, 1
      %p129 = por %p127, %p128
      %p130 = scmp.ne.s32.totalorder %s121, %s122
      %p131 = scmp.eq.s32.totalorder %s22, 0
      %p132 = por %p130, %p131
      %p133 = scmp.ne.s32.totalorder %s121, %s122
      %p134 = scmp.eq.s32.totalorder %s23, 1
      %p135 = por %p133, %p134
      %p137 = scmp.ne.s32.totalorder %s122, %s136
      %p138 = scmp.eq.s32.totalorder %s23, 0
      %p139 = por %p137, %p138
      %s141 = sadd.s32 %s140, 1
      %p144 = scmp.eq.s32.totalorder %s17, 1
      %p145 = scmp.ne.s32.totalorder %s140, %s142
      %p146 = scmp.eq.s32.totalorder %s17, 0
      %p147 = por %p145, %p146
      %p148 = scmp.ne.s32.totalorder %s140, %s142
      %p149 = scmp.eq.s32.totalorder %s22, 1
      %p150 = por %p148, %p149
      %p151 = scmp.ne.s32.totalorder %s142, %s143
      %p152 = scmp.eq.s32.totalorder %s22, 0
      %p153 = por %p151, %p152
      %p154 = scmp.ne.s32.totalorder %s142, %s143
      %p155 = scmp.eq.s32.totalorder %s23, 1
      %p156 = por %p154, %p155
      %p158 = scmp.ne.s32.totalorder %s143, %s157
      %p159 = scmp.eq.s32.totalorder %s23, 0
      %p160 = por %p158, %p159
      %s162 = sadd.s32 %s161, 1
      %p165 = scmp.eq.s32.totalorder %s17, 1
      %p166 = scmp.ne.s32.totalorder %s161, %s163
      %p167 = scmp.eq.s32.totalorder %s17, 0
      %p168 = por %p166, %p167
      %p169 = scmp.ne.s32.totalorder %s161, %s163
      %p170 = scmp.eq.s32.totalorder %s22, 1
      %p171 = por %p169, %p170
      %p172 = scmp.ne.s32.totalorder %s163, %s164
      %p173 = scmp.eq.s32.totalorder %s22, 0
      %p174 = por %p172, %p173
      %p175 = scmp.ne.s32.totalorder %s163, %s164
      %p176 = scmp.eq.s32.totalorder %s23, 1
      %p177 = por %p175, %p176
      %p179 = scmp.ne.s32.totalorder %s164, %s178
      %p180 = scmp.eq.s32.totalorder %s23, 0
      %p181 = por %p179, %p180
      %s183 = sadd.s32 %s182, 1
      %p186 = scmp.eq.s32.totalorder %s17, 1
      %p187 = scmp.ne.s32.totalorder %s182, %s184
      %p188 = scmp.eq.s32.totalorder %s17, 0
      %p189 = por %p187, %p188
      %p190 = scmp.ne.s32.totalorder %s182, %s184
      %p191 = scmp.eq.s32.totalorder %s22, 1
      %p192 = por %p190, %p191
      %p193 = scmp.ne.s32.totalorder %s184, %s185
      %p194 = scmp.eq.s32.totalorder %s22, 0
      %p195 = por %p193, %p194
      %p196 = scmp.ne.s32.totalorder %s184, %s185
      %p197 = scmp.eq.s32.totalorder %s23, 1
      %p198 = por %p196, %p197
      %p200 = scmp.ne.s32.totalorder %s185, %s199
      %p201 = scmp.eq.s32.totalorder %s23, 0
      %p202 = por %p200, %p201
      %s203 = ssub.s32 %s17, %s24
      %p204 = scmp.eq.s32.totalorder %s203, 0
      %s206 = sadd.s32 %s205, 1
      %s207 = scalar_select %p204, %s205, %s206
      %p210 = pneg %p204
      %p211 = scmp.eq.s32.totalorder %s17, 1
      %p212 = por %p210, %p211
      %p213 = scmp.ne.s32.totalorder %s205, %s208
      %p214 = scmp.eq.s32.totalorder %s17, 0
      %p215 = por %p213, %p214
      %p216 = scmp.ne.s32.totalorder %s205, %s208
      %p217 = scmp.eq.s32.totalorder %s22, 1
      %p218 = por %p216, %p217
      %p219 = scmp.ne.s32.totalorder %s208, %s209
      %p220 = scmp.eq.s32.totalorder %s22, 0
      %p221 = por %p219, %p220
      %p222 = scmp.ne.s32.totalorder %s208, %s209
      %p223 = scmp.eq.s32.totalorder %s23, 1
      %p224 = por %p222, %p223
      %p226 = scmp.ne.s32.totalorder %s209, %s225
      %p227 = scmp.eq.s32.totalorder %s23, 0
      %p228 = por %p226, %p227
      %p229 = scmp.le.s32.totalorder 1, %s17
      %p230 = scmp.lt.s32.totalorder %s17, 3
      %p231 = pnand %p229, %p230
      %p232 = pneg %p231
      // Predicated region
      $region9: #{_lambda_.8} parent=5 // pred_check
        _
      $region10: #{_lambda_.8} parent=5 // pred_check_branch
        %234 = sbr.rel (%p231) target = $region12
      $region11: #{_lambda_.8} parent=5 // pred_region
        %s235 = ssub.s32 %s17, 1
        // Predicated region
        $region13: #{_lambda_.8} parent=11 // pred_check
          %p236 = pneg %p90
        $region14: #{_lambda_.8} parent=11 // pred_check_branch
          %238 = sbr.rel (%p236) target = $region16
        $region15: #{_lambda_.8} parent=11 // pred_region
          %240 = vsyncadd [#allocation3], 0
          %s241 = sshll.u32 %s2, 4
          %s242 = int_to_ptr.hbm [resolvable:$true] %s241
          %s243 = sshll.u32 [#allocation2], 4
          %s244 = int_to_ptr.vmem [resolvable:$true] %s243
          %249 = dma.hbm_to_vmem [thread:$0]  %s242, 256, %s244, [#allocation3], 64, 64, 4
        $region16: #{_lambda_.8} parent=11 // pred_fallthru
          _
        // Predicated region
        $region17: #{_lambda_.8} parent=11 // pred_check
          %p250 = pneg %p111
        $region18: #{_lambda_.8} parent=11 // pred_check_branch
          %252 = sbr.rel (%p250) target = $region20
        $region19: #{_lambda_.8} parent=11 // pred_region
          %254 = vsyncadd [#allocation5], 0
          %s255 = sshll.u32 %s3, 4
          %s256 = int_to_ptr.hbm [resolvable:$true] %s255
          %s257 = sshll.u32 [#allocation4], 4
          %s258 = int_to_ptr.vmem [resolvable:$true] %s257
          %263 = dma.hbm_to_vmem [thread:$0]  %s256, 256, %s258, [#allocation5], 64, 64, 4
        $region20: #{_lambda_.8} parent=11 // pred_fallthru
          _
        // Predicated region
        $region21: #{_lambda_.8} parent=11 // pred_check
          %p264 = pneg %p132
        $region22: #{_lambda_.8} parent=11 // pred_check_branch
          %266 = sbr.rel (%p264) target = $region24
        $region23: #{_lambda_.8} parent=11 // pred_region
          %268 = vsyncadd [#allocation5], 0
          %s269 = sshll.u32 %s4, 4
          %s270 = int_to_ptr.hbm [resolvable:$true] %s269
          %s271 = sshll.u32 [#allocation6], 4
          %s272 = int_to_ptr.vmem [resolvable:$true] %s271
          %277 = dma.hbm_to_vmem [thread:$0]  %s270, 256, %s272, [#allocation5], 64, 64, 4
        $region24: #{_lambda_.8} parent=11 // pred_fallthru
          _
        // Predicated region
        $region25: #{_lambda_.8} parent=11 // pred_check
          %p278 = pneg %p153
        $region26: #{_lambda_.8} parent=11 // pred_check_branch
          %280 = sbr.rel (%p278) target = $region28
        $region27: #{_lambda_.8} parent=11 // pred_region
          %282 = vsyncadd [#allocation8], 0
          %s283 = sshll.u32 %s5, 4
          %s284 = int_to_ptr.hbm [resolvable:$true] %s283
          %s285 = sshll.u32 [#allocation7], 4
          %s286 = int_to_ptr.vmem [resolvable:$true] %s285
          %291 = dma.hbm_to_vmem [thread:$0]  %s284, 256, %s286, [#allocation8], 64, 64, 4
        $region28: #{_lambda_.8} parent=11 // pred_fallthru
          _
        // Predicated region
        $region29: #{_lambda_.8} parent=11 // pred_check
          %p292 = pneg %p174
        $region30: #{_lambda_.8} parent=11 // pred_check_branch
          %294 = sbr.rel (%p292) target = $region32
        $region31: #{_lambda_.8} parent=11 // pred_region
          _
        $region32: #{_lambda_.8} parent=11 // pred_fallthru
          _
        // Predicated region
        $region33: #{_lambda_.8} parent=11 // pred_check
          %p295 = pneg %p195
        $region34: #{_lambda_.8} parent=11 // pred_check_branch
          %297 = sbr.rel (%p295) target = $region36
        $region35: #{_lambda_.8} parent=11 // pred_region
          _
        $region36: #{_lambda_.8} parent=11 // pred_fallthru
          _
      $region12: #{_lambda_.8} parent=5 // pred_fallthru
        _
      %p298 = scmp.lt.s32.totalorder %s17, 2
      // Predicated region
      $region37: #{_lambda_.8} parent=5 // pred_check
        %p299 = pneg %p298
      $region38: #{_lambda_.8} parent=5 // pred_check_branch
        %301 = sbr.rel (%p299) target = $region40
      $region39: #{_lambda_.8} parent=5 // pred_region
        // Predicated region
        $region41: #{_lambda_.8} parent=39 // pred_check
          %p302 = pneg %p37
        $region42: #{_lambda_.8} parent=39 // pred_check_branch
          %304 = sbr.rel (%p302) target = $region44
        $region43: #{_lambda_.8} parent=39 // pred_region
          %p305 = scmp.lt.s32.totalorder %s17, 1
          %s306 = scalar_select %p305, %s17, 1
          %s307 = smul.addr %s306, 8
          %s308 = scalar_lea.vmem %s0, %s307
        $region44: #{_lambda_.8} parent=39 // pred_fallthru
          _
        // Predicated region
        $region45: #{_lambda_.8} parent=39 // pred_check
          %p309 = pneg %p63
        $region46: #{_lambda_.8} parent=39 // pred_check_branch
          %311 = sbr.rel (%p309) target = $region48
        $region47: #{_lambda_.8} parent=39 // pred_region
          %p312 = scmp.lt.s32.totalorder %s17, 1
          %s313 = scalar_select %p312, %s17, 1
          %s314 = smul.addr %s313, 8
          %s315 = smul.addr %s314, 4
          %s316 = scalar_lea.vmem %s1, %s315
        $region48: #{_lambda_.8} parent=39 // pred_fallthru
          _
      $region40: #{_lambda_.8} parent=5 // pred_fallthru
        _
      %p317 = scmp.le.s32.totalorder 1, %s17
      %p318 = scmp.lt.s32.totalorder %s17, 3
      %p319 = pnand %p317, %p318
      %p320 = pneg %p319
      // Predicated region
      $region49: #{_lambda_.8} parent=5 // pred_check
        _
      $region50: #{_lambda_.8} parent=5 // pred_check_branch
        %322 = sbr.rel (%p319) target = $region52
      $region51: #{_lambda_.8} parent=5 // pred_region
        %s323 = ssub.s32 %s17, 1
        // Predicated region
        $region53: #{_lambda_.8} parent=51 // pred_check
          %p324 = pneg %p90
        $region54: #{_lambda_.8} parent=51 // pred_check_branch
          %326 = sbr.rel (%p324) target = $region56
        $region55: #{_lambda_.8} parent=51 // pred_region
          %328 = dma.done [#allocation3], 256
        $region56: #{_lambda_.8} parent=51 // pred_fallthru
          _
        // Predicated region
        $region57: #{_lambda_.8} parent=51 // pred_check
          %p329 = pneg %p111
        $region58: #{_lambda_.8} parent=51 // pred_check_branch
          %331 = sbr.rel (%p329) target = $region60
        $region59: #{_lambda_.8} parent=51 // pred_region
          %333 = dma.done [#allocation5], 256
        $region60: #{_lambda_.8} parent=51 // pred_fallthru
          _
        // Predicated region
        $region61: #{_lambda_.8} parent=51 // pred_check
          %p334 = pneg %p132
        $region62: #{_lambda_.8} parent=51 // pred_check_branch
          %336 = sbr.rel (%p334) target = $region64
        $region63: #{_lambda_.8} parent=51 // pred_region
          %338 = dma.done [#allocation5], 256
        $region64: #{_lambda_.8} parent=51 // pred_fallthru
          _
        // Predicated region
        $region65: #{_lambda_.8} parent=51 // pred_check
          %p339 = pneg %p153
        $region66: #{_lambda_.8} parent=51 // pred_check_branch
          %341 = sbr.rel (%p339) target = $region68
        $region67: #{_lambda_.8} parent=51 // pred_region
          %343 = dma.done [#allocation8], 256
        $region68: #{_lambda_.8} parent=51 // pred_fallthru
          _
        %p344 = scmp.lt.s32.totalorder %s22, 1
        %s345 = scalar_select %p344, %s22, 1
        %s346 = smul.addr %s345, 8
        %s347 = scalar_lea.vmem %s0, %s346
        %p348 = pneg %p43
        %p349 = pneg %p40
        %p350 = scmp.lt.s32.totalorder %s22, 1
        %s351 = scalar_select %p350, %s22, 1
        %s352 = smul.addr %s351, 8
        %s353 = smul.addr %s352, 4
        %s354 = scalar_lea.vmem %s1, %s353
        %p355 = pneg %p69
        %p356 = pneg %p66
        %p357 = pneg %p90
        %p358 = pneg %p87
        %p359 = pneg %p111
        %p360 = pneg %p108
        %p361 = pneg %p132
        %p362 = pneg %p129
        %p363 = pneg %p153
        %p364 = pneg %p150
        %p365 = pneg %p174
        %p366 = pneg %p171
        %p367 = pneg %p195
        %p368 = pneg %p192
        %p369 = pneg %p221
        %p370 = pneg %p218
        %p371 = scmp.lt.s32.totalorder %s22, 1
        %s372 = scalar_select %p371, %s22, 1
        %s373 = smul.addr %s372, 8
        %s374 = scalar_lea.vmem %s8, %s373
        %p375 = scmp.lt.s32.totalorder %s22, 1
        %s376 = scalar_select %p375, %s22, 1
        %s377 = smul.addr %s376, 8
        %s378 = scalar_lea.vmem %s0, %s377
        %p379 = scmp.lt.s32.totalorder %s22, 1
        %s380 = scalar_select %p379, %s22, 1
        %s381 = smul.addr %s380, 8
        %s382 = smul.addr %s381, 4
        %s383 = scalar_lea.vmem %s1, %s382
        %p384 = scmp.lt.s32.totalorder %s22, 1
        %s385 = scalar_select %p384, %s22, 1
        %s386 = smul.addr %s385, 8
        %s387 = scalar_lea.vmem %s8, %s386
        %v389 = vld [vmem:[%s378] sm:$0xff]
        %v390 = vpack.c.bf16 %v389, %v389
        %v391 = vld [vmem:[#allocation2] sm:$0xf]
        %v392 = vld [vmem:[#allocation2 + $0x4] sm:$0xf]
        %v393 = vld [vmem:[#allocation2 + $0x8] sm:$0xf]
        %v394 = vld [vmem:[#allocation2 + $0xc] sm:$0xf]
        %v399 = vunpack.c.l.b16 %v391
        %v400 = vunpack.c.l.b16 %v392
        %v401 = vunpack.c.l.b16 %v393
        %v402 = vunpack.c.l.b16 %v394
        %v403 = vpack.c.b16 %v400, %v399
        %v404 = vpack.c.b16 %v402, %v401
        %vm407 = vcmask 261120
        %v409 = vsel %vm407, %v390, 0
        %411 = vmatpush.bf16.msra.mxu0 0
        %412 = vmatpush.bf16.msra.mxu0 0
        %413 = vmatpush.bf16.msra.mxu0 0
        %414 = vmatpush.bf16.msra.mxu0 0
        %415 = vmatpush.bf16.msra.mxu0 0
        %416 = vmatpush.bf16.msra.mxu0 0
        %417 = vmatpush.bf16.msra.mxu0 %v404
        %418 = vmatpush.bf16.msra.mxu0 %v403
        %419 = vmatmul.bf16.gmra.mxu0 %v409
        %v420 = vpop.f32.mrf.mxu0
        %v421 = vadd.f32 0.0, %v420
        %v422 = vpop.f32.mrf.mxu0
        %423 = vdwg.mxu0
        %v424 = vld [vmem:[#allocation4] sm:$0xf]
        %v425 = vld [vmem:[#allocation4 + $0x4] sm:$0xf]
        %v426 = vld [vmem:[#allocation4 + $0x8] sm:$0xf]
        %v427 = vld [vmem:[#allocation4 + $0xc] sm:$0xf]
        %v432 = vunpack.c.l.b16 %v424
        %v433 = vunpack.c.l.b16 %v425
        %v434 = vunpack.c.l.b16 %v426
        %v435 = vunpack.c.l.b16 %v427
        %v436 = vpack.c.b16 %v433, %v432
        %v437 = vpack.c.b16 %v435, %v434
        %440 = vmatpush.bf16.msra.mxu0 0
        %441 = vmatpush.bf16.msra.mxu0 0
        %442 = vmatpush.bf16.msra.mxu0 0
        %443 = vmatpush.bf16.msra.mxu0 0
        %444 = vmatpush.bf16.msra.mxu0 0
        %445 = vmatpush.bf16.msra.mxu0 0
        %446 = vmatpush.bf16.msra.mxu0 %v437
        %447 = vmatpush.bf16.msra.mxu0 %v436
        %448 = vmatmul.bf16.gmra.mxu0 %v409
        %v449 = vpop.f32.mrf.mxu0
        %v450 = vadd.f32 0.0, %v449
        %v451 = vpop.f32.mrf.mxu0
        %452 = vdwg.mxu0
        %v453 = vld [vmem:[#allocation6] sm:$0xf]
        %v454 = vld [vmem:[#allocation6 + $0x4] sm:$0xf]
        %v455 = vld [vmem:[#allocation6 + $0x8] sm:$0xf]
        %v456 = vld [vmem:[#allocation6 + $0xc] sm:$0xf]
        %v461 = vunpack.c.l.b16 %v453
        %v462 = vunpack.c.l.b16 %v454
        %v463 = vunpack.c.l.b16 %v455
        %v464 = vunpack.c.l.b16 %v456
        %v465 = vpack.c.b16 %v462, %v461
        %v466 = vpack.c.b16 %v464, %v463
        %469 = vmatpush.bf16.msra.mxu0 0
        %470 = vmatpush.bf16.msra.mxu0 0
        %471 = vmatpush.bf16.msra.mxu0 0
        %472 = vmatpush.bf16.msra.mxu0 0
        %473 = vmatpush.bf16.msra.mxu0 0
        %474 = vmatpush.bf16.msra.mxu0 0
        %475 = vmatpush.bf16.msra.mxu0 %v466
        %476 = vmatpush.bf16.msra.mxu0 %v465
        %477 = vmatmul.bf16.gmra.mxu0 %v409
        %v478 = vpop.f32.mrf.mxu0
        %v479 = vadd.f32 0.0, %v478
        %v480 = vpop.f32.mrf.mxu0
        %481 = vdwg.mxu0
        %v482 = vld [vmem:[%s383] sm:$0xf]
        %v483 = vld [vmem:[%s383 + $0x4] sm:$0xf]
        %v484 = vld [vmem:[%s383 + $0x8] sm:$0xf]
        %v485 = vld [vmem:[%s383 + $0xc] sm:$0xf]
        %v486 = vld [vmem:[%s383 + $0x10] sm:$0xf]
        %v487 = vld [vmem:[%s383 + $0x14] sm:$0xf]
        %v488 = vld [vmem:[%s383 + $0x18] sm:$0xf]
        %v489 = vld [vmem:[%s383 + $0x1c] sm:$0xf]
        %v490 = vld [vmem:[%s6] sm:$0xf]
        %v491 = vld [vmem:[%s6 + $0x4] sm:$0xf]
        %v492 = vld [vmem:[%s6 + $0x8] sm:$0xf]
        %v493 = vld [vmem:[%s6 + $0xc] sm:$0xf]
        %v494 = vld [vmem:[%s7] sm:$0x1]
        %v496 = vperm.slane %v494, 0
        %v506 = vunpack.c.l.b16 %v482
        %v507 = vunpack.c.l.b16 %v483
        %v508 = vunpack.c.l.b16 %v484
        %v509 = vunpack.c.l.b16 %v485
        %v510 = vunpack.c.l.b16 %v486
        %v511 = vunpack.c.l.b16 %v487
        %v512 = vunpack.c.l.b16 %v488
        %v513 = vunpack.c.l.b16 %v489
        %v514 = vpack.c.b16 %v507, %v506
        %v515 = vpack.c.b16 %v509, %v508
        %v516 = vpack.c.b16 %v511, %v510
        %v517 = vpack.c.b16 %v513, %v512
        %v522 = vunpack.c.l.b16 %v490
        %v523 = vunpack.c.l.b16 %v491
        %v524 = vunpack.c.l.b16 %v492
        %v525 = vunpack.c.l.b16 %v493
        %v526 = vpack.c.b16 %v523, %v522
        %v527 = vpack.c.b16 %v525, %v524
        %v531 = vsel %vm407, %v514, 0
        %v534 = vsel %vm407, %v515, 0
        %v537 = vsel %vm407, %v516, 0
        %v540 = vsel %vm407, %v517, 0
        %542 = vmatpush.bf16.msra.mxu0 0
        %543 = vmatpush.bf16.msra.mxu0 0
        %544 = vmatpush.bf16.msra.mxu0 0
        %545 = vmatpush.bf16.msra.mxu0 0
        %546 = vmatpush.bf16.msra.mxu0 0
        %547 = vmatpush.bf16.msra.mxu0 0
        %548 = vmatpush.bf16.msra.mxu0 %v527
        %549 = vmatpush.bf16.msra.mxu0 %v526
        %550 = vmatmul.bf16.gmra.mxu0 %v531
        %v551 = vpop.f32.mrf.mxu0
        %v552 = vadd.f32 %v496, %v551
        %v553 = vpop.f32.mrf.mxu0
        %v554 = vadd.f32 %v496, %v553
        %555 = vmatmul.bf16.gmra.mxu0 %v534
        %v556 = vpop.f32.mrf.mxu0
        %v557 = vadd.f32 %v496, %v556
        %v558 = vpop.f32.mrf.mxu0
        %v559 = vadd.f32 %v496, %v558
        %560 = vmatmul.bf16.gmra.mxu0 %v537
        %v561 = vpop.f32.mrf.mxu0
        %v562 = vadd.f32 %v496, %v561
        %v563 = vpop.f32.mrf.mxu0
        %v564 = vadd.f32 %v496, %v563
        %565 = vmatmul.bf16.gmra.mxu0 %v540
        %v566 = vpop.f32.mrf.mxu0
        %v567 = vadd.f32 %v496, %v566
        %v568 = vpop.f32.mrf.mxu0
        %v569 = vadd.f32 %v496, %v568
        %570 = vdwg.mxu0
        %v571 = vtanh.pop %v552
        %v572 = vtanh.pop %v554
        %v573 = vtanh.pop %v557
        %v574 = vtanh.pop %v559
        %v575 = vtanh.pop %v562
        %v576 = vtanh.pop %v564
        %v577 = vtanh.pop %v567
        %v578 = vtanh.pop %v569
        %v579 = vlaneseq
        %v580 = vand.u32 %v579, 127
        %v581 = vpack.c.bf16 %v421, %v421
        %v582 = vpack.c.bf16 %v450, %v450
        %v583 = vpack.c.bf16 %v479, %v479
        %vm584 = vcmp.eq.s32.totalorder %v580, 0
        %v585 = vsel %vm584, %v571, 0.0
        %v586 = vsel %vm584, %v572, 0.0
        %v587 = vsel %vm584, %v573, 0.0
        %v588 = vsel %vm584, %v574, 0.0
        %v589 = vsel %vm584, %v575, 0.0
        %v590 = vsel %vm584, %v576, 0.0
        %v591 = vsel %vm584, %v577, 0.0
        %v592 = vsel %vm584, %v578, 0.0
        %vm593 = vcmask 31744
        %v594 = vsel %vm593, %v585, 0.0
        %595 = vadd.xlane.f32.xlu0 %v594
        %v596 = vpop.xlane.xlu0 %595
        %v597 = vsel %vm593, %v586, 0.0
        %598 = vadd.xlane.f32.xlu0 %v597
        %v599 = vpop.xlane.xlu0 %598
        %v600 = vsel %vm593, %v587, 0.0
        %601 = vadd.xlane.f32.xlu0 %v600
        %v602 = vpop.xlane.xlu0 %601
        %v603 = vsel %vm593, %v588, 0.0
        %604 = vadd.xlane.f32.xlu0 %v603
        %v605 = vpop.xlane.xlu0 %604
        %v606 = vsel %vm593, %v589, 0.0
        %607 = vadd.xlane.f32.xlu0 %v606
        %v608 = vpop.xlane.xlu0 %607
        %v609 = vsel %vm593, %v590, 0.0
        %610 = vadd.xlane.f32.xlu0 %v609
        %v611 = vpop.xlane.xlu0 %610
        %v612 = vsel %vm593, %v591, 0.0
        %613 = vadd.xlane.f32.xlu0 %v612
        %v614 = vpop.xlane.xlu0 %613
        %v615 = vsel %vm593, %v592, 0.0
        %616 = vadd.xlane.f32.xlu0 %v615
        %v617 = vpop.xlane.xlu0 %616
        %vm618 = vcmask 64512
        %v620 = vsel %vm618, %v581, 0
        %v623 = vsel %vm618, %v582, 0
        %625 = vmatpush.bf16.xpose.msra.mxu0 0
        %626 = vmatpush.bf16.xpose.msra.mxu0 0
        %627 = vmatpush.bf16.xpose.msra.mxu0 0
        %628 = vmatpush.bf16.xpose.msra.mxu0 0
        %629 = vmatpush.bf16.xpose.msra.mxu0 0
        %630 = vmatpush.bf16.xpose.msra.mxu0 0
        %631 = vmatpush.bf16.xpose.msra.mxu0 0
        %632 = vmatpush.bf16.xpose.msra.mxu0 %v623
        %633 = vmatmul.bf16.gmra.mxu0 %v620
        %v634 = vpop.f32.mrf.mxu0
        %v635 = vadd.f32 0.0, %v634
        %v636 = vpop.f32.mrf.mxu0
        %637 = vdwg.mxu0
        %v638 = vmul.f32 %v635, 0.35355338
        %v647 = vperm.slane %v596, %v580
        %v648 = vperm.slane %v599, %v580
        %v649 = vperm.slane %v602, %v580
        %v650 = vperm.slane %v605, %v580
        %v651 = vperm.slane %v608, %v580
        %v652 = vperm.slane %v611, %v580
        %v653 = vperm.slane %v614, %v580
        %v654 = vperm.slane %v617, %v580
        %vm655 = vcmask 1041409
        %v656 = vsel %vm655, %v648, %v647
        %vm657 = vcmask 1042434
        %v658 = vsel %vm657, %v649, %v656
        %vm659 = vcmask 1043459
        %v660 = vsel %vm659, %v650, %v658
        %vm661 = vcmask 1044484
        %v662 = vsel %vm661, %v651, %v660
        %vm663 = vcmask 1045509
        %v664 = vsel %vm663, %v652, %v662
        %vm665 = vcmask 1046534
        %v666 = vsel %vm665, %v653, %v664
        %vm667 = vcmask 1047559
        %v668 = vsel %vm667, %v654, %v666
        %v670 = vadd.f32 %v638, %v668
        %v671 = vsel %vm618, %v670, -inf
        %672 = vmax.xlane.f32.xlu0 %v671
        %v673 = vpop.xlane.xlu0 %672
        %v674 = vsub.f32 %v670, %v673
        %v675 = vmul.f32 %v674, 1.442695
        %v676 = vpow.pop %v675
        %v677 = vsel %vm618, %v676, 0.0
        %678 = vadd.xlane.f32.xlu0 %v677
        %v679 = vpop.xlane.xlu0 %678
        %v680 = vrcp.pop %v679
        %v681 = vmul.f32 %v676, %v680
        %v682 = vpack.c.bf16 %v681, %v681
        %v684 = vsel %vm618, %v682, 0
        %vm686 = vcmask 1043456
        %v688 = vsel %vm686, %v583, 0
        %690 = vmatpush.bf16.msra.mxu0 0
        %691 = vmatpush.bf16.msra.mxu0 0
        %692 = vmatpush.bf16.msra.mxu0 0
        %693 = vmatpush.bf16.msra.mxu0 0
        %694 = vmatpush.bf16.msra.mxu0 0
        %695 = vmatpush.bf16.msra.mxu0 0
        %696 = vmatpush.bf16.msra.mxu0 0
        %697 = vmatpush.bf16.msra.mxu0 %v688
        %698 = vmatmul.bf16.gmra.mxu0 %v684
        %v699 = vpop.f32.mrf.mxu0
        %v700 = vadd.f32 0.0, %v699
        %v701 = vpop.f32.mrf.mxu0
        %702 = vdwg.mxu0
        %vm703 = vcmp.eq.s32.totalorder %v580, 1
        %v704 = vsel %vm703, %v571, 0.0
        %v705 = vsel %vm703, %v572, 0.0
        %v706 = vsel %vm703, %v573, 0.0
        %v707 = vsel %vm703, %v574, 0.0
        %v708 = vsel %vm703, %v575, 0.0
        %v709 = vsel %vm703, %v576, 0.0
        %v710 = vsel %vm703, %v577, 0.0
        %v711 = vsel %vm703, %v578, 0.0
        %v712 = vsel %vm593, %v704, 0.0
        %713 = vadd.xlane.f32.xlu0 %v712
        %v714 = vpop.xlane.xlu0 %713
        %v715 = vsel %vm593, %v705, 0.0
        %716 = vadd.xlane.f32.xlu0 %v715
        %v717 = vpop.xlane.xlu0 %716
        %v718 = vsel %vm593, %v706, 0.0
        %719 = vadd.xlane.f32.xlu0 %v718
        %v720 = vpop.xlane.xlu0 %719
        %v721 = vsel %vm593, %v707, 0.0
        %722 = vadd.xlane.f32.xlu0 %v721
        %v723 = vpop.xlane.xlu0 %722
        %v724 = vsel %vm593, %v708, 0.0
        %725 = vadd.xlane.f32.xlu0 %v724
        %v726 = vpop.xlane.xlu0 %725
        %v727 = vsel %vm593, %v709, 0.0
        %728 = vadd.xlane.f32.xlu0 %v727
        %v729 = vpop.xlane.xlu0 %728
        %v730 = vsel %vm593, %v710, 0.0
        %731 = vadd.xlane.f32.xlu0 %v730
        %v732 = vpop.xlane.xlu0 %731
        %v733 = vsel %vm593, %v711, 0.0
        %734 = vadd.xlane.f32.xlu0 %v733
        %v735 = vpop.xlane.xlu0 %734
        %737 = vrot.lane.b32.xlu0 %v581, 120
        %v738 = vpop.permute.xlu0 %737
        %740 = vrot.lane.b32.xlu0 %v582, 120
        %v741 = vpop.permute.xlu0 %740
        %v743 = vsel %vm618, %v738, 0
        %v746 = vsel %vm618, %v741, 0
        %748 = vmatpush.bf16.xpose.msra.mxu0 0
        %749 = vmatpush.bf16.xpose.msra.mxu0 0
        %750 = vmatpush.bf16.xpose.msra.mxu0 0
        %751 = vmatpush.bf16.xpose.msra.mxu0 0
        %752 = vmatpush.bf16.xpose.msra.mxu0 0
        %753 = vmatpush.bf16.xpose.msra.mxu0 0
        %754 = vmatpush.bf16.xpose.msra.mxu0 0
        %755 = vmatpush.bf16.xpose.msra.mxu0 %v746
        %756 = vmatmul.bf16.gmra.mxu0 %v743
        %v757 = vpop.f32.mrf.mxu0
        %v758 = vadd.f32 0.0, %v757
        %v759 = vpop.f32.mrf.mxu0
        %760 = vdwg.mxu0
        %v761 = vmul.f32 %v758, 0.35355338
        %v770 = vperm.slane %v714, %v580
        %v771 = vperm.slane %v717, %v580
        %v772 = vperm.slane %v720, %v580
        %v773 = vperm.slane %v723, %v580
        %v774 = vperm.slane %v726, %v580
        %v775 = vperm.slane %v729, %v580
        %v776 = vperm.slane %v732, %v580
        %v777 = vperm.slane %v735, %v580
        %v778 = vsel %vm655, %v771, %v770
        %v779 = vsel %vm657, %v772, %v778
        %v780 = vsel %vm659, %v773, %v779
        %v781 = vsel %vm661, %v774, %v780
        %v782 = vsel %vm663, %v775, %v781
        %v783 = vsel %vm665, %v776, %v782
        %v784 = vsel %vm667, %v777, %v783
        %v786 = vadd.f32 %v761, %v784
        %v787 = vsel %vm618, %v786, -inf
        %788 = vmax.xlane.f32.xlu0 %v787
        %v789 = vpop.xlane.xlu0 %788
        %v790 = vsub.f32 %v786, %v789
        %v791 = vmul.f32 %v790, 1.442695
        %v792 = vpow.pop %v791
        %v793 = vsel %vm618, %v792, 0.0
        %794 = vadd.xlane.f32.xlu0 %v793
        %v795 = vpop.xlane.xlu0 %794
        %v796 = vrcp.pop %v795
        %v797 = vmul.f32 %v792, %v796
        %v798 = vpack.c.bf16 %v797, %v797
        %800 = vrot.lane.b32.xlu0 %v583, 120
        %v801 = vpop.permute.xlu0 %800
        %v803 = vsel %vm618, %v798, 0
        %v806 = vsel %vm686, %v801, 0
        %808 = vmatpush.bf16.msra.mxu0 0
        %809 = vmatpush.bf16.msra.mxu0 0
        %810 = vmatpush.bf16.msra.mxu0 0
        %811 = vmatpush.bf16.msra.mxu0 0
        %812 = vmatpush.bf16.msra.mxu0 0
        %813 = vmatpush.bf16.msra.mxu0 0
        %814 = vmatpush.bf16.msra.mxu0 0
        %815 = vmatpush.bf16.msra.mxu0 %v806
        %816 = vmatmul.bf16.gmra.mxu0 %v803
        %v817 = vpop.f32.mrf.mxu0
        %v818 = vadd.f32 0.0, %v817
        %v819 = vpop.f32.mrf.mxu0
        %820 = vdwg.mxu0
        %vm821 = vcmp.eq.s32.totalorder %v580, 2
        %v822 = vsel %vm821, %v571, 0.0
        %v823 = vsel %vm821, %v572, 0.0
        %v824 = vsel %vm821, %v573, 0.0
        %v825 = vsel %vm821, %v574, 0.0
        %v826 = vsel %vm821, %v575, 0.0
        %v827 = vsel %vm821, %v576, 0.0
        %v828 = vsel %vm821, %v577, 0.0
        %v829 = vsel %vm821, %v578, 0.0
        %v830 = vsel %vm593, %v822, 0.0
        %831 = vadd.xlane.f32.xlu0 %v830
        %v832 = vpop.xlane.xlu0 %831
        %v833 = vsel %vm593, %v823, 0.0
        %834 = vadd.xlane.f32.xlu0 %v833
        %v835 = vpop.xlane.xlu0 %834
        %v836 = vsel %vm593, %v824, 0.0
        %837 = vadd.xlane.f32.xlu0 %v836
        %v838 = vpop.xlane.xlu0 %837
        %v839 = vsel %vm593, %v825, 0.0
        %840 = vadd.xlane.f32.xlu0 %v839
        %v841 = vpop.xlane.xlu0 %840
        %v842 = vsel %vm593, %v826, 0.0
        %843 = vadd.xlane.f32.xlu0 %v842
        %v844 = vpop.xlane.xlu0 %843
        %v845 = vsel %vm593, %v827, 0.0
        %846 = vadd.xlane.f32.xlu0 %v845
        %v847 = vpop.xlane.xlu0 %846
        %v848 = vsel %vm593, %v828, 0.0
        %849 = vadd.xlane.f32.xlu0 %v848
        %v850 = vpop.xlane.xlu0 %849
        %v851 = vsel %vm593, %v829, 0.0
        %852 = vadd.xlane.f32.xlu0 %v851
        %v853 = vpop.xlane.xlu0 %852
        %854 = vrot.lane.b32.xlu0 %v581, 112
        %v855 = vpop.permute.xlu0 %854
        %856 = vrot.lane.b32.xlu0 %v582, 112
        %v857 = vpop.permute.xlu0 %856
        %v859 = vsel %vm618, %v855, 0
        %v862 = vsel %vm618, %v857, 0
        %864 = vmatpush.bf16.xpose.msra.mxu0 0
        %865 = vmatpush.bf16.xpose.msra.mxu0 0
        %866 = vmatpush.bf16.xpose.msra.mxu0 0
        %867 = vmatpush.bf16.xpose.msra.mxu0 0
        %868 = vmatpush.bf16.xpose.msra.mxu0 0
        %869 = vmatpush.bf16.xpose.msra.mxu0 0
        %870 = vmatpush.bf16.xpose.msra.mxu0 0
        %871 = vmatpush.bf16.xpose.msra.mxu0 %v862
        %872 = vmatmul.bf16.gmra.mxu0 %v859
        %v873 = vpop.f32.mrf.mxu0
        %v874 = vadd.f32 0.0, %v873
        %v875 = vpop.f32.mrf.mxu0
        %876 = vdwg.mxu0
        %v877 = vmul.f32 %v874, 0.35355338
        %v886 = vperm.slane %v832, %v580
        %v887 = vperm.slane %v835, %v580
        %v888 = vperm.slane %v838, %v580
        %v889 = vperm.slane %v841, %v580
        %v890 = vperm.slane %v844, %v580
        %v891 = vperm.slane %v847, %v580
        %v892 = vperm.slane %v850, %v580
        %v893 = vperm.slane %v853, %v580
        %v894 = vsel %vm655, %v887, %v886
        %v895 = vsel %vm657, %v888, %v894
        %v896 = vsel %vm659, %v889, %v895
        %v897 = vsel %vm661, %v890, %v896
        %v898 = vsel %vm663, %v891, %v897
        %v899 = vsel %vm665, %v892, %v898
        %v900 = vsel %vm667, %v893, %v899
        %v902 = vadd.f32 %v877, %v900
        %v903 = vsel %vm618, %v902, -inf
        %904 = vmax.xlane.f32.xlu0 %v903
        %v905 = vpop.xlane.xlu0 %904
        %v906 = vsub.f32 %v902, %v905
        %v907 = vmul.f32 %v906, 1.442695
        %v908 = vpow.pop %v907
        %v909 = vsel %vm618, %v908, 0.0
        %910 = vadd.xlane.f32.xlu0 %v909
        %v911 = vpop.xlane.xlu0 %910
        %v912 = vrcp.pop %v911
        %v913 = vmul.f32 %v908, %v912
        %v914 = vpack.c.bf16 %v913, %v913
        %915 = vrot.lane.b32.xlu0 %v583, 112
        %v916 = vpop.permute.xlu0 %915
        %v918 = vsel %vm618, %v914, 0
        %v921 = vsel %vm686, %v916, 0
        %923 = vmatpush.bf16.msra.mxu0 0
        %924 = vmatpush.bf16.msra.mxu0 0
        %925 = vmatpush.bf16.msra.mxu0 0
        %926 = vmatpush.bf16.msra.mxu0 0
        %927 = vmatpush.bf16.msra.mxu0 0
        %928 = vmatpush.bf16.msra.mxu0 0
        %929 = vmatpush.bf16.msra.mxu0 0
        %930 = vmatpush.bf16.msra.mxu0 %v921
        %931 = vmatmul.bf16.gmra.mxu0 %v918
        %v932 = vpop.f32.mrf.mxu0
        %v933 = vadd.f32 0.0, %v932
        %v934 = vpop.f32.mrf.mxu0
        %935 = vdwg.mxu0
        %vm936 = vcmp.eq.s32.totalorder %v580, 3
        %v937 = vsel %vm936, %v571, 0.0
        %v938 = vsel %vm936, %v572, 0.0
        %v939 = vsel %vm936, %v573, 0.0
        %v940 = vsel %vm936, %v574, 0.0
        %v941 = vsel %vm936, %v575, 0.0
        %v942 = vsel %vm936, %v576, 0.0
        %v943 = vsel %vm936, %v577, 0.0
        %v944 = vsel %vm936, %v578, 0.0
        %v945 = vsel %vm593, %v937, 0.0
        %946 = vadd.xlane.f32.xlu0 %v945
        %v947 = vpop.xlane.xlu0 %946
        %v948 = vsel %vm593, %v938, 0.0
        %949 = vadd.xlane.f32.xlu0 %v948
        %v950 = vpop.xlane.xlu0 %949
        %v951 = vsel %vm593, %v939, 0.0
        %952 = vadd.xlane.f32.xlu0 %v951
        %v953 = vpop.xlane.xlu0 %952
        %v954 = vsel %vm593, %v940, 0.0
        %955 = vadd.xlane.f32.xlu0 %v954
        %v956 = vpop.xlane.xlu0 %955
        %v957 = vsel %vm593, %v941, 0.0
        %958 = vadd.xlane.f32.xlu0 %v957
        %v959 = vpop.xlane.xlu0 %958
        %v960 = vsel %vm593, %v942, 0.0
        %961 = vadd.xlane.f32.xlu0 %v960
        %v962 = vpop.xlane.xlu0 %961
        %v963 = vsel %vm593, %v943, 0.0
        %964 = vadd.xlane.f32.xlu0 %v963
        %v965 = vpop.xlane.xlu0 %964
        %v966 = vsel %vm593, %v944, 0.0
        %967 = vadd.xlane.f32.xlu0 %v966
        %v968 = vpop.xlane.xlu0 %967
        %969 = vrot.lane.b32.xlu0 %v581, 104
        %v970 = vpop.permute.xlu0 %969
        %971 = vrot.lane.b32.xlu0 %v582, 104
        %v972 = vpop.permute.xlu0 %971
        %v974 = vsel %vm618, %v970, 0
        %v977 = vsel %vm618, %v972, 0
        %979 = vmatpush.bf16.xpose.msra.mxu0 0
        %980 = vmatpush.bf16.xpose.msra.mxu0 0
        %981 = vmatpush.bf16.xpose.msra.mxu0 0
        %982 = vmatpush.bf16.xpose.msra.mxu0 0
        %983 = vmatpush.bf16.xpose.msra.mxu0 0
        %984 = vmatpush.bf16.xpose.msra.mxu0 0
        %985 = vmatpush.bf16.xpose.msra.mxu0 0
        %986 = vmatpush.bf16.xpose.msra.mxu0 %v977
        %987 = vmatmul.bf16.gmra.mxu0 %v974
        %v988 = vpop.f32.mrf.mxu0
        %v989 = vadd.f32 0.0, %v988
        %v990 = vpop.f32.mrf.mxu0
        %991 = vdwg.mxu0
        %v992 = vmul.f32 %v989, 0.35355338
        %v1001 = vperm.slane %v947, %v580
        %v1002 = vperm.slane %v950, %v580
        %v1003 = vperm.slane %v953, %v580
        %v1004 = vperm.slane %v956, %v580
        %v1005 = vperm.slane %v959, %v580
        %v1006 = vperm.slane %v962, %v580
        %v1007 = vperm.slane %v965, %v580
        %v1008 = vperm.slane %v968, %v580
        %v1009 = vsel %vm655, %v1002, %v1001
        %v1010 = vsel %vm657, %v1003, %v1009
        %v1011 = vsel %vm659, %v1004, %v1010
        %v1012 = vsel %vm661, %v1005, %v1011
        %v1013 = vsel %vm663, %v1006, %v1012
        %v1014 = vsel %vm665, %v1007, %v1013
        %v1015 = vsel %vm667, %v1008, %v1014
        %v1017 = vadd.f32 %v992, %v1015
        %v1018 = vsel %vm618, %v1017, -inf
        %1019 = vmax.xlane.f32.xlu0 %v1018
        %v1020 = vpop.xlane.xlu0 %1019
        %v1021 = vsub.f32 %v1017, %v1020
        %v1022 = vmul.f32 %v1021, 1.442695
        %v1023 = vpow.pop %v1022
        %v1024 = vsel %vm618, %v1023, 0.0
        %1025 = vadd.xlane.f32.xlu0 %v1024
        %v1026 = vpop.xlane.xlu0 %1025
        %v1027 = vrcp.pop %v1026
        %v1028 = vmul.f32 %v1023, %v1027
        %v1029 = vpack.c.bf16 %v1028, %v1028
        %1030 = vrot.lane.b32.xlu0 %v583, 104
        %v1031 = vpop.permute.xlu0 %1030
        %v1033 = vsel %vm618, %v1029, 0
        %v1036 = vsel %vm686, %v1031, 0
        %1038 = vmatpush.bf16.msra.mxu0 0
        %1039 = vmatpush.bf16.msra.mxu0 0
        %1040 = vmatpush.bf16.msra.mxu0 0
        %1041 = vmatpush.bf16.msra.mxu0 0
        %1042 = vmatpush.bf16.msra.mxu0 0
        %1043 = vmatpush.bf16.msra.mxu0 0
        %1044 = vmatpush.bf16.msra.mxu0 0
        %1045 = vmatpush.bf16.msra.mxu0 %v1036
        %1046 = vmatmul.bf16.gmra.mxu0 %v1033
        %v1047 = vpop.f32.mrf.mxu0
        %v1048 = vadd.f32 0.0, %v1047
        %v1049 = vpop.f32.mrf.mxu0
        %1050 = vdwg.mxu0
        %1052 = vrot.lane.b32.xlu0 %v818, 8
        %v1053 = vpop.permute.xlu0 %1052
        %1056 = vrot.lane.b32.xlu0 %v933, 16
        %v1057 = vpop.permute.xlu0 %1056
        %1060 = vrot.lane.b32.xlu0 %v1048, 24
        %v1061 = vpop.permute.xlu0 %1060
        %v1063 = vsel %vm618, %v700, %v1053
        %vm1064 = vcmask 130048
        %v1065 = vsel %vm1064, %v1063, %v1057
        %vm1066 = vcmask 195584
        %v1067 = vsel %vm1066, %v1065, %v1061
        %v1068 = vpack.c.bf16 %v1067, %v1067
        %v1069 = vld [vmem:[#allocation7] sm:$0xf]
        %v1070 = vld [vmem:[#allocation7 + $0x4] sm:$0xf]
        %v1071 = vld [vmem:[#allocation7 + $0x8] sm:$0xf]
        %v1072 = vld [vmem:[#allocation7 + $0xc] sm:$0xf]
        %v1077 = vunpack.c.l.b16 %v1069
        %v1078 = vunpack.c.l.b16 %v1070
        %v1079 = vunpack.c.l.b16 %v1071
        %v1080 = vunpack.c.l.b16 %v1072
        %v1081 = vpack.c.b16 %v1078, %v1077
        %v1082 = vpack.c.b16 %v1080, %v1079
        %v1086 = vsel %vm407, %v1068, 0
        %1088 = vmatpush.bf16.msra.mxu0 0
        %1089 = vmatpush.bf16.msra.mxu0 0
        %1090 = vmatpush.bf16.msra.mxu0 0
        %1091 = vmatpush.bf16.msra.mxu0 0
        %1092 = vmatpush.bf16.msra.mxu0 0
        %1093 = vmatpush.bf16.msra.mxu0 0
        %1094 = vmatpush.bf16.msra.mxu0 %v1082
        %1095 = vmatpush.bf16.msra.mxu0 %v1081
        %1096 = vmatmul.bf16.gmra.mxu0 %v1086
        %v1097 = vpop.f32.mrf.mxu0
        %v1098 = vadd.f32 0.0, %v1097
        %v1099 = vpop.f32.mrf.mxu0
        %1100 = vdwg.mxu0
        %v1101 = vadd.f32 %v389, %v1098
        %1102 = vst.msk [vmem:[%s387] sm:$0xff] %vm407, %v1101
        %p1103 = scmp.lt.s32.totalorder %s22, 1
        %s1104 = scalar_select %p1103, %s22, 1
        %s1105 = smul.addr %s1104, 8
        %s1106 = scalar_lea.vmem %s8, %s1105
        // Predicated region
        $region69: #{_lambda_.8} parent=51 // pred_check
          %p1107 = pneg %p218
        $region70: #{_lambda_.8} parent=51 // pred_check_branch
          %1109 = sbr.rel (%p1107) target = $region72
        $region71: #{_lambda_.8} parent=51 // pred_region
          _
        $region72: #{_lambda_.8} parent=51 // pred_fallthru
          _
      $region52: #{_lambda_.8} parent=5 // pred_fallthru
        _
      %p1110 = scmp.le.s32.totalorder 2, %s17
      // Predicated region
      $region73: #{_lambda_.8} parent=5 // pred_check
        %p1111 = pneg %p1110
      $region74: #{_lambda_.8} parent=5 // pred_check_branch
        %1113 = sbr.rel (%p1111) target = $region76
      $region75: #{_lambda_.8} parent=5 // pred_region
        %s1114 = ssub.s32 %s17, 2
        // Predicated region
        $region77: #{_lambda_.8} parent=75 // pred_check
          %p1115 = pneg %p224
        $region78: #{_lambda_.8} parent=75 // pred_check_branch
          %1117 = sbr.rel (%p1115) target = $region80
        $region79: #{_lambda_.8} parent=75 // pred_region
          %p1118 = scmp.lt.s32.totalorder %s23, 1
          %s1119 = scalar_select %p1118, %s23, 1
          %s1120 = smul.addr %s1119, 8
          %s1121 = scalar_lea.vmem %s8, %s1120
        $region80: #{_lambda_.8} parent=75 // pred_fallthru
          _
      $region76: #{_lambda_.8} parent=5 // pred_fallthru
        _
    $region6: #{_lambda_.8} parent=1 // loop_footer
      %s21 = sadd.s32 1, %s17
    $region7: #{_lambda_.8} parent=1 // loop_footer_branch
      %16 = sbr.rel target = $region3
    $region8: #{_lambda_.8} parent=1 // loop_exit
      _
    %1122 = vsyncpa [#allocation3], 1
    %s1123 = scalar_lea.sflag [#allocation3], 1
    %1124 = vsyncpa %s1123, 1
    %1125 = vsyncpa [#allocation5], 1
    %1126 = vsyncpa [#allocation8], 1

// kernel: _lambda_.12
$region0: #{_lambda_.12}
  #allocation0 [shape = 'u32[]', space=smem, size = 0x4, offset = 0x4, fixed_abs, tag = 'smem constant byte address 0x4 - core index']
  #allocation1 [shape = 'u32[72,128]{1,0:T(1,128)}', space=vmem, size = 0x9000, scoped, tag = 'internal scratch']
  %s0 = inlined_call_operand.vmem [shape: f32[2,8,32], index: 0, kind: input, shape index: {}]
  %s1 = inlined_call_operand.vmem [shape: bf16[2,64,32], index: 1, kind: input, shape index: {}]
  %s2 = inlined_call_operand.vmem [shape: bf16[32,32], index: 2, kind: input, shape index: {}]
  %s3 = inlined_call_operand.vmem [shape: bf16[32,32], index: 3, kind: input, shape index: {}]
  %s4 = inlined_call_operand.vmem [shape: bf16[32,32], index: 4, kind: input, shape index: {}]
  %s5 = inlined_call_operand.vmem [shape: bf16[32,32], index: 5, kind: input, shape index: {}]
  %s6 = inlined_call_operand.vmem [shape: bf16[32,4], index: 6, kind: input, shape index: {}]
  %s7 = inlined_call_operand.vmem [shape: f32[1,4], index: 7, kind: input, shape index: {}]
  %s8 = inlined_call_operand.vmem [shape: f32[2,8,32], index: 8, kind: output, shape index: {}]
  %s9 = sld [smem:[#allocation0]]
  $region65: #{_lambda_.12} parent=0
    _
  %s11 = ssub.s32 1, %s9
  %s12 = scalar_select 0, %s11, %s9
  loop: start=0, step=1, limit=4
  $region2: #{_lambda_.12} parent=0 // loop_pre_header
    _
  $region3: #{_lambda_.12} parent=0 // loop_header
    %s14 = sphi 0, %s18
    %p15 = scmp.ge.s32.totalorder %s14, 4
    %s24 = sphi 0, %s26
    %s27 = sphi 0, %s24
    %s28 = sphi 0, %s27
    %s44 = sphi 0, %s28
    %s50 = sphi 0, %s52
    %s53 = sphi 0, %s50
    %s54 = sphi 0, %s53
    %s70 = sphi 0, %s54
    %s74 = sphi 0, %s74
    %s76 = sphi 0, %s74
    %s77 = sphi 0, %s76
    %s91 = sphi 0, %s77
    %s95 = sphi 0, %s95
    %s97 = sphi 0, %s95
    %s98 = sphi 0, %s97
    %s112 = sphi 0, %s98
    %s116 = sphi 0, %s116
    %s118 = sphi 0, %s116
    %s119 = sphi 0, %s118
    %s133 = sphi 0, %s119
    %s137 = sphi 0, %s137
    %s139 = sphi 0, %s137
    %s140 = sphi 0, %s139
    %s154 = sphi 0, %s140
    %s158 = sphi 0, %s158
    %s160 = sphi 0, %s158
    %s161 = sphi 0, %s160
    %s175 = sphi 0, %s161
    %s179 = sphi 0, %s179
    %s181 = sphi 0, %s179
    %s182 = sphi 0, %s181
    %s196 = sphi 0, %s182
    %s202 = sphi 0, %s204
    %s205 = sphi 0, %s202
    %s206 = sphi 0, %s205
    %s222 = sphi 0, %s206
  $region4: #{_lambda_.12} parent=0 // loop_header_branch
    %17 = sbr.rel (%p15) target = $region8
  $region5: #{_lambda_.12} parent=0 // loop_body
    %s19 = ssub.s32 %s14, 1
    %s20 = ssub.s32 %s14, 2
    %s21 = sadd.s32 %s14, 1
    %s22 = ssub.s32 %s14, %s21
    %p23 = scmp.eq.s32.totalorder %s22, 0
    %s25 = sadd.s32 %s24, 1
    %s26 = scalar_select %p23, %s24, %s25
    %p29 = pneg %p23
    %p30 = scmp.eq.s32.totalorder %s14, 1
    %p31 = por %p29, %p30
    %p32 = scmp.ne.s32.totalorder %s24, %s27
    %p33 = scmp.eq.s32.totalorder %s14, 0
    %p34 = por %p32, %p33
    %p35 = scmp.ne.s32.totalorder %s24, %s27
    %p36 = scmp.eq.s32.totalorder %s19, 1
    %p37 = por %p35, %p36
    %p38 = scmp.ne.s32.totalorder %s27, %s28
    %p39 = scmp.eq.s32.totalorder %s19, 0
    %p40 = por %p38, %p39
    %p41 = scmp.ne.s32.totalorder %s27, %s28
    %p42 = scmp.eq.s32.totalorder %s20, 1
    %p43 = por %p41, %p42
    %p45 = scmp.ne.s32.totalorder %s28, %s44
    %p46 = scmp.eq.s32.totalorder %s20, 0
    %p47 = por %p45, %p46
    %s48 = ssub.s32 %s14, %s21
    %p49 = scmp.eq.s32.totalorder %s48, 0
    %s51 = sadd.s32 %s50, 1
    %s52 = scalar_select %p49, %s50, %s51
    %p55 = pneg %p49
    %p56 = scmp.eq.s32.totalorder %s14, 1
    %p57 = por %p55, %p56
    %p58 = scmp.ne.s32.totalorder %s50, %s53
    %p59 = scmp.eq.s32.totalorder %s14, 0
    %p60 = por %p58, %p59
    %p61 = scmp.ne.s32.totalorder %s50, %s53
    %p62 = scmp.eq.s32.totalorder %s19, 1
    %p63 = por %p61, %p62
    %p64 = scmp.ne.s32.totalorder %s53, %s54
    %p65 = scmp.eq.s32.totalorder %s19, 0
    %p66 = por %p64, %p65
    %p67 = scmp.ne.s32.totalorder %s53, %s54
    %p68 = scmp.eq.s32.totalorder %s20, 1
    %p69 = por %p67, %p68
    %p71 = scmp.ne.s32.totalorder %s54, %s70
    %p72 = scmp.eq.s32.totalorder %s20, 0
    %p73 = por %p71, %p72
    %s75 = sadd.s32 %s74, 1
    %p78 = scmp.eq.s32.totalorder %s14, 1
    %p79 = scmp.ne.s32.totalorder %s74, %s76
    %p80 = scmp.eq.s32.totalorder %s14, 0
    %p81 = por %p79, %p80
    %p82 = scmp.ne.s32.totalorder %s74, %s76
    %p83 = scmp.eq.s32.totalorder %s19, 1
    %p84 = por %p82, %p83
    %p85 = scmp.ne.s32.totalorder %s76, %s77
    %p86 = scmp.eq.s32.totalorder %s19, 0
    %p87 = por %p85, %p86
    %p88 = scmp.ne.s32.totalorder %s76, %s77
    %p89 = scmp.eq.s32.totalorder %s20, 1
    %p90 = por %p88, %p89
    %p92 = scmp.ne.s32.totalorder %s77, %s91
    %p93 = scmp.eq.s32.totalorder %s20, 0
    %p94 = por %p92, %p93
    %s96 = sadd.s32 %s95, 1
    %p99 = scmp.eq.s32.totalorder %s14, 1
    %p100 = scmp.ne.s32.totalorder %s95, %s97
    %p101 = scmp.eq.s32.totalorder %s14, 0
    %p102 = por %p100, %p101
    %p103 = scmp.ne.s32.totalorder %s95, %s97
    %p104 = scmp.eq.s32.totalorder %s19, 1
    %p105 = por %p103, %p104
    %p106 = scmp.ne.s32.totalorder %s97, %s98
    %p107 = scmp.eq.s32.totalorder %s19, 0
    %p108 = por %p106, %p107
    %p109 = scmp.ne.s32.totalorder %s97, %s98
    %p110 = scmp.eq.s32.totalorder %s20, 1
    %p111 = por %p109, %p110
    %p113 = scmp.ne.s32.totalorder %s98, %s112
    %p114 = scmp.eq.s32.totalorder %s20, 0
    %p115 = por %p113, %p114
    %s117 = sadd.s32 %s116, 1
    %p120 = scmp.eq.s32.totalorder %s14, 1
    %p121 = scmp.ne.s32.totalorder %s116, %s118
    %p122 = scmp.eq.s32.totalorder %s14, 0
    %p123 = por %p121, %p122
    %p124 = scmp.ne.s32.totalorder %s116, %s118
    %p125 = scmp.eq.s32.totalorder %s19, 1
    %p126 = por %p124, %p125
    %p127 = scmp.ne.s32.totalorder %s118, %s119
    %p128 = scmp.eq.s32.totalorder %s19, 0
    %p129 = por %p127, %p128
    %p130 = scmp.ne.s32.totalorder %s118, %s119
    %p131 = scmp.eq.s32.totalorder %s20, 1
    %p132 = por %p130, %p131
    %p134 = scmp.ne.s32.totalorder %s119, %s133
    %p135 = scmp.eq.s32.totalorder %s20, 0
    %p136 = por %p134, %p135
    %s138 = sadd.s32 %s137, 1
    %p141 = scmp.eq.s32.totalorder %s14, 1
    %p142 = scmp.ne.s32.totalorder %s137, %s139
    %p143 = scmp.eq.s32.totalorder %s14, 0
    %p144 = por %p142, %p143
    %p145 = scmp.ne.s32.totalorder %s137, %s139
    %p146 = scmp.eq.s32.totalorder %s19, 1
    %p147 = por %p145, %p146
    %p148 = scmp.ne.s32.totalorder %s139, %s140
    %p149 = scmp.eq.s32.totalorder %s19, 0
    %p150 = por %p148, %p149
    %p151 = scmp.ne.s32.totalorder %s139, %s140
    %p152 = scmp.eq.s32.totalorder %s20, 1
    %p153 = por %p151, %p152
    %p155 = scmp.ne.s32.totalorder %s140, %s154
    %p156 = scmp.eq.s32.totalorder %s20, 0
    %p157 = por %p155, %p156
    %s159 = sadd.s32 %s158, 1
    %p162 = scmp.eq.s32.totalorder %s14, 1
    %p163 = scmp.ne.s32.totalorder %s158, %s160
    %p164 = scmp.eq.s32.totalorder %s14, 0
    %p165 = por %p163, %p164
    %p166 = scmp.ne.s32.totalorder %s158, %s160
    %p167 = scmp.eq.s32.totalorder %s19, 1
    %p168 = por %p166, %p167
    %p169 = scmp.ne.s32.totalorder %s160, %s161
    %p170 = scmp.eq.s32.totalorder %s19, 0
    %p171 = por %p169, %p170
    %p172 = scmp.ne.s32.totalorder %s160, %s161
    %p173 = scmp.eq.s32.totalorder %s20, 1
    %p174 = por %p172, %p173
    %p176 = scmp.ne.s32.totalorder %s161, %s175
    %p177 = scmp.eq.s32.totalorder %s20, 0
    %p178 = por %p176, %p177
    %s180 = sadd.s32 %s179, 1
    %p183 = scmp.eq.s32.totalorder %s14, 1
    %p184 = scmp.ne.s32.totalorder %s179, %s181
    %p185 = scmp.eq.s32.totalorder %s14, 0
    %p186 = por %p184, %p185
    %p187 = scmp.ne.s32.totalorder %s179, %s181
    %p188 = scmp.eq.s32.totalorder %s19, 1
    %p189 = por %p187, %p188
    %p190 = scmp.ne.s32.totalorder %s181, %s182
    %p191 = scmp.eq.s32.totalorder %s19, 0
    %p192 = por %p190, %p191
    %p193 = scmp.ne.s32.totalorder %s181, %s182
    %p194 = scmp.eq.s32.totalorder %s20, 1
    %p195 = por %p193, %p194
    %p197 = scmp.ne.s32.totalorder %s182, %s196
    %p198 = scmp.eq.s32.totalorder %s20, 0
    %p199 = por %p197, %p198
    %s200 = ssub.s32 %s14, %s21
    %p201 = scmp.eq.s32.totalorder %s200, 0
    %s203 = sadd.s32 %s202, 1
    %s204 = scalar_select %p201, %s202, %s203
    %p207 = pneg %p201
    %p208 = scmp.eq.s32.totalorder %s14, 1
    %p209 = por %p207, %p208
    %p210 = scmp.ne.s32.totalorder %s202, %s205
    %p211 = scmp.eq.s32.totalorder %s14, 0
    %p212 = por %p210, %p211
    %p213 = scmp.ne.s32.totalorder %s202, %s205
    %p214 = scmp.eq.s32.totalorder %s19, 1
    %p215 = por %p213, %p214
    %p216 = scmp.ne.s32.totalorder %s205, %s206
    %p217 = scmp.eq.s32.totalorder %s19, 0
    %p218 = por %p216, %p217
    %p219 = scmp.ne.s32.totalorder %s205, %s206
    %p220 = scmp.eq.s32.totalorder %s20, 1
    %p221 = por %p219, %p220
    %p223 = scmp.ne.s32.totalorder %s206, %s222
    %p224 = scmp.eq.s32.totalorder %s20, 0
    %p225 = por %p223, %p224
    %p226 = scmp.le.s32.totalorder 1, %s14
    %p227 = scmp.lt.s32.totalorder %s14, 3
    %p228 = pnand %p226, %p227
    %p229 = pneg %p228
    // Predicated region
    $region9: #{_lambda_.12} parent=5 // pred_check
      _
    $region10: #{_lambda_.12} parent=5 // pred_check_branch
      %231 = sbr.rel (%p228) target = $region12
    $region11: #{_lambda_.12} parent=5 // pred_region
      %s232 = ssub.s32 %s14, 1
      // Predicated region
      $region13: #{_lambda_.12} parent=11 // pred_check
        %p233 = pneg %p87
      $region14: #{_lambda_.12} parent=11 // pred_check_branch
        %235 = sbr.rel (%p233) target = $region16
      $region15: #{_lambda_.12} parent=11 // pred_region
        _
      $region16: #{_lambda_.12} parent=11 // pred_fallthru
        _
      // Predicated region
      $region17: #{_lambda_.12} parent=11 // pred_check
        %p236 = pneg %p108
      $region18: #{_lambda_.12} parent=11 // pred_check_branch
        %238 = sbr.rel (%p236) target = $region20
      $region19: #{_lambda_.12} parent=11 // pred_region
        _
      $region20: #{_lambda_.12} parent=11 // pred_fallthru
        _
      // Predicated region
      $region21: #{_lambda_.12} parent=11 // pred_check
        %p239 = pneg %p129
      $region22: #{_lambda_.12} parent=11 // pred_check_branch
        %241 = sbr.rel (%p239) target = $region24
      $region23: #{_lambda_.12} parent=11 // pred_region
        _
      $region24: #{_lambda_.12} parent=11 // pred_fallthru
        _
      // Predicated region
      $region25: #{_lambda_.12} parent=11 // pred_check
        %p242 = pneg %p150
      $region26: #{_lambda_.12} parent=11 // pred_check_branch
        %244 = sbr.rel (%p242) target = $region28
      $region27: #{_lambda_.12} parent=11 // pred_region
        _
      $region28: #{_lambda_.12} parent=11 // pred_fallthru
        _
      // Predicated region
      $region29: #{_lambda_.12} parent=11 // pred_check
        %p245 = pneg %p171
      $region30: #{_lambda_.12} parent=11 // pred_check_branch
        %247 = sbr.rel (%p245) target = $region32
      $region31: #{_lambda_.12} parent=11 // pred_region
        _
      $region32: #{_lambda_.12} parent=11 // pred_fallthru
        _
      // Predicated region
      $region33: #{_lambda_.12} parent=11 // pred_check
        %p248 = pneg %p192
      $region34: #{_lambda_.12} parent=11 // pred_check_branch
        %250 = sbr.rel (%p248) target = $region36
      $region35: #{_lambda_.12} parent=11 // pred_region
        _
      $region36: #{_lambda_.12} parent=11 // pred_fallthru
        _
    $region12: #{_lambda_.12} parent=5 // pred_fallthru
      _
    %p251 = scmp.lt.s32.totalorder %s14, 2
    // Predicated region
    $region37: #{_lambda_.12} parent=5 // pred_check
      %p252 = pneg %p251
    $region38: #{_lambda_.12} parent=5 // pred_check_branch
      %254 = sbr.rel (%p252) target = $region40
    $region39: #{_lambda_.12} parent=5 // pred_region
      // Predicated region
      $region41: #{_lambda_.12} parent=39 // pred_check
        %p255 = pneg %p34
      $region42: #{_lambda_.12} parent=39 // pred_check_branch
        %257 = sbr.rel (%p255) target = $region44
      $region43: #{_lambda_.12} parent=39 // pred_region
        %p258 = scmp.lt.s32.totalorder %s14, 1
        %s259 = scalar_select %p258, %s14, 1
        %s260 = smul.addr %s259, 8
        %s261 = scalar_lea.vmem %s0, %s260
      $region44: #{_lambda_.12} parent=39 // pred_fallthru
        _
      // Predicated region
      $region45: #{_lambda_.12} parent=39 // pred_check
        %p262 = pneg %p60
      $region46: #{_lambda_.12} parent=39 // pred_check_branch
        %264 = sbr.rel (%p262) target = $region48
      $region47: #{_lambda_.12} parent=39 // pred_region
        %p265 = scmp.lt.s32.totalorder %s14, 1
        %s266 = scalar_select %p265, %s14, 1
        %s267 = smul.addr %s266, 8
        %s268 = smul.addr %s267, 4
        %s269 = scalar_lea.vmem %s1, %s268
      $region48: #{_lambda_.12} parent=39 // pred_fallthru
        _
    $region40: #{_lambda_.12} parent=5 // pred_fallthru
      _
    %p270 = scmp.le.s32.totalorder 1, %s14
    %p271 = scmp.lt.s32.totalorder %s14, 3
    %p272 = pnand %p270, %p271
    %p273 = pneg %p272
    // Predicated region
    $region49: #{_lambda_.12} parent=5 // pred_check
      _
    $region50: #{_lambda_.12} parent=5 // pred_check_branch
      %275 = sbr.rel (%p272) target = $region52
    $region51: #{_lambda_.12} parent=5 // pred_region
      %s276 = ssub.s32 %s14, 1
      %p277 = scmp.lt.s32.totalorder %s19, 1
      %s278 = scalar_select %p277, %s19, 1
      %s279 = smul.addr %s278, 8
      %s280 = scalar_lea.vmem %s0, %s279
      %p281 = pneg %p40
      %p282 = pneg %p37
      %p283 = scmp.lt.s32.totalorder %s19, 1
      %s284 = scalar_select %p283, %s19, 1
      %s285 = smul.addr %s284, 8
      %s286 = smul.addr %s285, 4
      %s287 = scalar_lea.vmem %s1, %s286
      %p288 = pneg %p66
      %p289 = pneg %p63
      %p290 = pneg %p87
      %p291 = pneg %p84
      %p292 = pneg %p108
      %p293 = pneg %p105
      %p294 = pneg %p129
      %p295 = pneg %p126
      %p296 = pneg %p150
      %p297 = pneg %p147
      %p298 = pneg %p171
      %p299 = pneg %p168
      %p300 = pneg %p192
      %p301 = pneg %p189
      %p302 = pneg %p218
      %p303 = pneg %p215
      %p304 = scmp.lt.s32.totalorder %s19, 1
      %s305 = scalar_select %p304, %s19, 1
      %s306 = smul.addr %s305, 8
      %s307 = scalar_lea.vmem %s8, %s306
      %p308 = scmp.lt.s32.totalorder %s19, 1
      %s309 = scalar_select %p308, %s19, 1
      %s310 = smul.addr %s309, 8
      %s311 = scalar_lea.vmem %s0, %s310
      %p312 = scmp.lt.s32.totalorder %s19, 1
      %s313 = scalar_select %p312, %s19, 1
      %s314 = smul.addr %s313, 8
      %s315 = smul.addr %s314, 4
      %s316 = scalar_lea.vmem %s1, %s315
      %p317 = scmp.lt.s32.totalorder %s19, 1
      %s318 = scalar_select %p317, %s19, 1
      %s319 = smul.addr %s318, 8
      %s320 = scalar_lea.vmem %s8, %s319
      %v322 = vld [vmem:[%s311] sm:$0xff]
      %v323 = vpack.c.bf16 %v322, %v322
      %v324 = vld [vmem:[%s2] sm:$0xf]
      %v325 = vld [vmem:[%s2 + $0x4] sm:$0xf]
      %v326 = vld [vmem:[%s2 + $0x8] sm:$0xf]
      %v327 = vld [vmem:[%s2 + $0xc] sm:$0xf]
      %v332 = vunpack.c.l.b16 %v324
      %v333 = vunpack.c.l.b16 %v325
      %v334 = vunpack.c.l.b16 %v326
      %v335 = vunpack.c.l.b16 %v327
      %v336 = vpack.c.b16 %v333, %v332
      %v337 = vpack.c.b16 %v335, %v334
      %vm340 = vcmask 261120
      %v342 = vsel %vm340, %v323, 0
      %344 = vmatpush.bf16.msra.mxu0 0
      %345 = vmatpush.bf16.msra.mxu0 0
      %346 = vmatpush.bf16.msra.mxu0 0
      %347 = vmatpush.bf16.msra.mxu0 0
      %348 = vmatpush.bf16.msra.mxu0 0
      %349 = vmatpush.bf16.msra.mxu0 0
      %350 = vmatpush.bf16.msra.mxu0 %v337
      %351 = vmatpush.bf16.msra.mxu0 %v336
      %352 = vmatmul.bf16.gmra.mxu0 %v342
      %v353 = vpop.f32.mrf.mxu0
      %v354 = vadd.f32 0.0, %v353
      %v355 = vpop.f32.mrf.mxu0
      %356 = vdwg.mxu0
      %v357 = vld [vmem:[%s3] sm:$0xf]
      %v358 = vld [vmem:[%s3 + $0x4] sm:$0xf]
      %v359 = vld [vmem:[%s3 + $0x8] sm:$0xf]
      %v360 = vld [vmem:[%s3 + $0xc] sm:$0xf]
      %v365 = vunpack.c.l.b16 %v357
      %v366 = vunpack.c.l.b16 %v358
      %v367 = vunpack.c.l.b16 %v359
      %v368 = vunpack.c.l.b16 %v360
      %v369 = vpack.c.b16 %v366, %v365
      %v370 = vpack.c.b16 %v368, %v367
      %373 = vmatpush.bf16.msra.mxu0 0
      %374 = vmatpush.bf16.msra.mxu0 0
      %375 = vmatpush.bf16.msra.mxu0 0
      %376 = vmatpush.bf16.msra.mxu0 0
      %377 = vmatpush.bf16.msra.mxu0 0
      %378 = vmatpush.bf16.msra.mxu0 0
      %379 = vmatpush.bf16.msra.mxu0 %v370
      %380 = vmatpush.bf16.msra.mxu0 %v369
      %381 = vmatmul.bf16.gmra.mxu0 %v342
      %v382 = vpop.f32.mrf.mxu0
      %v383 = vadd.f32 0.0, %v382
      %v384 = vpop.f32.mrf.mxu0
      %385 = vdwg.mxu0
      %v386 = vld [vmem:[%s4] sm:$0xf]
      %v387 = vld [vmem:[%s4 + $0x4] sm:$0xf]
      %v388 = vld [vmem:[%s4 + $0x8] sm:$0xf]
      %v389 = vld [vmem:[%s4 + $0xc] sm:$0xf]
      %v394 = vunpack.c.l.b16 %v386
      %v395 = vunpack.c.l.b16 %v387
      %v396 = vunpack.c.l.b16 %v388
      %v397 = vunpack.c.l.b16 %v389
      %v398 = vpack.c.b16 %v395, %v394
      %v399 = vpack.c.b16 %v397, %v396
      %402 = vmatpush.bf16.msra.mxu0 0
      %403 = vmatpush.bf16.msra.mxu0 0
      %404 = vmatpush.bf16.msra.mxu0 0
      %405 = vmatpush.bf16.msra.mxu0 0
      %406 = vmatpush.bf16.msra.mxu0 0
      %407 = vmatpush.bf16.msra.mxu0 0
      %408 = vmatpush.bf16.msra.mxu0 %v399
      %409 = vmatpush.bf16.msra.mxu0 %v398
      %410 = vmatmul.bf16.gmra.mxu0 %v342
      %v411 = vpop.f32.mrf.mxu0
      %v412 = vadd.f32 0.0, %v411
      %v413 = vpop.f32.mrf.mxu0
      %414 = vdwg.mxu0
      %v415 = vld [vmem:[%s316] sm:$0xf]
      %v416 = vld [vmem:[%s316 + $0x4] sm:$0xf]
      %v417 = vld [vmem:[%s316 + $0x8] sm:$0xf]
      %v418 = vld [vmem:[%s316 + $0xc] sm:$0xf]
      %v419 = vld [vmem:[%s316 + $0x10] sm:$0xf]
      %v420 = vld [vmem:[%s316 + $0x14] sm:$0xf]
      %v421 = vld [vmem:[%s316 + $0x18] sm:$0xf]
      %v422 = vld [vmem:[%s316 + $0x1c] sm:$0xf]
      %v423 = vld [vmem:[%s6] sm:$0xf]
      %v424 = vld [vmem:[%s6 + $0x4] sm:$0xf]
      %v425 = vld [vmem:[%s6 + $0x8] sm:$0xf]
      %v426 = vld [vmem:[%s6 + $0xc] sm:$0xf]
      %v427 = vld [vmem:[%s7] sm:$0x1]
      %v429 = vperm.slane %v427, 0
      %v439 = vunpack.c.l.b16 %v415
      %v440 = vunpack.c.l.b16 %v416
      %v441 = vunpack.c.l.b16 %v417
      %v442 = vunpack.c.l.b16 %v418
      %v443 = vunpack.c.l.b16 %v419
      %v444 = vunpack.c.l.b16 %v420
      %v445 = vunpack.c.l.b16 %v421
      %v446 = vunpack.c.l.b16 %v422
      %v447 = vpack.c.b16 %v440, %v439
      %v448 = vpack.c.b16 %v442, %v441
      %v449 = vpack.c.b16 %v444, %v443
      %v450 = vpack.c.b16 %v446, %v445
      %v455 = vunpack.c.l.b16 %v423
      %v456 = vunpack.c.l.b16 %v424
      %v457 = vunpack.c.l.b16 %v425
      %v458 = vunpack.c.l.b16 %v426
      %v459 = vpack.c.b16 %v456, %v455
      %v460 = vpack.c.b16 %v458, %v457
      %v464 = vsel %vm340, %v447, 0
      %v467 = vsel %vm340, %v448, 0
      %v470 = vsel %vm340, %v449, 0
      %v473 = vsel %vm340, %v450, 0
      %475 = vmatpush.bf16.msra.mxu0 0
      %476 = vmatpush.bf16.msra.mxu0 0
      %477 = vmatpush.bf16.msra.mxu0 0
      %478 = vmatpush.bf16.msra.mxu0 0
      %479 = vmatpush.bf16.msra.mxu0 0
      %480 = vmatpush.bf16.msra.mxu0 0
      %481 = vmatpush.bf16.msra.mxu0 %v460
      %482 = vmatpush.bf16.msra.mxu0 %v459
      %483 = vmatmul.bf16.gmra.mxu0 %v464
      %v484 = vpop.f32.mrf.mxu0
      %v485 = vadd.f32 %v429, %v484
      %v486 = vpop.f32.mrf.mxu0
      %v487 = vadd.f32 %v429, %v486
      %488 = vmatmul.bf16.gmra.mxu0 %v467
      %v489 = vpop.f32.mrf.mxu0
      %v490 = vadd.f32 %v429, %v489
      %v491 = vpop.f32.mrf.mxu0
      %v492 = vadd.f32 %v429, %v491
      %493 = vmatmul.bf16.gmra.mxu0 %v470
      %v494 = vpop.f32.mrf.mxu0
      %v495 = vadd.f32 %v429, %v494
      %v496 = vpop.f32.mrf.mxu0
      %v497 = vadd.f32 %v429, %v496
      %498 = vmatmul.bf16.gmra.mxu0 %v473
      %v499 = vpop.f32.mrf.mxu0
      %v500 = vadd.f32 %v429, %v499
      %v501 = vpop.f32.mrf.mxu0
      %v502 = vadd.f32 %v429, %v501
      %503 = vdwg.mxu0
      %v504 = vtanh.pop %v485
      %v505 = vtanh.pop %v487
      %v506 = vtanh.pop %v490
      %v507 = vtanh.pop %v492
      %v508 = vtanh.pop %v495
      %v509 = vtanh.pop %v497
      %v510 = vtanh.pop %v500
      %v511 = vtanh.pop %v502
      %v512 = vlaneseq
      %v513 = vand.u32 %v512, 127
      %v514 = vpack.c.bf16 %v354, %v354
      %v515 = vpack.c.bf16 %v383, %v383
      %v516 = vpack.c.bf16 %v412, %v412
      %vm517 = vcmp.eq.s32.totalorder %v513, 0
      %v518 = vsel %vm517, %v504, 0.0
      %v519 = vsel %vm517, %v505, 0.0
      %v520 = vsel %vm517, %v506, 0.0
      %v521 = vsel %vm517, %v507, 0.0
      %v522 = vsel %vm517, %v508, 0.0
      %v523 = vsel %vm517, %v509, 0.0
      %v524 = vsel %vm517, %v510, 0.0
      %v525 = vsel %vm517, %v511, 0.0
      %vm526 = vcmask 31744
      %v527 = vsel %vm526, %v518, 0.0
      %528 = vadd.xlane.f32.xlu0 %v527
      %v529 = vpop.xlane.xlu0 %528
      %v530 = vsel %vm526, %v519, 0.0
      %531 = vadd.xlane.f32.xlu0 %v530
      %v532 = vpop.xlane.xlu0 %531
      %v533 = vsel %vm526, %v520, 0.0
      %534 = vadd.xlane.f32.xlu0 %v533
      %v535 = vpop.xlane.xlu0 %534
      %v536 = vsel %vm526, %v521, 0.0
      %537 = vadd.xlane.f32.xlu0 %v536
      %v538 = vpop.xlane.xlu0 %537
      %v539 = vsel %vm526, %v522, 0.0
      %540 = vadd.xlane.f32.xlu0 %v539
      %v541 = vpop.xlane.xlu0 %540
      %v542 = vsel %vm526, %v523, 0.0
      %543 = vadd.xlane.f32.xlu0 %v542
      %v544 = vpop.xlane.xlu0 %543
      %v545 = vsel %vm526, %v524, 0.0
      %546 = vadd.xlane.f32.xlu0 %v545
      %v547 = vpop.xlane.xlu0 %546
      %v548 = vsel %vm526, %v525, 0.0
      %549 = vadd.xlane.f32.xlu0 %v548
      %v550 = vpop.xlane.xlu0 %549
      %vm551 = vcmask 64512
      %v553 = vsel %vm551, %v514, 0
      %v556 = vsel %vm551, %v515, 0
      %558 = vmatpush.bf16.xpose.msra.mxu0 0
      %559 = vmatpush.bf16.xpose.msra.mxu0 0
      %560 = vmatpush.bf16.xpose.msra.mxu0 0
      %561 = vmatpush.bf16.xpose.msra.mxu0 0
      %562 = vmatpush.bf16.xpose.msra.mxu0 0
      %563 = vmatpush.bf16.xpose.msra.mxu0 0
      %564 = vmatpush.bf16.xpose.msra.mxu0 0
      %565 = vmatpush.bf16.xpose.msra.mxu0 %v556
      %566 = vmatmul.bf16.gmra.mxu0 %v553
      %v567 = vpop.f32.mrf.mxu0
      %v568 = vadd.f32 0.0, %v567
      %v569 = vpop.f32.mrf.mxu0
      %570 = vdwg.mxu0
      %v571 = vmul.f32 %v568, 0.35355338
      %v580 = vperm.slane %v529, %v513
      %v581 = vperm.slane %v532, %v513
      %v582 = vperm.slane %v535, %v513
      %v583 = vperm.slane %v538, %v513
      %v584 = vperm.slane %v541, %v513
      %v585 = vperm.slane %v544, %v513
      %v586 = vperm.slane %v547, %v513
      %v587 = vperm.slane %v550, %v513
      %vm588 = vcmask 1041409
      %v589 = vsel %vm588, %v581, %v580
      %vm590 = vcmask 1042434
      %v591 = vsel %vm590, %v582, %v589
      %vm592 = vcmask 1043459
      %v593 = vsel %vm592, %v583, %v591
      %vm594 = vcmask 1044484
      %v595 = vsel %vm594, %v584, %v593
      %vm596 = vcmask 1045509
      %v597 = vsel %vm596, %v585, %v595
      %vm598 = vcmask 1046534
      %v599 = vsel %vm598, %v586, %v597
      %vm600 = vcmask 1047559
      %v601 = vsel %vm600, %v587, %v599
      %v603 = vadd.f32 %v571, %v601
      %v604 = vsel %vm551, %v603, -inf
      %605 = vmax.xlane.f32.xlu0 %v604
      %v606 = vpop.xlane.xlu0 %605
      %v607 = vsub.f32 %v603, %v606
      %v608 = vmul.f32 %v607, 1.442695
      %v609 = vpow.pop %v608
      %v610 = vsel %vm551, %v609, 0.0
      %611 = vadd.xlane.f32.xlu0 %v610
      %v612 = vpop.xlane.xlu0 %611
      %v613 = vrcp.pop %v612
      %v614 = vmul.f32 %v609, %v613
      %v615 = vpack.c.bf16 %v614, %v614
      %v617 = vsel %vm551, %v615, 0
      %vm619 = vcmask 1043456
      %v621 = vsel %vm619, %v516, 0
      %623 = vmatpush.bf16.msra.mxu0 0
      %624 = vmatpush.bf16.msra.mxu0 0
      %625 = vmatpush.bf16.msra.mxu0 0
      %626 = vmatpush.bf16.msra.mxu0 0
      %627 = vmatpush.bf16.msra.mxu0 0
      %628 = vmatpush.bf16.msra.mxu0 0
      %629 = vmatpush.bf16.msra.mxu0 0
      %630 = vmatpush.bf16.msra.mxu0 %v621
      %631 = vmatmul.bf16.gmra.mxu0 %v617
      %v632 = vpop.f32.mrf.mxu0
      %v633 = vadd.f32 0.0, %v632
      %v634 = vpop.f32.mrf.mxu0
      %635 = vdwg.mxu0
      %vm636 = vcmp.eq.s32.totalorder %v513, 1
      %v637 = vsel %vm636, %v504, 0.0
      %v638 = vsel %vm636, %v505, 0.0
      %v639 = vsel %vm636, %v506, 0.0
      %v640 = vsel %vm636, %v507, 0.0
      %v641 = vsel %vm636, %v508, 0.0
      %v642 = vsel %vm636, %v509, 0.0
      %v643 = vsel %vm636, %v510, 0.0
      %v644 = vsel %vm636, %v511, 0.0
      %v645 = vsel %vm526, %v637, 0.0
      %646 = vadd.xlane.f32.xlu0 %v645
      %v647 = vpop.xlane.xlu0 %646
      %v648 = vsel %vm526, %v638, 0.0
      %649 = vadd.xlane.f32.xlu0 %v648
      %v650 = vpop.xlane.xlu0 %649
      %v651 = vsel %vm526, %v639, 0.0
      %652 = vadd.xlane.f32.xlu0 %v651
      %v653 = vpop.xlane.xlu0 %652
      %v654 = vsel %vm526, %v640, 0.0
      %655 = vadd.xlane.f32.xlu0 %v654
      %v656 = vpop.xlane.xlu0 %655
      %v657 = vsel %vm526, %v641, 0.0
      %658 = vadd.xlane.f32.xlu0 %v657
      %v659 = vpop.xlane.xlu0 %658
      %v660 = vsel %vm526, %v642, 0.0
      %661 = vadd.xlane.f32.xlu0 %v660
      %v662 = vpop.xlane.xlu0 %661
      %v663 = vsel %vm526, %v643, 0.0
      %664 = vadd.xlane.f32.xlu0 %v663
      %v665 = vpop.xlane.xlu0 %664
      %v666 = vsel %vm526, %v644, 0.0
      %667 = vadd.xlane.f32.xlu0 %v666
      %v668 = vpop.xlane.xlu0 %667
      %670 = vrot.lane.b32.xlu0 %v514, 120
      %v671 = vpop.permute.xlu0 %670
      %673 = vrot.lane.b32.xlu0 %v515, 120
      %v674 = vpop.permute.xlu0 %673
      %v676 = vsel %vm551, %v671, 0
      %v679 = vsel %vm551, %v674, 0
      %681 = vmatpush.bf16.xpose.msra.mxu0 0
      %682 = vmatpush.bf16.xpose.msra.mxu0 0
      %683 = vmatpush.bf16.xpose.msra.mxu0 0
      %684 = vmatpush.bf16.xpose.msra.mxu0 0
      %685 = vmatpush.bf16.xpose.msra.mxu0 0
      %686 = vmatpush.bf16.xpose.msra.mxu0 0
      %687 = vmatpush.bf16.xpose.msra.mxu0 0
      %688 = vmatpush.bf16.xpose.msra.mxu0 %v679
      %689 = vmatmul.bf16.gmra.mxu0 %v676
      %v690 = vpop.f32.mrf.mxu0
      %v691 = vadd.f32 0.0, %v690
      %v692 = vpop.f32.mrf.mxu0
      %693 = vdwg.mxu0
      %v694 = vmul.f32 %v691, 0.35355338
      %v703 = vperm.slane %v647, %v513
      %v704 = vperm.slane %v650, %v513
      %v705 = vperm.slane %v653, %v513
      %v706 = vperm.slane %v656, %v513
      %v707 = vperm.slane %v659, %v513
      %v708 = vperm.slane %v662, %v513
      %v709 = vperm.slane %v665, %v513
      %v710 = vperm.slane %v668, %v513
      %v711 = vsel %vm588, %v704, %v703
      %v712 = vsel %vm590, %v705, %v711
      %v713 = vsel %vm592, %v706, %v712
      %v714 = vsel %vm594, %v707, %v713
      %v715 = vsel %vm596, %v708, %v714
      %v716 = vsel %vm598, %v709, %v715
      %v717 = vsel %vm600, %v710, %v716
      %v719 = vadd.f32 %v694, %v717
      %v720 = vsel %vm551, %v719, -inf
      %721 = vmax.xlane.f32.xlu0 %v720
      %v722 = vpop.xlane.xlu0 %721
      %v723 = vsub.f32 %v719, %v722
      %v724 = vmul.f32 %v723, 1.442695
      %v725 = vpow.pop %v724
      %v726 = vsel %vm551, %v725, 0.0
      %727 = vadd.xlane.f32.xlu0 %v726
      %v728 = vpop.xlane.xlu0 %727
      %v729 = vrcp.pop %v728
      %v730 = vmul.f32 %v725, %v729
      %v731 = vpack.c.bf16 %v730, %v730
      %733 = vrot.lane.b32.xlu0 %v516, 120
      %v734 = vpop.permute.xlu0 %733
      %v736 = vsel %vm551, %v731, 0
      %v739 = vsel %vm619, %v734, 0
      %741 = vmatpush.bf16.msra.mxu0 0
      %742 = vmatpush.bf16.msra.mxu0 0
      %743 = vmatpush.bf16.msra.mxu0 0
      %744 = vmatpush.bf16.msra.mxu0 0
      %745 = vmatpush.bf16.msra.mxu0 0
      %746 = vmatpush.bf16.msra.mxu0 0
      %747 = vmatpush.bf16.msra.mxu0 0
      %748 = vmatpush.bf16.msra.mxu0 %v739
      %749 = vmatmul.bf16.gmra.mxu0 %v736
      %v750 = vpop.f32.mrf.mxu0
      %v751 = vadd.f32 0.0, %v750
      %v752 = vpop.f32.mrf.mxu0
      %753 = vdwg.mxu0
      %vm754 = vcmp.eq.s32.totalorder %v513, 2
      %v755 = vsel %vm754, %v504, 0.0
      %v756 = vsel %vm754, %v505, 0.0
      %v757 = vsel %vm754, %v506, 0.0
      %v758 = vsel %vm754, %v507, 0.0
      %v759 = vsel %vm754, %v508, 0.0
      %v760 = vsel %vm754, %v509, 0.0
      %v761 = vsel %vm754, %v510, 0.0
      %v762 = vsel %vm754, %v511, 0.0
      %v763 = vsel %vm526, %v755, 0.0
      %764 = vadd.xlane.f32.xlu0 %v763
      %v765 = vpop.xlane.xlu0 %764
      %v766 = vsel %vm526, %v756, 0.0
      %767 = vadd.xlane.f32.xlu0 %v766
      %v768 = vpop.xlane.xlu0 %767
      %v769 = vsel %vm526, %v757, 0.0
      %770 = vadd.xlane.f32.xlu0 %v769
      %v771 = vpop.xlane.xlu0 %770
      %v772 = vsel %vm526, %v758, 0.0
      %773 = vadd.xlane.f32.xlu0 %v772
      %v774 = vpop.xlane.xlu0 %773
      %v775 = vsel %vm526, %v759, 0.0
      %776 = vadd.xlane.f32.xlu0 %v775
      %v777 = vpop.xlane.xlu0 %776
      %v778 = vsel %vm526, %v760, 0.0
      %779 = vadd.xlane.f32.xlu0 %v778
      %v780 = vpop.xlane.xlu0 %779
      %v781 = vsel %vm526, %v761, 0.0
      %782 = vadd.xlane.f32.xlu0 %v781
      %v783 = vpop.xlane.xlu0 %782
      %v784 = vsel %vm526, %v762, 0.0
      %785 = vadd.xlane.f32.xlu0 %v784
      %v786 = vpop.xlane.xlu0 %785
      %787 = vrot.lane.b32.xlu0 %v514, 112
      %v788 = vpop.permute.xlu0 %787
      %789 = vrot.lane.b32.xlu0 %v515, 112
      %v790 = vpop.permute.xlu0 %789
      %v792 = vsel %vm551, %v788, 0
      %v795 = vsel %vm551, %v790, 0
      %797 = vmatpush.bf16.xpose.msra.mxu0 0
      %798 = vmatpush.bf16.xpose.msra.mxu0 0
      %799 = vmatpush.bf16.xpose.msra.mxu0 0
      %800 = vmatpush.bf16.xpose.msra.mxu0 0
      %801 = vmatpush.bf16.xpose.msra.mxu0 0
      %802 = vmatpush.bf16.xpose.msra.mxu0 0
      %803 = vmatpush.bf16.xpose.msra.mxu0 0
      %804 = vmatpush.bf16.xpose.msra.mxu0 %v795
      %805 = vmatmul.bf16.gmra.mxu0 %v792
      %v806 = vpop.f32.mrf.mxu0
      %v807 = vadd.f32 0.0, %v806
      %v808 = vpop.f32.mrf.mxu0
      %809 = vdwg.mxu0
      %v810 = vmul.f32 %v807, 0.35355338
      %v819 = vperm.slane %v765, %v513
      %v820 = vperm.slane %v768, %v513
      %v821 = vperm.slane %v771, %v513
      %v822 = vperm.slane %v774, %v513
      %v823 = vperm.slane %v777, %v513
      %v824 = vperm.slane %v780, %v513
      %v825 = vperm.slane %v783, %v513
      %v826 = vperm.slane %v786, %v513
      %v827 = vsel %vm588, %v820, %v819
      %v828 = vsel %vm590, %v821, %v827
      %v829 = vsel %vm592, %v822, %v828
      %v830 = vsel %vm594, %v823, %v829
      %v831 = vsel %vm596, %v824, %v830
      %v832 = vsel %vm598, %v825, %v831
      %v833 = vsel %vm600, %v826, %v832
      %v835 = vadd.f32 %v810, %v833
      %v836 = vsel %vm551, %v835, -inf
      %837 = vmax.xlane.f32.xlu0 %v836
      %v838 = vpop.xlane.xlu0 %837
      %v839 = vsub.f32 %v835, %v838
      %v840 = vmul.f32 %v839, 1.442695
      %v841 = vpow.pop %v840
      %v842 = vsel %vm551, %v841, 0.0
      %843 = vadd.xlane.f32.xlu0 %v842
      %v844 = vpop.xlane.xlu0 %843
      %v845 = vrcp.pop %v844
      %v846 = vmul.f32 %v841, %v845
      %v847 = vpack.c.bf16 %v846, %v846
      %848 = vrot.lane.b32.xlu0 %v516, 112
      %v849 = vpop.permute.xlu0 %848
      %v851 = vsel %vm551, %v847, 0
      %v854 = vsel %vm619, %v849, 0
      %856 = vmatpush.bf16.msra.mxu0 0
      %857 = vmatpush.bf16.msra.mxu0 0
      %858 = vmatpush.bf16.msra.mxu0 0
      %859 = vmatpush.bf16.msra.mxu0 0
      %860 = vmatpush.bf16.msra.mxu0 0
      %861 = vmatpush.bf16.msra.mxu0 0
      %862 = vmatpush.bf16.msra.mxu0 0
      %863 = vmatpush.bf16.msra.mxu0 %v854
      %864 = vmatmul.bf16.gmra.mxu0 %v851
      %v865 = vpop.f32.mrf.mxu0
      %v866 = vadd.f32 0.0, %v865
      %v867 = vpop.f32.mrf.mxu0
      %868 = vdwg.mxu0
      %vm869 = vcmp.eq.s32.totalorder %v513, 3
      %v870 = vsel %vm869, %v504, 0.0
      %v871 = vsel %vm869, %v505, 0.0
      %v872 = vsel %vm869, %v506, 0.0
      %v873 = vsel %vm869, %v507, 0.0
      %v874 = vsel %vm869, %v508, 0.0
      %v875 = vsel %vm869, %v509, 0.0
      %v876 = vsel %vm869, %v510, 0.0
      %v877 = vsel %vm869, %v511, 0.0
      %v878 = vsel %vm526, %v870, 0.0
      %879 = vadd.xlane.f32.xlu0 %v878
      %v880 = vpop.xlane.xlu0 %879
      %v881 = vsel %vm526, %v871, 0.0
      %882 = vadd.xlane.f32.xlu0 %v881
      %v883 = vpop.xlane.xlu0 %882
      %v884 = vsel %vm526, %v872, 0.0
      %885 = vadd.xlane.f32.xlu0 %v884
      %v886 = vpop.xlane.xlu0 %885
      %v887 = vsel %vm526, %v873, 0.0
      %888 = vadd.xlane.f32.xlu0 %v887
      %v889 = vpop.xlane.xlu0 %888
      %v890 = vsel %vm526, %v874, 0.0
      %891 = vadd.xlane.f32.xlu0 %v890
      %v892 = vpop.xlane.xlu0 %891
      %v893 = vsel %vm526, %v875, 0.0
      %894 = vadd.xlane.f32.xlu0 %v893
      %v895 = vpop.xlane.xlu0 %894
      %v896 = vsel %vm526, %v876, 0.0
      %897 = vadd.xlane.f32.xlu0 %v896
      %v898 = vpop.xlane.xlu0 %897
      %v899 = vsel %vm526, %v877, 0.0
      %900 = vadd.xlane.f32.xlu0 %v899
      %v901 = vpop.xlane.xlu0 %900
      %902 = vrot.lane.b32.xlu0 %v514, 104
      %v903 = vpop.permute.xlu0 %902
      %904 = vrot.lane.b32.xlu0 %v515, 104
      %v905 = vpop.permute.xlu0 %904
      %v907 = vsel %vm551, %v903, 0
      %v910 = vsel %vm551, %v905, 0
      %912 = vmatpush.bf16.xpose.msra.mxu0 0
      %913 = vmatpush.bf16.xpose.msra.mxu0 0
      %914 = vmatpush.bf16.xpose.msra.mxu0 0
      %915 = vmatpush.bf16.xpose.msra.mxu0 0
      %916 = vmatpush.bf16.xpose.msra.mxu0 0
      %917 = vmatpush.bf16.xpose.msra.mxu0 0
      %918 = vmatpush.bf16.xpose.msra.mxu0 0
      %919 = vmatpush.bf16.xpose.msra.mxu0 %v910
      %920 = vmatmul.bf16.gmra.mxu0 %v907
      %v921 = vpop.f32.mrf.mxu0
      %v922 = vadd.f32 0.0, %v921
      %v923 = vpop.f32.mrf.mxu0
      %924 = vdwg.mxu0
      %v925 = vmul.f32 %v922, 0.35355338
      %v934 = vperm.slane %v880, %v513
      %v935 = vperm.slane %v883, %v513
      %v936 = vperm.slane %v886, %v513
      %v937 = vperm.slane %v889, %v513
      %v938 = vperm.slane %v892, %v513
      %v939 = vperm.slane %v895, %v513
      %v940 = vperm.slane %v898, %v513
      %v941 = vperm.slane %v901, %v513
      %v942 = vsel %vm588, %v935, %v934
      %v943 = vsel %vm590, %v936, %v942
      %v944 = vsel %vm592, %v937, %v943
      %v945 = vsel %vm594, %v938, %v944
      %v946 = vsel %vm596, %v939, %v945
      %v947 = vsel %vm598, %v940, %v946
      %v948 = vsel %vm600, %v941, %v947
      %v950 = vadd.f32 %v925, %v948
      %v951 = vsel %vm551, %v950, -inf
      %952 = vmax.xlane.f32.xlu0 %v951
      %v953 = vpop.xlane.xlu0 %952
      %v954 = vsub.f32 %v950, %v953
      %v955 = vmul.f32 %v954, 1.442695
      %v956 = vpow.pop %v955
      %v957 = vsel %vm551, %v956, 0.0
      %958 = vadd.xlane.f32.xlu0 %v957
      %v959 = vpop.xlane.xlu0 %958
      %v960 = vrcp.pop %v959
      %v961 = vmul.f32 %v956, %v960
      %v962 = vpack.c.bf16 %v961, %v961
      %963 = vrot.lane.b32.xlu0 %v516, 104
      %v964 = vpop.permute.xlu0 %963
      %v966 = vsel %vm551, %v962, 0
      %v969 = vsel %vm619, %v964, 0
      %971 = vmatpush.bf16.msra.mxu0 0
      %972 = vmatpush.bf16.msra.mxu0 0
      %973 = vmatpush.bf16.msra.mxu0 0
      %974 = vmatpush.bf16.msra.mxu0 0
      %975 = vmatpush.bf16.msra.mxu0 0
      %976 = vmatpush.bf16.msra.mxu0 0
      %977 = vmatpush.bf16.msra.mxu0 0
      %978 = vmatpush.bf16.msra.mxu0 %v969
      %979 = vmatmul.bf16.gmra.mxu0 %v966
      %v980 = vpop.f32.mrf.mxu0
      %v981 = vadd.f32 0.0, %v980
      %v982 = vpop.f32.mrf.mxu0
      %983 = vdwg.mxu0
      %985 = vrot.lane.b32.xlu0 %v751, 8
      %v986 = vpop.permute.xlu0 %985
      %989 = vrot.lane.b32.xlu0 %v866, 16
      %v990 = vpop.permute.xlu0 %989
      %993 = vrot.lane.b32.xlu0 %v981, 24
      %v994 = vpop.permute.xlu0 %993
      %v996 = vsel %vm551, %v633, %v986
      %vm997 = vcmask 130048
      %v998 = vsel %vm997, %v996, %v990
      %vm999 = vcmask 195584
      %v1000 = vsel %vm999, %v998, %v994
      %v1001 = vpack.c.bf16 %v1000, %v1000
      %v1002 = vld [vmem:[%s5] sm:$0xf]
      %v1003 = vld [vmem:[%s5 + $0x4] sm:$0xf]
      %v1004 = vld [vmem:[%s5 + $0x8] sm:$0xf]
      %v1005 = vld [vmem:[%s5 + $0xc] sm:$0xf]
      %v1010 = vunpack.c.l.b16 %v1002
      %v1011 = vunpack.c.l.b16 %v1003
      %v1012 = vunpack.c.l.b16 %v1004
      %v1013 = vunpack.c.l.b16 %v1005
      %v1014 = vpack.c.b16 %v1011, %v1010
      %v1015 = vpack.c.b16 %v1013, %v1012
      %v1019 = vsel %vm340, %v1001, 0
      %1021 = vmatpush.bf16.msra.mxu0 0
      %1022 = vmatpush.bf16.msra.mxu0 0
      %1023 = vmatpush.bf16.msra.mxu0 0
      %1024 = vmatpush.bf16.msra.mxu0 0
      %1025 = vmatpush.bf16.msra.mxu0 0
      %1026 = vmatpush.bf16.msra.mxu0 0
      %1027 = vmatpush.bf16.msra.mxu0 %v1015
      %1028 = vmatpush.bf16.msra.mxu0 %v1014
      %1029 = vmatmul.bf16.gmra.mxu0 %v1019
      %v1030 = vpop.f32.mrf.mxu0
      %v1031 = vadd.f32 0.0, %v1030
      %v1032 = vpop.f32.mrf.mxu0
      %1033 = vdwg.mxu0
      %v1034 = vadd.f32 %v322, %v1031
      %1035 = vst.msk [vmem:[%s320] sm:$0xff] %vm340, %v1034
      %p1036 = scmp.lt.s32.totalorder %s19, 1
      %s1037 = scalar_select %p1036, %s19, 1
      %s1038 = smul.addr %s1037, 8
      %s1039 = scalar_lea.vmem %s8, %s1038
      // Predicated region
      $region53: #{_lambda_.12} parent=51 // pred_check
        %p1040 = pneg %p215
      $region54: #{_lambda_.12} parent=51 // pred_check_branch
        %1042 = sbr.rel (%p1040) target = $region56
      $region55: #{_lambda_.12} parent=51 // pred_region
        _
      $region56: #{_lambda_.12} parent=51 // pred_fallthru
        _
    $region52: #{_lambda_.12} parent=5 // pred_fallthru
      _
    %p1043 = scmp.le.s32.totalorder 2, %s14
    // Predicated region
    $region57: #{_lambda_.12} parent=5 // pred_check
      %p1044 = pneg %p1043
    $region58: #{_lambda_.12} parent=5 // pred_check_branch
      %1046 = sbr.rel (%p1044) target = $region60
    $region59: #{_lambda_.12} parent=5 // pred_region
      %s1047 = ssub.s32 %s14, 2
      // Predicated region
      $region61: #{_lambda_.12} parent=59 // pred_check
        %p1048 = pneg %p221
      $region62: #{_lambda_.12} parent=59 // pred_check_branch
        %1050 = sbr.rel (%p1048) target = $region64
      $region63: #{_lambda_.12} parent=59 // pred_region
        %p1051 = scmp.lt.s32.totalorder %s20, 1
        %s1052 = scalar_select %p1051, %s20, 1
        %s1053 = smul.addr %s1052, 8
        %s1054 = scalar_lea.vmem %s8, %s1053
      $region64: #{_lambda_.12} parent=59 // pred_fallthru
        _
    $region60: #{_lambda_.12} parent=5 // pred_fallthru
      _
  $region6: #{_lambda_.12} parent=0 // loop_footer
    %s18 = sadd.s32 1, %s14
  $region7: #{_lambda_.12} parent=0 // loop_footer_branch
    %13 = sbr.rel target = $region3
  $region8: #{_lambda_.12} parent=0 // loop_exit
    _

// kernel: _lambda_.14
$region0: #{_lambda_.14}
  #allocation0 [shape = 'u32[]', space=smem, size = 0x4, offset = 0x4, fixed_abs, tag = 'smem constant byte address 0x4 - core index']
  #allocation1 [shape = 'u32[72,128]{1,0:T(1,128)}', space=vmem, size = 0x9000, scoped, tag = 'internal scratch']
  %s0 = inlined_call_operand.vmem [shape: f32[16,32], index: 0, kind: input, shape index: {}]
  %s1 = inlined_call_operand.vmem [shape: bf16[32,64], index: 1, kind: input, shape index: {}]
  %s2 = inlined_call_operand.vmem [shape: f32[1,64], index: 2, kind: input, shape index: {}]
  %s3 = inlined_call_operand.vmem [shape: bf16[64,32], index: 3, kind: input, shape index: {}]
  %s4 = inlined_call_operand.vmem [shape: f32[1,32], index: 4, kind: input, shape index: {}]
  %s5 = inlined_call_operand.vmem [shape: f32[16,32], index: 5, kind: output, shape index: {}]
  %s6 = sld [smem:[#allocation0]]
  $region30: #{_lambda_.14} parent=0
    _
  %s8 = ssub.s32 1, %s6
  %s9 = scalar_select 0, %s8, %s6
  // Predicated region
  $region2: #{_lambda_.14} parent=0 // pred_check
    _
  $region3: #{_lambda_.14} parent=0 // pred_check_branch
    %11 = sbr.rel (0) target = $region5
  $region4: #{_lambda_.14} parent=0 // pred_region
    _
  $region5: #{_lambda_.14} parent=0 // pred_fallthru
    _
  // Predicated region
  $region6: #{_lambda_.14} parent=0 // pred_check
    _
  $region7: #{_lambda_.14} parent=0 // pred_check_branch
    %13 = sbr.rel (0) target = $region9
  $region8: #{_lambda_.14} parent=0 // pred_region
    _
  $region9: #{_lambda_.14} parent=0 // pred_fallthru
    _
  // Predicated region
  $region10: #{_lambda_.14} parent=0 // pred_check
    _
  $region11: #{_lambda_.14} parent=0 // pred_check_branch
    %15 = sbr.rel (0) target = $region13
  $region12: #{_lambda_.14} parent=0 // pred_region
    _
  $region13: #{_lambda_.14} parent=0 // pred_fallthru
    _
  // Predicated region
  $region14: #{_lambda_.14} parent=0 // pred_check
    _
  $region15: #{_lambda_.14} parent=0 // pred_check_branch
    %17 = sbr.rel (0) target = $region17
  $region16: #{_lambda_.14} parent=0 // pred_region
    _
  $region17: #{_lambda_.14} parent=0 // pred_fallthru
    _
  // Predicated region
  $region18: #{_lambda_.14} parent=0 // pred_check
    _
  $region19: #{_lambda_.14} parent=0 // pred_check_branch
    %19 = sbr.rel (0) target = $region21
  $region20: #{_lambda_.14} parent=0 // pred_region
    _
  $region21: #{_lambda_.14} parent=0 // pred_fallthru
    _
  %v21 = vld [vmem:[%s0] sm:$0xff]
  %v22 = vld [vmem:[%s0 + $0x8] sm:$0xff]
  %v23 = vpack.c.bf16 %v22, %v21
  %v24 = vld [vmem:[%s1] sm:$0xf]
  %v25 = vld [vmem:[%s1 + $0x4] sm:$0xf]
  %v26 = vld [vmem:[%s1 + $0x8] sm:$0xf]
  %v27 = vld [vmem:[%s1 + $0xc] sm:$0xf]
  %v28 = vld [vmem:[%s2] sm:$0x1]
  %v30 = vperm.slane %v28, 0
  %v36 = vunpack.c.l.b16 %v24
  %v37 = vunpack.c.l.b16 %v25
  %v38 = vunpack.c.l.b16 %v26
  %v39 = vunpack.c.l.b16 %v27
  %v40 = vpack.c.b16 %v37, %v36
  %v41 = vpack.c.b16 %v39, %v38
  %vm44 = vcmask 261120
  %v46 = vsel %vm44, %v23, 0
  %48 = vmatpush.bf16.msra.mxu0 0
  %49 = vmatpush.bf16.msra.mxu0 0
  %50 = vmatpush.bf16.msra.mxu0 0
  %51 = vmatpush.bf16.msra.mxu0 0
  %52 = vmatpush.bf16.msra.mxu0 0
  %53 = vmatpush.bf16.msra.mxu0 0
  %54 = vmatpush.bf16.msra.mxu0 %v41
  %55 = vmatpush.bf16.msra.mxu0 %v40
  %56 = vmatmul.bf16.gmra.mxu0 %v46
  %v57 = vpop.f32.mrf.mxu0
  %v58 = vadd.f32 %v30, %v57
  %v59 = vpop.f32.mrf.mxu0
  %v60 = vadd.f32 %v30, %v59
  %61 = vdwg.mxu0
  %v62 = vmax.f32 %v58, 0.0
  %v63 = vmax.f32 %v60, 0.0
  %v64 = vpack.c.bf16 %v63, %v62
  %v65 = vld [vmem:[%s3] sm:$0xf]
  %v66 = vld [vmem:[%s3 + $0x4] sm:$0xf]
  %v67 = vld [vmem:[%s3 + $0x8] sm:$0xf]
  %v68 = vld [vmem:[%s3 + $0xc] sm:$0xf]
  %v69 = vld [vmem:[%s3 + $0x10] sm:$0xf]
  %v70 = vld [vmem:[%s3 + $0x14] sm:$0xf]
  %v71 = vld [vmem:[%s3 + $0x18] sm:$0xf]
  %v72 = vld [vmem:[%s3 + $0x1c] sm:$0xf]
  %v73 = vld [vmem:[%s4] sm:$0x1]
  %v75 = vperm.slane %v73, 0
  %v85 = vunpack.c.l.b16 %v65
  %v86 = vunpack.c.l.b16 %v66
  %v87 = vunpack.c.l.b16 %v67
  %v88 = vunpack.c.l.b16 %v68
  %v89 = vunpack.c.l.b16 %v69
  %v90 = vunpack.c.l.b16 %v70
  %v91 = vunpack.c.l.b16 %v71
  %v92 = vunpack.c.l.b16 %v72
  %v93 = vpack.c.b16 %v86, %v85
  %v94 = vpack.c.b16 %v88, %v87
  %v95 = vpack.c.b16 %v90, %v89
  %v96 = vpack.c.b16 %v92, %v91
  %vm101 = vcmask 523264
  %v103 = vsel %vm101, %v64, 0
  %105 = vmatpush.bf16.msra.mxu0 0
  %106 = vmatpush.bf16.msra.mxu0 0
  %107 = vmatpush.bf16.msra.mxu0 0
  %108 = vmatpush.bf16.msra.mxu0 0
  %109 = vmatpush.bf16.msra.mxu0 %v96
  %110 = vmatpush.bf16.msra.mxu0 %v95
  %111 = vmatpush.bf16.msra.mxu0 %v94
  %112 = vmatpush.bf16.msra.mxu0 %v93
  %113 = vmatmul.bf16.gmra.mxu0 %v103
  %v114 = vpop.f32.mrf.mxu0
  %v115 = vadd.f32 %v75, %v114
  %v116 = vpop.f32.mrf.mxu0
  %v117 = vadd.f32 %v75, %v116
  %118 = vdwg.mxu0
  %v119 = vadd.f32 %v21, %v115
  %v120 = vadd.f32 %v22, %v117
  %121 = vst.msk [vmem:[%s5] sm:$0xff] %vm44, %v119
  %122 = vst.msk [vmem:[%s5 + $0x8] sm:$0xff] %vm44, %v120
  // Predicated region
  $region22: #{_lambda_.14} parent=0 // pred_check
    _
  $region23: #{_lambda_.14} parent=0 // pred_check_branch
    %124 = sbr.rel (0) target = $region25
  $region24: #{_lambda_.14} parent=0 // pred_region
    _
  $region25: #{_lambda_.14} parent=0 // pred_fallthru
    _
  // Predicated region
  $region26: #{_lambda_.14} parent=0 // pred_check
    _
  $region27: #{_lambda_.14} parent=0 // pred_check_branch
    %126 = sbr.rel (0) target = $region29
  $region28: #{_lambda_.14} parent=0 // pred_region
    _
  $region29: #{_lambda_.14} parent=0 // pred_fallthru
    _

</llo_original>
